<compile_context>
chip_gen: v5e
topology: v5e:2x2
jax: 0.10.0
libtpu: 0.0.40
codegen_flags: <defaults>
</compile_context>

<pallas_src>
import functools

import jax
import jax.numpy as jnp
from jax.experimental import pallas as pl
from jax.experimental.pallas import tpu as pltpu


# ----------------------------------------------------------------------------
# Gate math (f32, EUP-friendly sigmoid)
# ----------------------------------------------------------------------------
def _sigmoid(x):
    # sigmoid(x) == 0.5 * (1 + tanh(x/2)); one EUP tanh, no exp + divide.
    return 0.5 * (1.0 + jnp.tanh(0.5 * x))


def _lstm_cell(gates, c, H):
    i = _sigmoid(gates[:, 0 * H:1 * H])
    f = _sigmoid(gates[:, 1 * H:2 * H])
    g = jnp.tanh(gates[:, 2 * H:3 * H])
    o = _sigmoid(gates[:, 3 * H:4 * H])
    c_new = f * c + i * g
    h_new = o * jnp.tanh(c_new)
    return h_new, c_new


# ----------------------------------------------------------------------------
# Fused kernel: LSTM layer 0 -> LSTM layer 1 -> FC head
# ----------------------------------------------------------------------------
def fused_lstm_fc_kernel(x_ref, wih0_ref, whh0_ref, b0_ref, b1_ref, bfc_ref,
                         wih1_hbm, whh1_hbm, wfc_hbm,
                         out_ref,
                         gx0_scr, gx1_scr, wih1_buf, whh1_buf, wfc_buf,
                         dma_sems, *, T, Bp):
    """All-in-VMEM fused forward.

    x_ref:     (T*Bp, D)  bf16, time-major, batch padded to Bp, flattened
    wih0_ref:  (D, 4H)    bf16 (pre-transposed)
    whh0_ref:  (H, 4H)    bf16
    b0/b1:     (1, 4H)    f32 combined bias (b_ih + b_hh) per layer
    bfc_ref:   (1, Cp)    f32, lane-padded
    wih1/whh1/wfc_hbm:    HBM refs (memory_space=pl.ANY) -> manual prefetch
    out_ref:   (Bp, Cp)   f32 lane-padded logits
    gx0_scr:   (T*Bp, 4H) f32 hoisted layer-0 input projection
    gx1_scr:   (T*Bp, 4H) f32 layer-1 input projection (filled inside L0 loop)
    wih1/whh1/wfc_buf:    bf16 VMEM landing buffers for the prefetched weights
    """
    H = whh0_ref.shape[0]
    bf16 = jnp.bfloat16

    # ---- Kick off prefetch of layer-1 + FC weights (hidden behind layer 0) --
    cp_wih1 = pltpu.make_async_copy(wih1_hbm, wih1_buf, dma_sems.at[0])
    cp_whh1 = pltpu.make_async_copy(whh1_hbm, whh1_buf, dma_sems.at[1])
    cp_wfc = pltpu.make_async_copy(wfc_hbm, wfc_buf, dma_sems.at[2])
    cp_wih1.start()
    cp_whh1.start()
    cp_wfc.start()

    # ---- Layer 0: hoisted input projection (one MXU dot, M = T*Bp) ---------
    gx0_scr[...] = (
        jnp.dot(x_ref[...], wih0_ref[...], preferred_element_type=jnp.float32)
        + b0_ref[...]
    )

    # wih1 is consumed inside the layer-0 loop (folded layer-1 projection).
    cp_wih1.wait()

    zero = jnp.zeros((Bp, H), jnp.float32)
    b1_b = jnp.broadcast_to(b1_ref[...], (Bp, 4 * H))  # hoisted broadcast

    # ---- Layer 0 recurrence (serial), with layer-1 projection in the slack -
    h, c = zero, zero
    for t in range(T):  # fully unrolled; T is a compile-time constant
        gates = gx0_scr[pl.ds(t * Bp, Bp), :] + jnp.dot(
            h.astype(bf16), whh0_ref[...], preferred_element_type=jnp.float32)
        h, c = _lstm_cell(gates, c, H)
        # Off-critical-path: this step's layer-1 input projection.
        gx1_scr[pl.ds(t * Bp, Bp), :] = (
            jnp.dot(h.astype(bf16), wih1_buf[...],
                    preferred_element_type=jnp.float32)
            + b1_b
        )

    # ---- Layer 1 recurrence -------------------------------------------------
    cp_whh1.wait()
    h, c = zero, zero
    for t in range(T):
        gates = gx1_scr[pl.ds(t * Bp, Bp), :] + jnp.dot(
            h.astype(bf16), whh1_buf[...], preferred_element_type=jnp.float32)
        h, c = _lstm_cell(gates, c, H)

    # ---- FC head on the last hidden state (lane-padded output) -------------
    cp_wfc.wait()
    out_ref[...] = (
        jnp.dot(h.astype(bf16), wfc_buf[...],
                preferred_element_type=jnp.float32)
        + bfc_ref[...]
    )


# ----------------------------------------------------------------------------
# Wrapper
# ----------------------------------------------------------------------------
def rnn_classifier_forward(x_btd, params, num_classes=40):
    """x_btd: (B, T, 64) batch_first, like PyTorch. Returns (B, 40) logits."""
    B, T, D = x_btd.shape
    H = params["whh0_bf"].shape[0]
    Cp = params["wfc_pad_bf"].shape[1]
    Bp = ((B + 7) // 8) * 8  # pad batch to a full 8-sublane tile

    # time-major, zero-pad batch, flatten to (T*Bp, D), bf16 matmul operand
    x_tbd = jnp.transpose(x_btd, (1, 0, 2))
    x_pad = jnp.pad(x_tbd, ((0, 0), (0, Bp - B), (0, 0)))
    x_flat = x_pad.reshape(T * Bp, D).astype(jnp.bfloat16)

    kernel = functools.partial(fused_lstm_fc_kernel, T=T, Bp=Bp)

    # Advisory cost estimate for XLA's scheduler.
    flops = 2 * (
        T * Bp * D * 4 * H          # layer-0 input projection
        + T * Bp * H * 4 * H        # layer-0 recurrence
        + T * Bp * H * 4 * H        # layer-1 input projection (folded)
        + T * Bp * H * 4 * H        # layer-1 recurrence
        + Bp * H * Cp               # FC head
    )
    transcendentals = 2 * T * Bp * H * 5
    bytes_accessed = (
        x_flat.size * 2
        + (D * 4 * H + 3 * H * 4 * H + H * Cp) * 2   # bf16 weights
        + (2 * 4 * H + Cp) * 4                       # f32 biases
        + Bp * Cp * 4                                # output
    )

    out_pad = pl.pallas_call(
        kernel,
        out_shape=jax.ShapeDtypeStruct((Bp, Cp), jnp.float32),
        in_specs=[
            pl.BlockSpec((T * Bp, D), lambda: (0, 0)),      # x
            pl.BlockSpec((D, 4 * H), lambda: (0, 0)),        # wih0 (bf16)
            pl.BlockSpec((H, 4 * H), lambda: (0, 0)),        # whh0 (bf16)
            pl.BlockSpec((1, 4 * H), lambda: (0, 0)),        # b0
            pl.BlockSpec((1, 4 * H), lambda: (0, 0)),        # b1
            pl.BlockSpec((1, Cp), lambda: (0, 0)),           # bfc
            pl.BlockSpec(memory_space=pl.ANY),               # wih1 (HBM)
            pl.BlockSpec(memory_space=pl.ANY),               # whh1 (HBM)
            pl.BlockSpec(memory_space=pl.ANY),               # wfc  (HBM)
        ],
        out_specs=pl.BlockSpec((Bp, Cp), lambda: (0, 0)),
        scratch_shapes=[
            pltpu.VMEM((T * Bp, 4 * H), jnp.float32),        # gx0
            pltpu.VMEM((T * Bp, 4 * H), jnp.float32),        # gx1
            pltpu.VMEM((H, 4 * H), jnp.bfloat16),            # wih1 landing buf
            pltpu.VMEM((H, 4 * H), jnp.bfloat16),            # whh1 landing buf
            pltpu.VMEM((H, Cp), jnp.bfloat16),               # wfc  landing buf
            pltpu.SemaphoreType.DMA((3,)),
        ],
        cost_estimate=pl.CostEstimate(
            flops=int(flops),
            transcendentals=int(transcendentals),
            bytes_accessed=int(bytes_accessed),
        ),
    )(
        x_flat,
        params["wih0_bf"], params["whh0_bf"], params["b0"], params["b1"],
        params["bfc_pad"],
        params["wih1_bf"], params["whh1_bf"], params["wfc_pad_bf"],
    )

    return out_pad[:B, :num_classes]


# ----------------------------------------------------------------------------
# Pure-JAX f32 reference (non-fatal sanity check)
# ----------------------------------------------------------------------------
def lstm_layer_ref(x_tbd, wih_t, whh_t, b):
    T, B, _ = x_tbd.shape
    H = whh_t.shape[0]

    def step(carry, x_t):
        h, c = carry
        gates = x_t @ wih_t + h @ whh_t + b[0]
        i = jax.nn.sigmoid(gates[:, 0 * H:1 * H])
        f = jax.nn.sigmoid(gates[:, 1 * H:2 * H])
        g = jnp.tanh(gates[:, 2 * H:3 * H])
        o = jax.nn.sigmoid(gates[:, 3 * H:4 * H])
        c = f * c + i * g
        h = o * jnp.tanh(c)
        return (h, c), h

    init = (jnp.zeros((B, H), jnp.float32), jnp.zeros((B, H), jnp.float32))
    _, hs = jax.lax.scan(step, init, x_tbd)
    return hs


def forward_ref(x_btd, params):
    x_tbd = jnp.transpose(x_btd, (1, 0, 2))
    h0 = lstm_layer_ref(x_tbd, params["wih0_t"], params["whh0_t"], params["b0"])
    h1 = lstm_layer_ref(h0, params["wih1_t"], params["whh1_t"], params["b1"])
    return h1[-1] @ params["wfc_t"] + params["bfc"][0]


# ----------------------------------------------------------------------------
# Parameter init (deterministic; PyTorch-style uniform(-1/sqrt(H), 1/sqrt(H)))
# ----------------------------------------------------------------------------
def make_params(key, input_size=64, hidden=128, num_classes=40, padded_classes=128):
    ks = jax.random.split(key, 12)
    s = 1.0 / jnp.sqrt(hidden)

    def u(k, shape):
        return jax.random.uniform(k, shape, jnp.float32, -s, s)

    # PyTorch stores (4H, in); pre-transpose to (in, 4H) for row-major MXU dots.
    wih0 = u(ks[0], (4 * hidden, input_size))
    whh0 = u(ks[1], (4 * hidden, hidden))
    bih0 = u(ks[2], (4 * hidden,))
    bhh0 = u(ks[3], (4 * hidden,))
    wih1 = u(ks[4], (4 * hidden, hidden))
    whh1 = u(ks[5], (4 * hidden, hidden))
    bih1 = u(ks[6], (4 * hidden,))
    bhh1 = u(ks[7], (4 * hidden,))
    wfc = u(ks[8], (num_classes, hidden))
    bfc = u(ks[9], (num_classes,))

    wfc_t = wfc.T  # (H, C)
    wfc_pad = jnp.zeros((hidden, padded_classes), jnp.float32).at[:, :num_classes].set(wfc_t)
    bfc_pad = jnp.zeros((1, padded_classes), jnp.float32).at[0, :num_classes].set(bfc)

    return {
        # f32 copies for the pure-JAX reference
        "wih0_t": wih0.T, "whh0_t": whh0.T,
        "wih1_t": wih1.T, "whh1_t": whh1.T,
        "wfc_t": wfc_t, "bfc": bfc[None, :],
        # biases (kept f32; combined b_ih + b_hh)
        "b0": (bih0 + bhh0)[None, :],
        "b1": (bih1 + bhh1)[None, :],
        "bfc_pad": bfc_pad,
        # bf16 matmul operands for the kernel
        "wih0_bf": wih0.T.astype(jnp.bfloat16),
        "whh0_bf": whh0.T.astype(jnp.bfloat16),
        "wih1_bf": wih1.T.astype(jnp.bfloat16),
        "whh1_bf": whh1.T.astype(jnp.bfloat16),
        "wfc_pad_bf": wfc_pad.astype(jnp.bfloat16),
    }


# ----------------------------------------------------------------------------
if __name__ == "__main__":
    B, T, D = 2, 8, 64  # batch, seq len, input size (LSTM input_size=64)

    key = jax.random.PRNGKey(0)
    k_x, k_p = jax.random.split(key)
    x = jax.random.normal(k_x, (B, T, D), jnp.float32)
    params = make_params(k_p)

    fwd = jax.jit(rnn_classifier_forward)
    out = jax.block_until_ready(fwd(x, params))
    assert out.shape == (B, 40), out.shape

    # Non-fatal numerical sanity check against a pure-JAX f32 reference
    # (kernel uses bf16 matmul operands with f32 accumulation).
    ref = jax.block_until_ready(forward_ref(x, params))
    if not jnp.allclose(out, ref, rtol=2e-2, atol=2e-2):
        print("# WARNING: kernel output deviates from f32 JAX reference, "
              "max abs diff = %g" % float(jnp.max(jnp.abs(out - ref))))

    print("KERNEL_OK")
</pallas_src>

<mosaic_0001>
module attributes {stable_mosaic.version = 11 : i64} {
  func.func @fused_lstm_fc_kernel(%arg0: memref<64x64xbf16, #tpu.memory_space<vmem>>, %arg1: memref<64x512xbf16, #tpu.memory_space<vmem>>, %arg2: memref<128x512xbf16, #tpu.memory_space<vmem>>, %arg3: memref<1x512xf32, #tpu.memory_space<vmem>>, %arg4: memref<1x512xf32, #tpu.memory_space<vmem>>, %arg5: memref<1x128xf32, #tpu.memory_space<vmem>>, %arg6: memref<128x512xbf16, #tpu.memory_space<any>>, %arg7: memref<128x512xbf16, #tpu.memory_space<any>>, %arg8: memref<128x128xbf16, #tpu.memory_space<any>>, %arg9: memref<8x128xf32, #tpu.memory_space<vmem>>, %arg10: memref<64x512xf32, #tpu.memory_space<vmem>>, %arg11: memref<64x512xf32, #tpu.memory_space<vmem>>, %arg12: memref<128x512xbf16, #tpu.memory_space<vmem>>, %arg13: memref<128x512xbf16, #tpu.memory_space<vmem>>, %arg14: memref<128x128xbf16, #tpu.memory_space<vmem>>, %arg15: memref<3x!tpu.dma_semaphore, #tpu.memory_space<semaphore_mem>>) attributes {dimension_semantics = [], scalar_prefetch = 0 : i64, scratch_operands = 6 : i64, tpu.core_type = #tpu.core_type<tc>} {
    %c0_i32 = arith.constant 0 : i32
    %0 = tpu.memref_slice %arg15[%c0_i32] : memref<3x!tpu.dma_semaphore, #tpu.memory_space<semaphore_mem>> -> memref<1x!tpu.dma_semaphore, #tpu.memory_space<semaphore_mem>>
    %1 = tpu.memref_squeeze %0 : memref<1x!tpu.dma_semaphore, #tpu.memory_space<semaphore_mem>> -> memref<!tpu.dma_semaphore, #tpu.memory_space<semaphore_mem>>
    tpu.enqueue_dma source(%arg6 : memref<128x512xbf16, #tpu.memory_space<any>>) target(%arg12 : memref<128x512xbf16, #tpu.memory_space<vmem>>) target_semaphore(%1 : memref<!tpu.dma_semaphore, #tpu.memory_space<semaphore_mem>>)
    %c1_i32 = arith.constant 1 : i32
    %2 = tpu.memref_slice %arg15[%c1_i32] : memref<3x!tpu.dma_semaphore, #tpu.memory_space<semaphore_mem>> -> memref<1x!tpu.dma_semaphore, #tpu.memory_space<semaphore_mem>>
    %3 = tpu.memref_squeeze %2 : memref<1x!tpu.dma_semaphore, #tpu.memory_space<semaphore_mem>> -> memref<!tpu.dma_semaphore, #tpu.memory_space<semaphore_mem>>
    tpu.enqueue_dma source(%arg7 : memref<128x512xbf16, #tpu.memory_space<any>>) target(%arg13 : memref<128x512xbf16, #tpu.memory_space<vmem>>) target_semaphore(%3 : memref<!tpu.dma_semaphore, #tpu.memory_space<semaphore_mem>>)
    %c2_i32 = arith.constant 2 : i32
    %4 = tpu.memref_slice %arg15[%c2_i32] : memref<3x!tpu.dma_semaphore, #tpu.memory_space<semaphore_mem>> -> memref<1x!tpu.dma_semaphore, #tpu.memory_space<semaphore_mem>>
    %5 = tpu.memref_squeeze %4 : memref<1x!tpu.dma_semaphore, #tpu.memory_space<semaphore_mem>> -> memref<!tpu.dma_semaphore, #tpu.memory_space<semaphore_mem>>
    tpu.enqueue_dma source(%arg8 : memref<128x128xbf16, #tpu.memory_space<any>>) target(%arg14 : memref<128x128xbf16, #tpu.memory_space<vmem>>) target_semaphore(%5 : memref<!tpu.dma_semaphore, #tpu.memory_space<semaphore_mem>>)
    %c0 = arith.constant 0 : index
    %c0_0 = arith.constant 0 : index
    %6 = vector.load %arg0[%c0, %c0_0] : memref<64x64xbf16, #tpu.memory_space<vmem>>, vector<64x64xbf16>
    %c0_1 = arith.constant 0 : index
    %c0_2 = arith.constant 0 : index
    %7 = vector.load %arg1[%c0_1, %c0_2] : memref<64x512xbf16, #tpu.memory_space<vmem>>, vector<64x512xbf16>
    %cst = arith.constant dense<0.000000e+00> : vector<64x512xf32>
    %8 = tpu.matmul %6, %7, %cst {dimension_numbers = #tpu.dot_dimension_numbers<[1], [0], [0], [1], [0, 0, 1, 1], [], []>} : vector<64x64xbf16>, vector<64x512xbf16>, vector<64x512xf32> -> vector<64x512xf32>
    %c0_3 = arith.constant 0 : index
    %c0_4 = arith.constant 0 : index
    %9 = vector.load %arg3[%c0_3, %c0_4] : memref<1x512xf32, #tpu.memory_space<vmem>>, vector<1x512xf32>
    %10 = vector.broadcast %9 : vector<1x512xf32> to vector<64x512xf32>
    %11 = arith.addf %8, %10 : vector<64x512xf32>
    %c0_5 = arith.constant 0 : index
    %c0_6 = arith.constant 0 : index
    %12 = vector.load %arg10[%c0_5, %c0_6] : memref<64x512xf32, #tpu.memory_space<vmem>>, vector<64x512xf32>
    tpu.vector_store %arg10[%c0_5, %c0_6], %11 {strides = array<i32>} : memref<64x512xf32, #tpu.memory_space<vmem>>, vector<64x512xf32>,
    %c0_i32_7 = arith.constant 0 : i32
    %13 = tpu.memref_slice %arg15[%c0_i32_7] : memref<3x!tpu.dma_semaphore, #tpu.memory_space<semaphore_mem>> -> memref<1x!tpu.dma_semaphore, #tpu.memory_space<semaphore_mem>>
    %14 = tpu.memref_squeeze %13 : memref<1x!tpu.dma_semaphore, #tpu.memory_space<semaphore_mem>> -> memref<!tpu.dma_semaphore, #tpu.memory_space<semaphore_mem>>
    tpu.wait_dma2 semaphore(%14 : memref<!tpu.dma_semaphore, #tpu.memory_space<semaphore_mem>>) src(%arg6 : memref<128x512xbf16, #tpu.memory_space<any>>) dst(%arg12 : memref<128x512xbf16, #tpu.memory_space<vmem>>)
    %cst_8 = arith.constant 0.000000e+00 : f32
    %15 = vector.broadcast %cst_8 : f32 to vector<8x128xf32>
    %c0_9 = arith.constant 0 : index
    %c0_10 = arith.constant 0 : index
    %16 = vector.load %arg4[%c0_9, %c0_10] : memref<1x512xf32, #tpu.memory_space<vmem>>, vector<1x512xf32>
    %17 = vector.shape_cast %16 : vector<1x512xf32> to vector<1x512xf32>
    %18 = vector.broadcast %17 : vector<1x512xf32> to vector<8x512xf32>
    %c0_11 = arith.constant 0 : index
    %c0_12 = arith.constant 0 : index
    %19 = vector.load %arg10[%c0_11, %c0_12] : memref<64x512xf32, #tpu.memory_space<vmem>>, vector<8x512xf32>
    %20 = arith.truncf %15 : vector<8x128xf32> to vector<8x128xbf16>
    %c0_13 = arith.constant 0 : index
    %c0_14 = arith.constant 0 : index
    %21 = vector.load %arg2[%c0_13, %c0_14] : memref<128x512xbf16, #tpu.memory_space<vmem>>, vector<128x512xbf16>
    %cst_15 = arith.constant dense<0.000000e+00> : vector<8x512xf32>
    %22 = tpu.matmul %20, %21, %cst_15 {dimension_numbers = #tpu.dot_dimension_numbers<[1], [0], [0], [1], [0, 0, 1, 1], [], []>} : vector<8x128xbf16>, vector<128x512xbf16>, vector<8x512xf32> -> vector<8x512xf32>
    %23 = arith.addf %19, %22 : vector<8x512xf32>
    %24 = vector.extract_strided_slice %23 {offsets = [0, 0], sizes = [8, 128], strides = [1, 1]} : vector<8x512xf32> to vector<8x128xf32>
    %cst_16 = arith.constant 5.000000e-01 : f32
    %25 = vector.broadcast %cst_16 : f32 to vector<8x128xf32>
    %26 = arith.mulf %25, %24 : vector<8x128xf32>
    %27 = math.tanh %26 : vector<8x128xf32>
    %cst_17 = arith.constant 1.000000e+00 : f32
    %28 = vector.broadcast %cst_17 : f32 to vector<8x128xf32>
    %29 = arith.addf %28, %27 : vector<8x128xf32>
    %cst_18 = arith.constant 5.000000e-01 : f32
    %30 = vector.broadcast %cst_18 : f32 to vector<8x128xf32>
    %31 = arith.mulf %30, %29 : vector<8x128xf32>
    %32 = vector.extract_strided_slice %23 {offsets = [0, 128], sizes = [8, 128], strides = [1, 1]} : vector<8x512xf32> to vector<8x128xf32>
    %cst_19 = arith.constant 5.000000e-01 : f32
    %33 = vector.broadcast %cst_19 : f32 to vector<8x128xf32>
    %34 = arith.mulf %33, %32 : vector<8x128xf32>
    %35 = math.tanh %34 : vector<8x128xf32>
    %cst_20 = arith.constant 1.000000e+00 : f32
    %36 = vector.broadcast %cst_20 : f32 to vector<8x128xf32>
    %37 = arith.addf %36, %35 : vector<8x128xf32>
    %cst_21 = arith.constant 5.000000e-01 : f32
    %38 = vector.broadcast %cst_21 : f32 to vector<8x128xf32>
    %39 = arith.mulf %38, %37 : vector<8x128xf32>
    %40 = vector.extract_strided_slice %23 {offsets = [0, 256], sizes = [8, 128], strides = [1, 1]} : vector<8x512xf32> to vector<8x128xf32>
    %41 = math.tanh %40 : vector<8x128xf32>
    %42 = vector.extract_strided_slice %23 {offsets = [0, 384], sizes = [8, 128], strides = [1, 1]} : vector<8x512xf32> to vector<8x128xf32>
    %cst_22 = arith.constant 5.000000e-01 : f32
    %43 = vector.broadcast %cst_22 : f32 to vector<8x128xf32>
    %44 = arith.mulf %43, %42 : vector<8x128xf32>
    %45 = math.tanh %44 : vector<8x128xf32>
    %cst_23 = arith.constant 1.000000e+00 : f32
    %46 = vector.broadcast %cst_23 : f32 to vector<8x128xf32>
    %47 = arith.addf %46, %45 : vector<8x128xf32>
    %cst_24 = arith.constant 5.000000e-01 : f32
    %48 = vector.broadcast %cst_24 : f32 to vector<8x128xf32>
    %49 = arith.mulf %48, %47 : vector<8x128xf32>
    %50 = arith.mulf %39, %15 : vector<8x128xf32>
    %51 = arith.mulf %31, %41 : vector<8x128xf32>
    %52 = arith.addf %50, %51 : vector<8x128xf32>
    %53 = math.tanh %52 : vector<8x128xf32>
    %54 = arith.mulf %49, %53 : vector<8x128xf32>
    %55 = arith.truncf %54 : vector<8x128xf32> to vector<8x128xbf16>
    %c0_25 = arith.constant 0 : index
    %c0_26 = arith.constant 0 : index
    %56 = vector.load %arg12[%c0_25, %c0_26] : memref<128x512xbf16, #tpu.memory_space<vmem>>, vector<128x512xbf16>
    %cst_27 = arith.constant dense<0.000000e+00> : vector<8x512xf32>
    %57 = tpu.matmul %55, %56, %cst_27 {dimension_numbers = #tpu.dot_dimension_numbers<[1], [0], [0], [1], [0, 0, 1, 1], [], []>} : vector<8x128xbf16>, vector<128x512xbf16>, vector<8x512xf32> -> vector<8x512xf32>
    %58 = arith.addf %57, %18 : vector<8x512xf32>
    %c0_28 = arith.constant 0 : index
    %c0_29 = arith.constant 0 : index
    %59 = vector.load %arg11[%c0_28, %c0_29] : memref<64x512xf32, #tpu.memory_space<vmem>>, vector<8x512xf32>
    tpu.vector_store %arg11[%c0_28, %c0_29], %58 {strides = array<i32>} : memref<64x512xf32, #tpu.memory_space<vmem>>, vector<8x512xf32>,
    %c8 = arith.constant 8 : index
    %c0_30 = arith.constant 0 : index
    %60 = vector.load %arg10[%c8, %c0_30] : memref<64x512xf32, #tpu.memory_space<vmem>>, vector<8x512xf32>
    %61 = arith.truncf %54 : vector<8x128xf32> to vector<8x128xbf16>
    %c0_31 = arith.constant 0 : index
    %c0_32 = arith.constant 0 : index
    %62 = vector.load %arg2[%c0_31, %c0_32] : memref<128x512xbf16, #tpu.memory_space<vmem>>, vector<128x512xbf16>
    %cst_33 = arith.constant dense<0.000000e+00> : vector<8x512xf32>
    %63 = tpu.matmul %61, %62, %cst_33 {dimension_numbers = #tpu.dot_dimension_numbers<[1], [0], [0], [1], [0, 0, 1, 1], [], []>} : vector<8x128xbf16>, vector<128x512xbf16>, vector<8x512xf32> -> vector<8x512xf32>
    %64 = arith.addf %60, %63 : vector<8x512xf32>
    %65 = vector.extract_strided_slice %64 {offsets = [0, 0], sizes = [8, 128], strides = [1, 1]} : vector<8x512xf32> to vector<8x128xf32>
    %cst_34 = arith.constant 5.000000e-01 : f32
    %66 = vector.broadcast %cst_34 : f32 to vector<8x128xf32>
    %67 = arith.mulf %66, %65 : vector<8x128xf32>
    %68 = math.tanh %67 : vector<8x128xf32>
    %cst_35 = arith.constant 1.000000e+00 : f32
    %69 = vector.broadcast %cst_35 : f32 to vector<8x128xf32>
    %70 = arith.addf %69, %68 : vector<8x128xf32>
    %cst_36 = arith.constant 5.000000e-01 : f32
    %71 = vector.broadcast %cst_36 : f32 to vector<8x128xf32>
    %72 = arith.mulf %71, %70 : vector<8x128xf32>
    %73 = vector.extract_strided_slice %64 {offsets = [0, 128], sizes = [8, 128], strides = [1, 1]} : vector<8x512xf32> to vector<8x128xf32>
    %cst_37 = arith.constant 5.000000e-01 : f32
    %74 = vector.broadcast %cst_37 : f32 to vector<8x128xf32>
    %75 = arith.mulf %74, %73 : vector<8x128xf32>
    %76 = math.tanh %75 : vector<8x128xf32>
    %cst_38 = arith.constant 1.000000e+00 : f32
    %77 = vector.broadcast %cst_38 : f32 to vector<8x128xf32>
    %78 = arith.addf %77, %76 : vector<8x128xf32>
    %cst_39 = arith.constant 5.000000e-01 : f32
    %79 = vector.broadcast %cst_39 : f32 to vector<8x128xf32>
    %80 = arith.mulf %79, %78 : vector<8x128xf32>
    %81 = vector.extract_strided_slice %64 {offsets = [0, 256], sizes = [8, 128], strides = [1, 1]} : vector<8x512xf32> to vector<8x128xf32>
    %82 = math.tanh %81 : vector<8x128xf32>
    %83 = vector.extract_strided_slice %64 {offsets = [0, 384], sizes = [8, 128], strides = [1, 1]} : vector<8x512xf32> to vector<8x128xf32>
    %cst_40 = arith.constant 5.000000e-01 : f32
    %84 = vector.broadcast %cst_40 : f32 to vector<8x128xf32>
    %85 = arith.mulf %84, %83 : vector<8x128xf32>
    %86 = math.tanh %85 : vector<8x128xf32>
    %cst_41 = arith.constant 1.000000e+00 : f32
    %87 = vector.broadcast %cst_41 : f32 to vector<8x128xf32>
    %88 = arith.addf %87, %86 : vector<8x128xf32>
    %cst_42 = arith.constant 5.000000e-01 : f32
    %89 = vector.broadcast %cst_42 : f32 to vector<8x128xf32>
    %90 = arith.mulf %89, %88 : vector<8x128xf32>
    %91 = arith.mulf %80, %52 : vector<8x128xf32>
    %92 = arith.mulf %72, %82 : vector<8x128xf32>
    %93 = arith.addf %91, %92 : vector<8x128xf32>
    %94 = math.tanh %93 : vector<8x128xf32>
    %95 = arith.mulf %90, %94 : vector<8x128xf32>
    %96 = arith.truncf %95 : vector<8x128xf32> to vector<8x128xbf16>
    %c0_43 = arith.constant 0 : index
    %c0_44 = arith.constant 0 : index
    %97 = vector.load %arg12[%c0_43, %c0_44] : memref<128x512xbf16, #tpu.memory_space<vmem>>, vector<128x512xbf16>
    %cst_45 = arith.constant dense<0.000000e+00> : vector<8x512xf32>
    %98 = tpu.matmul %96, %97, %cst_45 {dimension_numbers = #tpu.dot_dimension_numbers<[1], [0], [0], [1], [0, 0, 1, 1], [], []>} : vector<8x128xbf16>, vector<128x512xbf16>, vector<8x512xf32> -> vector<8x512xf32>
    %99 = arith.addf %98, %18 : vector<8x512xf32>
    %c8_46 = arith.constant 8 : index
    %c0_47 = arith.constant 0 : index
    %100 = vector.load %arg11[%c8_46, %c0_47] : memref<64x512xf32, #tpu.memory_space<vmem>>, vector<8x512xf32>
    tpu.vector_store %arg11[%c8_46, %c0_47], %99 {strides = array<i32>} : memref<64x512xf32, #tpu.memory_space<vmem>>, vector<8x512xf32>,
    %c16 = arith.constant 16 : index
    %c0_48 = arith.constant 0 : index
    %101 = vector.load %arg10[%c16, %c0_48] : memref<64x512xf32, #tpu.memory_space<vmem>>, vector<8x512xf32>
    %102 = arith.truncf %95 : vector<8x128xf32> to vector<8x128xbf16>
    %c0_49 = arith.constant 0 : index
    %c0_50 = arith.constant 0 : index
    %103 = vector.load %arg2[%c0_49, %c0_50] : memref<128x512xbf16, #tpu.memory_space<vmem>>, vector<128x512xbf16>
    %cst_51 = arith.constant dense<0.000000e+00> : vector<8x512xf32>
    %104 = tpu.matmul %102, %103, %cst_51 {dimension_numbers = #tpu.dot_dimension_numbers<[1], [0], [0], [1], [0, 0, 1, 1], [], []>} : vector<8x128xbf16>, vector<128x512xbf16>, vector<8x512xf32> -> vector<8x512xf32>
    %105 = arith.addf %101, %104 : vector<8x512xf32>
    %106 = vector.extract_strided_slice %105 {offsets = [0, 0], sizes = [8, 128], strides = [1, 1]} : vector<8x512xf32> to vector<8x128xf32>
    %cst_52 = arith.constant 5.000000e-01 : f32
    %107 = vector.broadcast %cst_52 : f32 to vector<8x128xf32>
    %108 = arith.mulf %107, %106 : vector<8x128xf32>
    %109 = math.tanh %108 : vector<8x128xf32>
    %cst_53 = arith.constant 1.000000e+00 : f32
    %110 = vector.broadcast %cst_53 : f32 to vector<8x128xf32>
    %111 = arith.addf %110, %109 : vector<8x128xf32>
    %cst_54 = arith.constant 5.000000e-01 : f32
    %112 = vector.broadcast %cst_54 : f32 to vector<8x128xf32>
    %113 = arith.mulf %112, %111 : vector<8x128xf32>
    %114 = vector.extract_strided_slice %105 {offsets = [0, 128], sizes = [8, 128], strides = [1, 1]} : vector<8x512xf32> to vector<8x128xf32>
    %cst_55 = arith.constant 5.000000e-01 : f32
    %115 = vector.broadcast %cst_55 : f32 to vector<8x128xf32>
    %116 = arith.mulf %115, %114 : vector<8x128xf32>
    %117 = math.tanh %116 : vector<8x128xf32>
    %cst_56 = arith.constant 1.000000e+00 : f32
    %118 = vector.broadcast %cst_56 : f32 to vector<8x128xf32>
    %119 = arith.addf %118, %117 : vector<8x128xf32>
    %cst_57 = arith.constant 5.000000e-01 : f32
    %120 = vector.broadcast %cst_57 : f32 to vector<8x128xf32>
    %121 = arith.mulf %120, %119 : vector<8x128xf32>
    %122 = vector.extract_strided_slice %105 {offsets = [0, 256], sizes = [8, 128], strides = [1, 1]} : vector<8x512xf32> to vector<8x128xf32>
    %123 = math.tanh %122 : vector<8x128xf32>
    %124 = vector.extract_strided_slice %105 {offsets = [0, 384], sizes = [8, 128], strides = [1, 1]} : vector<8x512xf32> to vector<8x128xf32>
    %cst_58 = arith.constant 5.000000e-01 : f32
    %125 = vector.broadcast %cst_58 : f32 to vector<8x128xf32>
    %126 = arith.mulf %125, %124 : vector<8x128xf32>
    %127 = math.tanh %126 : vector<8x128xf32>
    %cst_59 = arith.constant 1.000000e+00 : f32
    %128 = vector.broadcast %cst_59 : f32 to vector<8x128xf32>
    %129 = arith.addf %128, %127 : vector<8x128xf32>
    %cst_60 = arith.constant 5.000000e-01 : f32
    %130 = vector.broadcast %cst_60 : f32 to vector<8x128xf32>
    %131 = arith.mulf %130, %129 : vector<8x128xf32>
    %132 = arith.mulf %121, %93 : vector<8x128xf32>
    %133 = arith.mulf %113, %123 : vector<8x128xf32>
    %134 = arith.addf %132, %133 : vector<8x128xf32>
    %135 = math.tanh %134 : vector<8x128xf32>
    %136 = arith.mulf %131, %135 : vector<8x128xf32>
    %137 = arith.truncf %136 : vector<8x128xf32> to vector<8x128xbf16>
    %c0_61 = arith.constant 0 : index
    %c0_62 = arith.constant 0 : index
    %138 = vector.load %arg12[%c0_61, %c0_62] : memref<128x512xbf16, #tpu.memory_space<vmem>>, vector<128x512xbf16>
    %cst_63 = arith.constant dense<0.000000e+00> : vector<8x512xf32>
    %139 = tpu.matmul %137, %138, %cst_63 {dimension_numbers = #tpu.dot_dimension_numbers<[1], [0], [0], [1], [0, 0, 1, 1], [], []>} : vector<8x128xbf16>, vector<128x512xbf16>, vector<8x512xf32> -> vector<8x512xf32>
    %140 = arith.addf %139, %18 : vector<8x512xf32>
    %c16_64 = arith.constant 16 : index
    %c0_65 = arith.constant 0 : index
    %141 = vector.load %arg11[%c16_64, %c0_65] : memref<64x512xf32, #tpu.memory_space<vmem>>, vector<8x512xf32>
    tpu.vector_store %arg11[%c16_64, %c0_65], %140 {strides = array<i32>} : memref<64x512xf32, #tpu.memory_space<vmem>>, vector<8x512xf32>,
    %c24 = arith.constant 24 : index
    %c0_66 = arith.constant 0 : index
    %142 = vector.load %arg10[%c24, %c0_66] : memref<64x512xf32, #tpu.memory_space<vmem>>, vector<8x512xf32>
    %143 = arith.truncf %136 : vector<8x128xf32> to vector<8x128xbf16>
    %c0_67 = arith.constant 0 : index
    %c0_68 = arith.constant 0 : index
    %144 = vector.load %arg2[%c0_67, %c0_68] : memref<128x512xbf16, #tpu.memory_space<vmem>>, vector<128x512xbf16>
    %cst_69 = arith.constant dense<0.000000e+00> : vector<8x512xf32>
    %145 = tpu.matmul %143, %144, %cst_69 {dimension_numbers = #tpu.dot_dimension_numbers<[1], [0], [0], [1], [0, 0, 1, 1], [], []>} : vector<8x128xbf16>, vector<128x512xbf16>, vector<8x512xf32> -> vector<8x512xf32>
    %146 = arith.addf %142, %145 : vector<8x512xf32>
    %147 = vector.extract_strided_slice %146 {offsets = [0, 0], sizes = [8, 128], strides = [1, 1]} : vector<8x512xf32> to vector<8x128xf32>
    %cst_70 = arith.constant 5.000000e-01 : f32
    %148 = vector.broadcast %cst_70 : f32 to vector<8x128xf32>
    %149 = arith.mulf %148, %147 : vector<8x128xf32>
    %150 = math.tanh %149 : vector<8x128xf32>
    %cst_71 = arith.constant 1.000000e+00 : f32
    %151 = vector.broadcast %cst_71 : f32 to vector<8x128xf32>
    %152 = arith.addf %151, %150 : vector<8x128xf32>
    %cst_72 = arith.constant 5.000000e-01 : f32
    %153 = vector.broadcast %cst_72 : f32 to vector<8x128xf32>
    %154 = arith.mulf %153, %152 : vector<8x128xf32>
    %155 = vector.extract_strided_slice %146 {offsets = [0, 128], sizes = [8, 128], strides = [1, 1]} : vector<8x512xf32> to vector<8x128xf32>
    %cst_73 = arith.constant 5.000000e-01 : f32
    %156 = vector.broadcast %cst_73 : f32 to vector<8x128xf32>
    %157 = arith.mulf %156, %155 : vector<8x128xf32>
    %158 = math.tanh %157 : vector<8x128xf32>
    %cst_74 = arith.constant 1.000000e+00 : f32
    %159 = vector.broadcast %cst_74 : f32 to vector<8x128xf32>
    %160 = arith.addf %159, %158 : vector<8x128xf32>
    %cst_75 = arith.constant 5.000000e-01 : f32
    %161 = vector.broadcast %cst_75 : f32 to vector<8x128xf32>
    %162 = arith.mulf %161, %160 : vector<8x128xf32>
    %163 = vector.extract_strided_slice %146 {offsets = [0, 256], sizes = [8, 128], strides = [1, 1]} : vector<8x512xf32> to vector<8x128xf32>
    %164 = math.tanh %163 : vector<8x128xf32>
    %165 = vector.extract_strided_slice %146 {offsets = [0, 384], sizes = [8, 128], strides = [1, 1]} : vector<8x512xf32> to vector<8x128xf32>
    %cst_76 = arith.constant 5.000000e-01 : f32
    %166 = vector.broadcast %cst_76 : f32 to vector<8x128xf32>
    %167 = arith.mulf %166, %165 : vector<8x128xf32>
    %168 = math.tanh %167 : vector<8x128xf32>
    %cst_77 = arith.constant 1.000000e+00 : f32
    %169 = vector.broadcast %cst_77 : f32 to vector<8x128xf32>
    %170 = arith.addf %169, %168 : vector<8x128xf32>
    %cst_78 = arith.constant 5.000000e-01 : f32
    %171 = vector.broadcast %cst_78 : f32 to vector<8x128xf32>
    %172 = arith.mulf %171, %170 : vector<8x128xf32>
    %173 = arith.mulf %162, %134 : vector<8x128xf32>
    %174 = arith.mulf %154, %164 : vector<8x128xf32>
    %175 = arith.addf %173, %174 : vector<8x128xf32>
    %176 = math.tanh %175 : vector<8x128xf32>
    %177 = arith.mulf %172, %176 : vector<8x128xf32>
    %178 = arith.truncf %177 : vector<8x128xf32> to vector<8x128xbf16>
    %c0_79 = arith.constant 0 : index
    %c0_80 = arith.constant 0 : index
    %179 = vector.load %arg12[%c0_79, %c0_80] : memref<128x512xbf16, #tpu.memory_space<vmem>>, vector<128x512xbf16>
    %cst_81 = arith.constant dense<0.000000e+00> : vector<8x512xf32>
    %180 = tpu.matmul %178, %179, %cst_81 {dimension_numbers = #tpu.dot_dimension_numbers<[1], [0], [0], [1], [0, 0, 1, 1], [], []>} : vector<8x128xbf16>, vector<128x512xbf16>, vector<8x512xf32> -> vector<8x512xf32>
    %181 = arith.addf %180, %18 : vector<8x512xf32>
    %c24_82 = arith.constant 24 : index
    %c0_83 = arith.constant 0 : index
    %182 = vector.load %arg11[%c24_82, %c0_83] : memref<64x512xf32, #tpu.memory_space<vmem>>, vector<8x512xf32>
    tpu.vector_store %arg11[%c24_82, %c0_83], %181 {strides = array<i32>} : memref<64x512xf32, #tpu.memory_space<vmem>>, vector<8x512xf32>,
    %c32 = arith.constant 32 : index
    %c0_84 = arith.constant 0 : index
    %183 = vector.load %arg10[%c32, %c0_84] : memref<64x512xf32, #tpu.memory_space<vmem>>, vector<8x512xf32>
    %184 = arith.truncf %177 : vector<8x128xf32> to vector<8x128xbf16>
    %c0_85 = arith.constant 0 : index
    %c0_86 = arith.constant 0 : index
    %185 = vector.load %arg2[%c0_85, %c0_86] : memref<128x512xbf16, #tpu.memory_space<vmem>>, vector<128x512xbf16>
    %cst_87 = arith.constant dense<0.000000e+00> : vector<8x512xf32>
    %186 = tpu.matmul %184, %185, %cst_87 {dimension_numbers = #tpu.dot_dimension_numbers<[1], [0], [0], [1], [0, 0, 1, 1], [], []>} : vector<8x128xbf16>, vector<128x512xbf16>, vector<8x512xf32> -> vector<8x512xf32>
    %187 = arith.addf %183, %186 : vector<8x512xf32>
    %188 = vector.extract_strided_slice %187 {offsets = [0, 0], sizes = [8, 128], strides = [1, 1]} : vector<8x512xf32> to vector<8x128xf32>
    %cst_88 = arith.constant 5.000000e-01 : f32
    %189 = vector.broadcast %cst_88 : f32 to vector<8x128xf32>
    %190 = arith.mulf %189, %188 : vector<8x128xf32>
    %191 = math.tanh %190 : vector<8x128xf32>
    %cst_89 = arith.constant 1.000000e+00 : f32
    %192 = vector.broadcast %cst_89 : f32 to vector<8x128xf32>
    %193 = arith.addf %192, %191 : vector<8x128xf32>
    %cst_90 = arith.constant 5.000000e-01 : f32
    %194 = vector.broadcast %cst_90 : f32 to vector<8x128xf32>
    %195 = arith.mulf %194, %193 : vector<8x128xf32>
    %196 = vector.extract_strided_slice %187 {offsets = [0, 128], sizes = [8, 128], strides = [1, 1]} : vector<8x512xf32> to vector<8x128xf32>
    %cst_91 = arith.constant 5.000000e-01 : f32
    %197 = vector.broadcast %cst_91 : f32 to vector<8x128xf32>
    %198 = arith.mulf %197, %196 : vector<8x128xf32>
    %199 = math.tanh %198 : vector<8x128xf32>
    %cst_92 = arith.constant 1.000000e+00 : f32
    %200 = vector.broadcast %cst_92 : f32 to vector<8x128xf32>
    %201 = arith.addf %200, %199 : vector<8x128xf32>
    %cst_93 = arith.constant 5.000000e-01 : f32
    %202 = vector.broadcast %cst_93 : f32 to vector<8x128xf32>
    %203 = arith.mulf %202, %201 : vector<8x128xf32>
    %204 = vector.extract_strided_slice %187 {offsets = [0, 256], sizes = [8, 128], strides = [1, 1]} : vector<8x512xf32> to vector<8x128xf32>
    %205 = math.tanh %204 : vector<8x128xf32>
    %206 = vector.extract_strided_slice %187 {offsets = [0, 384], sizes = [8, 128], strides = [1, 1]} : vector<8x512xf32> to vector<8x128xf32>
    %cst_94 = arith.constant 5.000000e-01 : f32
    %207 = vector.broadcast %cst_94 : f32 to vector<8x128xf32>
    %208 = arith.mulf %207, %206 : vector<8x128xf32>
    %209 = math.tanh %208 : vector<8x128xf32>
    %cst_95 = arith.constant 1.000000e+00 : f32
    %210 = vector.broadcast %cst_95 : f32 to vector<8x128xf32>
    %211 = arith.addf %210, %209 : vector<8x128xf32>
    %cst_96 = arith.constant 5.000000e-01 : f32
    %212 = vector.broadcast %cst_96 : f32 to vector<8x128xf32>
    %213 = arith.mulf %212, %211 : vector<8x128xf32>
    %214 = arith.mulf %203, %175 : vector<8x128xf32>
    %215 = arith.mulf %195, %205 : vector<8x128xf32>
    %216 = arith.addf %214, %215 : vector<8x128xf32>
    %217 = math.tanh %216 : vector<8x128xf32>
    %218 = arith.mulf %213, %217 : vector<8x128xf32>
    %219 = arith.truncf %218 : vector<8x128xf32> to vector<8x128xbf16>
    %c0_97 = arith.constant 0 : index
    %c0_98 = arith.constant 0 : index
    %220 = vector.load %arg12[%c0_97, %c0_98] : memref<128x512xbf16, #tpu.memory_space<vmem>>, vector<128x512xbf16>
    %cst_99 = arith.constant dense<0.000000e+00> : vector<8x512xf32>
    %221 = tpu.matmul %219, %220, %cst_99 {dimension_numbers = #tpu.dot_dimension_numbers<[1], [0], [0], [1], [0, 0, 1, 1], [], []>} : vector<8x128xbf16>, vector<128x512xbf16>, vector<8x512xf32> -> vector<8x512xf32>
    %222 = arith.addf %221, %18 : vector<8x512xf32>
    %c32_100 = arith.constant 32 : index
    %c0_101 = arith.constant 0 : index
    %223 = vector.load %arg11[%c32_100, %c0_101] : memref<64x512xf32, #tpu.memory_space<vmem>>, vector<8x512xf32>
    tpu.vector_store %arg11[%c32_100, %c0_101], %222 {strides = array<i32>} : memref<64x512xf32, #tpu.memory_space<vmem>>, vector<8x512xf32>,
    %c40 = arith.constant 40 : index
    %c0_102 = arith.constant 0 : index
    %224 = vector.load %arg10[%c40, %c0_102] : memref<64x512xf32, #tpu.memory_space<vmem>>, vector<8x512xf32>
    %225 = arith.truncf %218 : vector<8x128xf32> to vector<8x128xbf16>
    %c0_103 = arith.constant 0 : index
    %c0_104 = arith.constant 0 : index
    %226 = vector.load %arg2[%c0_103, %c0_104] : memref<128x512xbf16, #tpu.memory_space<vmem>>, vector<128x512xbf16>
    %cst_105 = arith.constant dense<0.000000e+00> : vector<8x512xf32>
    %227 = tpu.matmul %225, %226, %cst_105 {dimension_numbers = #tpu.dot_dimension_numbers<[1], [0], [0], [1], [0, 0, 1, 1], [], []>} : vector<8x128xbf16>, vector<128x512xbf16>, vector<8x512xf32> -> vector<8x512xf32>
    %228 = arith.addf %224, %227 : vector<8x512xf32>
    %229 = vector.extract_strided_slice %228 {offsets = [0, 0], sizes = [8, 128], strides = [1, 1]} : vector<8x512xf32> to vector<8x128xf32>
    %cst_106 = arith.constant 5.000000e-01 : f32
    %230 = vector.broadcast %cst_106 : f32 to vector<8x128xf32>
    %231 = arith.mulf %230, %229 : vector<8x128xf32>
    %232 = math.tanh %231 : vector<8x128xf32>
    %cst_107 = arith.constant 1.000000e+00 : f32
    %233 = vector.broadcast %cst_107 : f32 to vector<8x128xf32>
    %234 = arith.addf %233, %232 : vector<8x128xf32>
    %cst_108 = arith.constant 5.000000e-01 : f32
    %235 = vector.broadcast %cst_108 : f32 to vector<8x128xf32>
    %236 = arith.mulf %235, %234 : vector<8x128xf32>
    %237 = vector.extract_strided_slice %228 {offsets = [0, 128], sizes = [8, 128], strides = [1, 1]} : vector<8x512xf32> to vector<8x128xf32>
    %cst_109 = arith.constant 5.000000e-01 : f32
    %238 = vector.broadcast %cst_109 : f32 to vector<8x128xf32>
    %239 = arith.mulf %238, %237 : vector<8x128xf32>
    %240 = math.tanh %239 : vector<8x128xf32>
    %cst_110 = arith.constant 1.000000e+00 : f32
    %241 = vector.broadcast %cst_110 : f32 to vector<8x128xf32>
    %242 = arith.addf %241, %240 : vector<8x128xf32>
    %cst_111 = arith.constant 5.000000e-01 : f32
    %243 = vector.broadcast %cst_111 : f32 to vector<8x128xf32>
    %244 = arith.mulf %243, %242 : vector<8x128xf32>
    %245 = vector.extract_strided_slice %228 {offsets = [0, 256], sizes = [8, 128], strides = [1, 1]} : vector<8x512xf32> to vector<8x128xf32>
    %246 = math.tanh %245 : vector<8x128xf32>
    %247 = vector.extract_strided_slice %228 {offsets = [0, 384], sizes = [8, 128], strides = [1, 1]} : vector<8x512xf32> to vector<8x128xf32>
    %cst_112 = arith.constant 5.000000e-01 : f32
    %248 = vector.broadcast %cst_112 : f32 to vector<8x128xf32>
    %249 = arith.mulf %248, %247 : vector<8x128xf32>
    %250 = math.tanh %249 : vector<8x128xf32>
    %cst_113 = arith.constant 1.000000e+00 : f32
    %251 = vector.broadcast %cst_113 : f32 to vector<8x128xf32>
    %252 = arith.addf %251, %250 : vector<8x128xf32>
    %cst_114 = arith.constant 5.000000e-01 : f32
    %253 = vector.broadcast %cst_114 : f32 to vector<8x128xf32>
    %254 = arith.mulf %253, %252 : vector<8x128xf32>
    %255 = arith.mulf %244, %216 : vector<8x128xf32>
    %256 = arith.mulf %236, %246 : vector<8x128xf32>
    %257 = arith.addf %255, %256 : vector<8x128xf32>
    %258 = math.tanh %257 : vector<8x128xf32>
    %259 = arith.mulf %254, %258 : vector<8x128xf32>
    %260 = arith.truncf %259 : vector<8x128xf32> to vector<8x128xbf16>
    %c0_115 = arith.constant 0 : index
    %c0_116 = arith.constant 0 : index
    %261 = vector.load %arg12[%c0_115, %c0_116] : memref<128x512xbf16, #tpu.memory_space<vmem>>, vector<128x512xbf16>
    %cst_117 = arith.constant dense<0.000000e+00> : vector<8x512xf32>
    %262 = tpu.matmul %260, %261, %cst_117 {dimension_numbers = #tpu.dot_dimension_numbers<[1], [0], [0], [1], [0, 0, 1, 1], [], []>} : vector<8x128xbf16>, vector<128x512xbf16>, vector<8x512xf32> -> vector<8x512xf32>
    %263 = arith.addf %262, %18 : vector<8x512xf32>
    %c40_118 = arith.constant 40 : index
    %c0_119 = arith.constant 0 : index
    %264 = vector.load %arg11[%c40_118, %c0_119] : memref<64x512xf32, #tpu.memory_space<vmem>>, vector<8x512xf32>
    tpu.vector_store %arg11[%c40_118, %c0_119], %263 {strides = array<i32>} : memref<64x512xf32, #tpu.memory_space<vmem>>, vector<8x512xf32>,
    %c48 = arith.constant 48 : index
    %c0_120 = arith.constant 0 : index
    %265 = vector.load %arg10[%c48, %c0_120] : memref<64x512xf32, #tpu.memory_space<vmem>>, vector<8x512xf32>
    %266 = arith.truncf %259 : vector<8x128xf32> to vector<8x128xbf16>
    %c0_121 = arith.constant 0 : index
    %c0_122 = arith.constant 0 : index
    %267 = vector.load %arg2[%c0_121, %c0_122] : memref<128x512xbf16, #tpu.memory_space<vmem>>, vector<128x512xbf16>
    %cst_123 = arith.constant dense<0.000000e+00> : vector<8x512xf32>
    %268 = tpu.matmul %266, %267, %cst_123 {dimension_numbers = #tpu.dot_dimension_numbers<[1], [0], [0], [1], [0, 0, 1, 1], [], []>} : vector<8x128xbf16>, vector<128x512xbf16>, vector<8x512xf32> -> vector<8x512xf32>
    %269 = arith.addf %265, %268 : vector<8x512xf32>
    %270 = vector.extract_strided_slice %269 {offsets = [0, 0], sizes = [8, 128], strides = [1, 1]} : vector<8x512xf32> to vector<8x128xf32>
    %cst_124 = arith.constant 5.000000e-01 : f32
    %271 = vector.broadcast %cst_124 : f32 to vector<8x128xf32>
    %272 = arith.mulf %271, %270 : vector<8x128xf32>
    %273 = math.tanh %272 : vector<8x128xf32>
    %cst_125 = arith.constant 1.000000e+00 : f32
    %274 = vector.broadcast %cst_125 : f32 to vector<8x128xf32>
    %275 = arith.addf %274, %273 : vector<8x128xf32>
    %cst_126 = arith.constant 5.000000e-01 : f32
    %276 = vector.broadcast %cst_126 : f32 to vector<8x128xf32>
    %277 = arith.mulf %276, %275 : vector<8x128xf32>
    %278 = vector.extract_strided_slice %269 {offsets = [0, 128], sizes = [8, 128], strides = [1, 1]} : vector<8x512xf32> to vector<8x128xf32>
    %cst_127 = arith.constant 5.000000e-01 : f32
    %279 = vector.broadcast %cst_127 : f32 to vector<8x128xf32>
    %280 = arith.mulf %279, %278 : vector<8x128xf32>
    %281 = math.tanh %280 : vector<8x128xf32>
    %cst_128 = arith.constant 1.000000e+00 : f32
    %282 = vector.broadcast %cst_128 : f32 to vector<8x128xf32>
    %283 = arith.addf %282, %281 : vector<8x128xf32>
    %cst_129 = arith.constant 5.000000e-01 : f32
    %284 = vector.broadcast %cst_129 : f32 to vector<8x128xf32>
    %285 = arith.mulf %284, %283 : vector<8x128xf32>
    %286 = vector.extract_strided_slice %269 {offsets = [0, 256], sizes = [8, 128], strides = [1, 1]} : vector<8x512xf32> to vector<8x128xf32>
    %287 = math.tanh %286 : vector<8x128xf32>
    %288 = vector.extract_strided_slice %269 {offsets = [0, 384], sizes = [8, 128], strides = [1, 1]} : vector<8x512xf32> to vector<8x128xf32>
    %cst_130 = arith.constant 5.000000e-01 : f32
    %289 = vector.broadcast %cst_130 : f32 to vector<8x128xf32>
    %290 = arith.mulf %289, %288 : vector<8x128xf32>
    %291 = math.tanh %290 : vector<8x128xf32>
    %cst_131 = arith.constant 1.000000e+00 : f32
    %292 = vector.broadcast %cst_131 : f32 to vector<8x128xf32>
    %293 = arith.addf %292, %291 : vector<8x128xf32>
    %cst_132 = arith.constant 5.000000e-01 : f32
    %294 = vector.broadcast %cst_132 : f32 to vector<8x128xf32>
    %295 = arith.mulf %294, %293 : vector<8x128xf32>
    %296 = arith.mulf %285, %257 : vector<8x128xf32>
    %297 = arith.mulf %277, %287 : vector<8x128xf32>
    %298 = arith.addf %296, %297 : vector<8x128xf32>
    %299 = math.tanh %298 : vector<8x128xf32>
    %300 = arith.mulf %295, %299 : vector<8x128xf32>
    %301 = arith.truncf %300 : vector<8x128xf32> to vector<8x128xbf16>
    %c0_133 = arith.constant 0 : index
    %c0_134 = arith.constant 0 : index
    %302 = vector.load %arg12[%c0_133, %c0_134] : memref<128x512xbf16, #tpu.memory_space<vmem>>, vector<128x512xbf16>
    %cst_135 = arith.constant dense<0.000000e+00> : vector<8x512xf32>
    %303 = tpu.matmul %301, %302, %cst_135 {dimension_numbers = #tpu.dot_dimension_numbers<[1], [0], [0], [1], [0, 0, 1, 1], [], []>} : vector<8x128xbf16>, vector<128x512xbf16>, vector<8x512xf32> -> vector<8x512xf32>
    %304 = arith.addf %303, %18 : vector<8x512xf32>
    %c48_136 = arith.constant 48 : index
    %c0_137 = arith.constant 0 : index
    %305 = vector.load %arg11[%c48_136, %c0_137] : memref<64x512xf32, #tpu.memory_space<vmem>>, vector<8x512xf32>
    tpu.vector_store %arg11[%c48_136, %c0_137], %304 {strides = array<i32>} : memref<64x512xf32, #tpu.memory_space<vmem>>, vector<8x512xf32>,
    %c56 = arith.constant 56 : index
    %c0_138 = arith.constant 0 : index
    %306 = vector.load %arg10[%c56, %c0_138] : memref<64x512xf32, #tpu.memory_space<vmem>>, vector<8x512xf32>
    %307 = arith.truncf %300 : vector<8x128xf32> to vector<8x128xbf16>
    %c0_139 = arith.constant 0 : index
    %c0_140 = arith.constant 0 : index
    %308 = vector.load %arg2[%c0_139, %c0_140] : memref<128x512xbf16, #tpu.memory_space<vmem>>, vector<128x512xbf16>
    %cst_141 = arith.constant dense<0.000000e+00> : vector<8x512xf32>
    %309 = tpu.matmul %307, %308, %cst_141 {dimension_numbers = #tpu.dot_dimension_numbers<[1], [0], [0], [1], [0, 0, 1, 1], [], []>} : vector<8x128xbf16>, vector<128x512xbf16>, vector<8x512xf32> -> vector<8x512xf32>
    %310 = arith.addf %306, %309 : vector<8x512xf32>
    %311 = vector.extract_strided_slice %310 {offsets = [0, 0], sizes = [8, 128], strides = [1, 1]} : vector<8x512xf32> to vector<8x128xf32>
    %cst_142 = arith.constant 5.000000e-01 : f32
    %312 = vector.broadcast %cst_142 : f32 to vector<8x128xf32>
    %313 = arith.mulf %312, %311 : vector<8x128xf32>
    %314 = math.tanh %313 : vector<8x128xf32>
    %cst_143 = arith.constant 1.000000e+00 : f32
    %315 = vector.broadcast %cst_143 : f32 to vector<8x128xf32>
    %316 = arith.addf %315, %314 : vector<8x128xf32>
    %cst_144 = arith.constant 5.000000e-01 : f32
    %317 = vector.broadcast %cst_144 : f32 to vector<8x128xf32>
    %318 = arith.mulf %317, %316 : vector<8x128xf32>
    %319 = vector.extract_strided_slice %310 {offsets = [0, 128], sizes = [8, 128], strides = [1, 1]} : vector<8x512xf32> to vector<8x128xf32>
    %cst_145 = arith.constant 5.000000e-01 : f32
    %320 = vector.broadcast %cst_145 : f32 to vector<8x128xf32>
    %321 = arith.mulf %320, %319 : vector<8x128xf32>
    %322 = math.tanh %321 : vector<8x128xf32>
    %cst_146 = arith.constant 1.000000e+00 : f32
    %323 = vector.broadcast %cst_146 : f32 to vector<8x128xf32>
    %324 = arith.addf %323, %322 : vector<8x128xf32>
    %cst_147 = arith.constant 5.000000e-01 : f32
    %325 = vector.broadcast %cst_147 : f32 to vector<8x128xf32>
    %326 = arith.mulf %325, %324 : vector<8x128xf32>
    %327 = vector.extract_strided_slice %310 {offsets = [0, 256], sizes = [8, 128], strides = [1, 1]} : vector<8x512xf32> to vector<8x128xf32>
    %328 = math.tanh %327 : vector<8x128xf32>
    %329 = vector.extract_strided_slice %310 {offsets = [0, 384], sizes = [8, 128], strides = [1, 1]} : vector<8x512xf32> to vector<8x128xf32>
    %cst_148 = arith.constant 5.000000e-01 : f32
    %330 = vector.broadcast %cst_148 : f32 to vector<8x128xf32>
    %331 = arith.mulf %330, %329 : vector<8x128xf32>
    %332 = math.tanh %331 : vector<8x128xf32>
    %cst_149 = arith.constant 1.000000e+00 : f32
    %333 = vector.broadcast %cst_149 : f32 to vector<8x128xf32>
    %334 = arith.addf %333, %332 : vector<8x128xf32>
    %cst_150 = arith.constant 5.000000e-01 : f32
    %335 = vector.broadcast %cst_150 : f32 to vector<8x128xf32>
    %336 = arith.mulf %335, %334 : vector<8x128xf32>
    %337 = arith.mulf %326, %298 : vector<8x128xf32>
    %338 = arith.mulf %318, %328 : vector<8x128xf32>
    %339 = arith.addf %337, %338 : vector<8x128xf32>
    %340 = math.tanh %339 : vector<8x128xf32>
    %341 = arith.mulf %336, %340 : vector<8x128xf32>
    %342 = arith.truncf %341 : vector<8x128xf32> to vector<8x128xbf16>
    %c0_151 = arith.constant 0 : index
    %c0_152 = arith.constant 0 : index
    %343 = vector.load %arg12[%c0_151, %c0_152] : memref<128x512xbf16, #tpu.memory_space<vmem>>, vector<128x512xbf16>
    %cst_153 = arith.constant dense<0.000000e+00> : vector<8x512xf32>
    %344 = tpu.matmul %342, %343, %cst_153 {dimension_numbers = #tpu.dot_dimension_numbers<[1], [0], [0], [1], [0, 0, 1, 1], [], []>} : vector<8x128xbf16>, vector<128x512xbf16>, vector<8x512xf32> -> vector<8x512xf32>
    %345 = arith.addf %344, %18 : vector<8x512xf32>
    %c56_154 = arith.constant 56 : index
    %c0_155 = arith.constant 0 : index
    %346 = vector.load %arg11[%c56_154, %c0_155] : memref<64x512xf32, #tpu.memory_space<vmem>>, vector<8x512xf32>
    tpu.vector_store %arg11[%c56_154, %c0_155], %345 {strides = array<i32>} : memref<64x512xf32, #tpu.memory_space<vmem>>, vector<8x512xf32>,
    %c1_i32_156 = arith.constant 1 : i32
    %347 = tpu.memref_slice %arg15[%c1_i32_156] : memref<3x!tpu.dma_semaphore, #tpu.memory_space<semaphore_mem>> -> memref<1x!tpu.dma_semaphore, #tpu.memory_space<semaphore_mem>>
    %348 = tpu.memref_squeeze %347 : memref<1x!tpu.dma_semaphore, #tpu.memory_space<semaphore_mem>> -> memref<!tpu.dma_semaphore, #tpu.memory_space<semaphore_mem>>
    tpu.wait_dma2 semaphore(%348 : memref<!tpu.dma_semaphore, #tpu.memory_space<semaphore_mem>>) src(%arg7 : memref<128x512xbf16, #tpu.memory_space<any>>) dst(%arg13 : memref<128x512xbf16, #tpu.memory_space<vmem>>)
    %c0_157 = arith.constant 0 : index
    %c0_158 = arith.constant 0 : index
    %349 = vector.load %arg11[%c0_157, %c0_158] : memref<64x512xf32, #tpu.memory_space<vmem>>, vector<8x512xf32>
    %350 = arith.truncf %15 : vector<8x128xf32> to vector<8x128xbf16>
    %c0_159 = arith.constant 0 : index
    %c0_160 = arith.constant 0 : index
    %351 = vector.load %arg13[%c0_159, %c0_160] : memref<128x512xbf16, #tpu.memory_space<vmem>>, vector<128x512xbf16>
    %cst_161 = arith.constant dense<0.000000e+00> : vector<8x512xf32>
    %352 = tpu.matmul %350, %351, %cst_161 {dimension_numbers = #tpu.dot_dimension_numbers<[1], [0], [0], [1], [0, 0, 1, 1], [], []>} : vector<8x128xbf16>, vector<128x512xbf16>, vector<8x512xf32> -> vector<8x512xf32>
    %353 = arith.addf %349, %352 : vector<8x512xf32>
    %354 = vector.extract_strided_slice %353 {offsets = [0, 0], sizes = [8, 128], strides = [1, 1]} : vector<8x512xf32> to vector<8x128xf32>
    %cst_162 = arith.constant 5.000000e-01 : f32
    %355 = vector.broadcast %cst_162 : f32 to vector<8x128xf32>
    %356 = arith.mulf %355, %354 : vector<8x128xf32>
    %357 = math.tanh %356 : vector<8x128xf32>
    %cst_163 = arith.constant 1.000000e+00 : f32
    %358 = vector.broadcast %cst_163 : f32 to vector<8x128xf32>
    %359 = arith.addf %358, %357 : vector<8x128xf32>
    %cst_164 = arith.constant 5.000000e-01 : f32
    %360 = vector.broadcast %cst_164 : f32 to vector<8x128xf32>
    %361 = arith.mulf %360, %359 : vector<8x128xf32>
    %362 = vector.extract_strided_slice %353 {offsets = [0, 128], sizes = [8, 128], strides = [1, 1]} : vector<8x512xf32> to vector<8x128xf32>
    %cst_165 = arith.constant 5.000000e-01 : f32
    %363 = vector.broadcast %cst_165 : f32 to vector<8x128xf32>
    %364 = arith.mulf %363, %362 : vector<8x128xf32>
    %365 = math.tanh %364 : vector<8x128xf32>
    %cst_166 = arith.constant 1.000000e+00 : f32
    %366 = vector.broadcast %cst_166 : f32 to vector<8x128xf32>
    %367 = arith.addf %366, %365 : vector<8x128xf32>
    %cst_167 = arith.constant 5.000000e-01 : f32
    %368 = vector.broadcast %cst_167 : f32 to vector<8x128xf32>
    %369 = arith.mulf %368, %367 : vector<8x128xf32>
    %370 = vector.extract_strided_slice %353 {offsets = [0, 256], sizes = [8, 128], strides = [1, 1]} : vector<8x512xf32> to vector<8x128xf32>
    %371 = math.tanh %370 : vector<8x128xf32>
    %372 = vector.extract_strided_slice %353 {offsets = [0, 384], sizes = [8, 128], strides = [1, 1]} : vector<8x512xf32> to vector<8x128xf32>
    %cst_168 = arith.constant 5.000000e-01 : f32
    %373 = vector.broadcast %cst_168 : f32 to vector<8x128xf32>
    %374 = arith.mulf %373, %372 : vector<8x128xf32>
    %375 = math.tanh %374 : vector<8x128xf32>
    %cst_169 = arith.constant 1.000000e+00 : f32
    %376 = vector.broadcast %cst_169 : f32 to vector<8x128xf32>
    %377 = arith.addf %376, %375 : vector<8x128xf32>
    %cst_170 = arith.constant 5.000000e-01 : f32
    %378 = vector.broadcast %cst_170 : f32 to vector<8x128xf32>
    %379 = arith.mulf %378, %377 : vector<8x128xf32>
    %380 = arith.mulf %369, %15 : vector<8x128xf32>
    %381 = arith.mulf %361, %371 : vector<8x128xf32>
    %382 = arith.addf %380, %381 : vector<8x128xf32>
    %383 = math.tanh %382 : vector<8x128xf32>
    %384 = arith.mulf %379, %383 : vector<8x128xf32>
    %c8_171 = arith.constant 8 : index
    %c0_172 = arith.constant 0 : index
    %385 = vector.load %arg11[%c8_171, %c0_172] : memref<64x512xf32, #tpu.memory_space<vmem>>, vector<8x512xf32>
    %386 = arith.truncf %384 : vector<8x128xf32> to vector<8x128xbf16>
    %c0_173 = arith.constant 0 : index
    %c0_174 = arith.constant 0 : index
    %387 = vector.load %arg13[%c0_173, %c0_174] : memref<128x512xbf16, #tpu.memory_space<vmem>>, vector<128x512xbf16>
    %cst_175 = arith.constant dense<0.000000e+00> : vector<8x512xf32>
    %388 = tpu.matmul %386, %387, %cst_175 {dimension_numbers = #tpu.dot_dimension_numbers<[1], [0], [0], [1], [0, 0, 1, 1], [], []>} : vector<8x128xbf16>, vector<128x512xbf16>, vector<8x512xf32> -> vector<8x512xf32>
    %389 = arith.addf %385, %388 : vector<8x512xf32>
    %390 = vector.extract_strided_slice %389 {offsets = [0, 0], sizes = [8, 128], strides = [1, 1]} : vector<8x512xf32> to vector<8x128xf32>
    %cst_176 = arith.constant 5.000000e-01 : f32
    %391 = vector.broadcast %cst_176 : f32 to vector<8x128xf32>
    %392 = arith.mulf %391, %390 : vector<8x128xf32>
    %393 = math.tanh %392 : vector<8x128xf32>
    %cst_177 = arith.constant 1.000000e+00 : f32
    %394 = vector.broadcast %cst_177 : f32 to vector<8x128xf32>
    %395 = arith.addf %394, %393 : vector<8x128xf32>
    %cst_178 = arith.constant 5.000000e-01 : f32
    %396 = vector.broadcast %cst_178 : f32 to vector<8x128xf32>
    %397 = arith.mulf %396, %395 : vector<8x128xf32>
    %398 = vector.extract_strided_slice %389 {offsets = [0, 128], sizes = [8, 128], strides = [1, 1]} : vector<8x512xf32> to vector<8x128xf32>
    %cst_179 = arith.constant 5.000000e-01 : f32
    %399 = vector.broadcast %cst_179 : f32 to vector<8x128xf32>
    %400 = arith.mulf %399, %398 : vector<8x128xf32>
    %401 = math.tanh %400 : vector<8x128xf32>
    %cst_180 = arith.constant 1.000000e+00 : f32
    %402 = vector.broadcast %cst_180 : f32 to vector<8x128xf32>
    %403 = arith.addf %402, %401 : vector<8x128xf32>
    %cst_181 = arith.constant 5.000000e-01 : f32
    %404 = vector.broadcast %cst_181 : f32 to vector<8x128xf32>
    %405 = arith.mulf %404, %403 : vector<8x128xf32>
    %406 = vector.extract_strided_slice %389 {offsets = [0, 256], sizes = [8, 128], strides = [1, 1]} : vector<8x512xf32> to vector<8x128xf32>
    %407 = math.tanh %406 : vector<8x128xf32>
    %408 = vector.extract_strided_slice %389 {offsets = [0, 384], sizes = [8, 128], strides = [1, 1]} : vector<8x512xf32> to vector<8x128xf32>
    %cst_182 = arith.constant 5.000000e-01 : f32
    %409 = vector.broadcast %cst_182 : f32 to vector<8x128xf32>
    %410 = arith.mulf %409, %408 : vector<8x128xf32>
    %411 = math.tanh %410 : vector<8x128xf32>
    %cst_183 = arith.constant 1.000000e+00 : f32
    %412 = vector.broadcast %cst_183 : f32 to vector<8x128xf32>
    %413 = arith.addf %412, %411 : vector<8x128xf32>
    %cst_184 = arith.constant 5.000000e-01 : f32
    %414 = vector.broadcast %cst_184 : f32 to vector<8x128xf32>
    %415 = arith.mulf %414, %413 : vector<8x128xf32>
    %416 = arith.mulf %405, %382 : vector<8x128xf32>
    %417 = arith.mulf %397, %407 : vector<8x128xf32>
    %418 = arith.addf %416, %417 : vector<8x128xf32>
    %419 = math.tanh %418 : vector<8x128xf32>
    %420 = arith.mulf %415, %419 : vector<8x128xf32>
    %c16_185 = arith.constant 16 : index
    %c0_186 = arith.constant 0 : index
    %421 = vector.load %arg11[%c16_185, %c0_186] : memref<64x512xf32, #tpu.memory_space<vmem>>, vector<8x512xf32>
    %422 = arith.truncf %420 : vector<8x128xf32> to vector<8x128xbf16>
    %c0_187 = arith.constant 0 : index
    %c0_188 = arith.constant 0 : index
    %423 = vector.load %arg13[%c0_187, %c0_188] : memref<128x512xbf16, #tpu.memory_space<vmem>>, vector<128x512xbf16>
    %cst_189 = arith.constant dense<0.000000e+00> : vector<8x512xf32>
    %424 = tpu.matmul %422, %423, %cst_189 {dimension_numbers = #tpu.dot_dimension_numbers<[1], [0], [0], [1], [0, 0, 1, 1], [], []>} : vector<8x128xbf16>, vector<128x512xbf16>, vector<8x512xf32> -> vector<8x512xf32>
    %425 = arith.addf %421, %424 : vector<8x512xf32>
    %426 = vector.extract_strided_slice %425 {offsets = [0, 0], sizes = [8, 128], strides = [1, 1]} : vector<8x512xf32> to vector<8x128xf32>
    %cst_190 = arith.constant 5.000000e-01 : f32
    %427 = vector.broadcast %cst_190 : f32 to vector<8x128xf32>
    %428 = arith.mulf %427, %426 : vector<8x128xf32>
    %429 = math.tanh %428 : vector<8x128xf32>
    %cst_191 = arith.constant 1.000000e+00 : f32
    %430 = vector.broadcast %cst_191 : f32 to vector<8x128xf32>
    %431 = arith.addf %430, %429 : vector<8x128xf32>
    %cst_192 = arith.constant 5.000000e-01 : f32
    %432 = vector.broadcast %cst_192 : f32 to vector<8x128xf32>
    %433 = arith.mulf %432, %431 : vector<8x128xf32>
    %434 = vector.extract_strided_slice %425 {offsets = [0, 128], sizes = [8, 128], strides = [1, 1]} : vector<8x512xf32> to vector<8x128xf32>
    %cst_193 = arith.constant 5.000000e-01 : f32
    %435 = vector.broadcast %cst_193 : f32 to vector<8x128xf32>
    %436 = arith.mulf %435, %434 : vector<8x128xf32>
    %437 = math.tanh %436 : vector<8x128xf32>
    %cst_194 = arith.constant 1.000000e+00 : f32
    %438 = vector.broadcast %cst_194 : f32 to vector<8x128xf32>
    %439 = arith.addf %438, %437 : vector<8x128xf32>
    %cst_195 = arith.constant 5.000000e-01 : f32
    %440 = vector.broadcast %cst_195 : f32 to vector<8x128xf32>
    %441 = arith.mulf %440, %439 : vector<8x128xf32>
    %442 = vector.extract_strided_slice %425 {offsets = [0, 256], sizes = [8, 128], strides = [1, 1]} : vector<8x512xf32> to vector<8x128xf32>
    %443 = math.tanh %442 : vector<8x128xf32>
    %444 = vector.extract_strided_slice %425 {offsets = [0, 384], sizes = [8, 128], strides = [1, 1]} : vector<8x512xf32> to vector<8x128xf32>
    %cst_196 = arith.constant 5.000000e-01 : f32
    %445 = vector.broadcast %cst_196 : f32 to vector<8x128xf32>
    %446 = arith.mulf %445, %444 : vector<8x128xf32>
    %447 = math.tanh %446 : vector<8x128xf32>
    %cst_197 = arith.constant 1.000000e+00 : f32
    %448 = vector.broadcast %cst_197 : f32 to vector<8x128xf32>
    %449 = arith.addf %448, %447 : vector<8x128xf32>
    %cst_198 = arith.constant 5.000000e-01 : f32
    %450 = vector.broadcast %cst_198 : f32 to vector<8x128xf32>
    %451 = arith.mulf %450, %449 : vector<8x128xf32>
    %452 = arith.mulf %441, %418 : vector<8x128xf32>
    %453 = arith.mulf %433, %443 : vector<8x128xf32>
    %454 = arith.addf %452, %453 : vector<8x128xf32>
    %455 = math.tanh %454 : vector<8x128xf32>
    %456 = arith.mulf %451, %455 : vector<8x128xf32>
    %c24_199 = arith.constant 24 : index
    %c0_200 = arith.constant 0 : index
    %457 = vector.load %arg11[%c24_199, %c0_200] : memref<64x512xf32, #tpu.memory_space<vmem>>, vector<8x512xf32>
    %458 = arith.truncf %456 : vector<8x128xf32> to vector<8x128xbf16>
    %c0_201 = arith.constant 0 : index
    %c0_202 = arith.constant 0 : index
    %459 = vector.load %arg13[%c0_201, %c0_202] : memref<128x512xbf16, #tpu.memory_space<vmem>>, vector<128x512xbf16>
    %cst_203 = arith.constant dense<0.000000e+00> : vector<8x512xf32>
    %460 = tpu.matmul %458, %459, %cst_203 {dimension_numbers = #tpu.dot_dimension_numbers<[1], [0], [0], [1], [0, 0, 1, 1], [], []>} : vector<8x128xbf16>, vector<128x512xbf16>, vector<8x512xf32> -> vector<8x512xf32>
    %461 = arith.addf %457, %460 : vector<8x512xf32>
    %462 = vector.extract_strided_slice %461 {offsets = [0, 0], sizes = [8, 128], strides = [1, 1]} : vector<8x512xf32> to vector<8x128xf32>
    %cst_204 = arith.constant 5.000000e-01 : f32
    %463 = vector.broadcast %cst_204 : f32 to vector<8x128xf32>
    %464 = arith.mulf %463, %462 : vector<8x128xf32>
    %465 = math.tanh %464 : vector<8x128xf32>
    %cst_205 = arith.constant 1.000000e+00 : f32
    %466 = vector.broadcast %cst_205 : f32 to vector<8x128xf32>
    %467 = arith.addf %466, %465 : vector<8x128xf32>
    %cst_206 = arith.constant 5.000000e-01 : f32
    %468 = vector.broadcast %cst_206 : f32 to vector<8x128xf32>
    %469 = arith.mulf %468, %467 : vector<8x128xf32>
    %470 = vector.extract_strided_slice %461 {offsets = [0, 128], sizes = [8, 128], strides = [1, 1]} : vector<8x512xf32> to vector<8x128xf32>
    %cst_207 = arith.constant 5.000000e-01 : f32
    %471 = vector.broadcast %cst_207 : f32 to vector<8x128xf32>
    %472 = arith.mulf %471, %470 : vector<8x128xf32>
    %473 = math.tanh %472 : vector<8x128xf32>
    %cst_208 = arith.constant 1.000000e+00 : f32
    %474 = vector.broadcast %cst_208 : f32 to vector<8x128xf32>
    %475 = arith.addf %474, %473 : vector<8x128xf32>
    %cst_209 = arith.constant 5.000000e-01 : f32
    %476 = vector.broadcast %cst_209 : f32 to vector<8x128xf32>
    %477 = arith.mulf %476, %475 : vector<8x128xf32>
    %478 = vector.extract_strided_slice %461 {offsets = [0, 256], sizes = [8, 128], strides = [1, 1]} : vector<8x512xf32> to vector<8x128xf32>
    %479 = math.tanh %478 : vector<8x128xf32>
    %480 = vector.extract_strided_slice %461 {offsets = [0, 384], sizes = [8, 128], strides = [1, 1]} : vector<8x512xf32> to vector<8x128xf32>
    %cst_210 = arith.constant 5.000000e-01 : f32
    %481 = vector.broadcast %cst_210 : f32 to vector<8x128xf32>
    %482 = arith.mulf %481, %480 : vector<8x128xf32>
    %483 = math.tanh %482 : vector<8x128xf32>
    %cst_211 = arith.constant 1.000000e+00 : f32
    %484 = vector.broadcast %cst_211 : f32 to vector<8x128xf32>
    %485 = arith.addf %484, %483 : vector<8x128xf32>
    %cst_212 = arith.constant 5.000000e-01 : f32
    %486 = vector.broadcast %cst_212 : f32 to vector<8x128xf32>
    %487 = arith.mulf %486, %485 : vector<8x128xf32>
    %488 = arith.mulf %477, %454 : vector<8x128xf32>
    %489 = arith.mulf %469, %479 : vector<8x128xf32>
    %490 = arith.addf %488, %489 : vector<8x128xf32>
    %491 = math.tanh %490 : vector<8x128xf32>
    %492 = arith.mulf %487, %491 : vector<8x128xf32>
    %c32_213 = arith.constant 32 : index
    %c0_214 = arith.constant 0 : index
    %493 = vector.load %arg11[%c32_213, %c0_214] : memref<64x512xf32, #tpu.memory_space<vmem>>, vector<8x512xf32>
    %494 = arith.truncf %492 : vector<8x128xf32> to vector<8x128xbf16>
    %c0_215 = arith.constant 0 : index
    %c0_216 = arith.constant 0 : index
    %495 = vector.load %arg13[%c0_215, %c0_216] : memref<128x512xbf16, #tpu.memory_space<vmem>>, vector<128x512xbf16>
    %cst_217 = arith.constant dense<0.000000e+00> : vector<8x512xf32>
    %496 = tpu.matmul %494, %495, %cst_217 {dimension_numbers = #tpu.dot_dimension_numbers<[1], [0], [0], [1], [0, 0, 1, 1], [], []>} : vector<8x128xbf16>, vector<128x512xbf16>, vector<8x512xf32> -> vector<8x512xf32>
    %497 = arith.addf %493, %496 : vector<8x512xf32>
    %498 = vector.extract_strided_slice %497 {offsets = [0, 0], sizes = [8, 128], strides = [1, 1]} : vector<8x512xf32> to vector<8x128xf32>
    %cst_218 = arith.constant 5.000000e-01 : f32
    %499 = vector.broadcast %cst_218 : f32 to vector<8x128xf32>
    %500 = arith.mulf %499, %498 : vector<8x128xf32>
    %501 = math.tanh %500 : vector<8x128xf32>
    %cst_219 = arith.constant 1.000000e+00 : f32
    %502 = vector.broadcast %cst_219 : f32 to vector<8x128xf32>
    %503 = arith.addf %502, %501 : vector<8x128xf32>
    %cst_220 = arith.constant 5.000000e-01 : f32
    %504 = vector.broadcast %cst_220 : f32 to vector<8x128xf32>
    %505 = arith.mulf %504, %503 : vector<8x128xf32>
    %506 = vector.extract_strided_slice %497 {offsets = [0, 128], sizes = [8, 128], strides = [1, 1]} : vector<8x512xf32> to vector<8x128xf32>
    %cst_221 = arith.constant 5.000000e-01 : f32
    %507 = vector.broadcast %cst_221 : f32 to vector<8x128xf32>
    %508 = arith.mulf %507, %506 : vector<8x128xf32>
    %509 = math.tanh %508 : vector<8x128xf32>
    %cst_222 = arith.constant 1.000000e+00 : f32
    %510 = vector.broadcast %cst_222 : f32 to vector<8x128xf32>
    %511 = arith.addf %510, %509 : vector<8x128xf32>
    %cst_223 = arith.constant 5.000000e-01 : f32
    %512 = vector.broadcast %cst_223 : f32 to vector<8x128xf32>
    %513 = arith.mulf %512, %511 : vector<8x128xf32>
    %514 = vector.extract_strided_slice %497 {offsets = [0, 256], sizes = [8, 128], strides = [1, 1]} : vector<8x512xf32> to vector<8x128xf32>
    %515 = math.tanh %514 : vector<8x128xf32>
    %516 = vector.extract_strided_slice %497 {offsets = [0, 384], sizes = [8, 128], strides = [1, 1]} : vector<8x512xf32> to vector<8x128xf32>
    %cst_224 = arith.constant 5.000000e-01 : f32
    %517 = vector.broadcast %cst_224 : f32 to vector<8x128xf32>
    %518 = arith.mulf %517, %516 : vector<8x128xf32>
    %519 = math.tanh %518 : vector<8x128xf32>
    %cst_225 = arith.constant 1.000000e+00 : f32
    %520 = vector.broadcast %cst_225 : f32 to vector<8x128xf32>
    %521 = arith.addf %520, %519 : vector<8x128xf32>
    %cst_226 = arith.constant 5.000000e-01 : f32
    %522 = vector.broadcast %cst_226 : f32 to vector<8x128xf32>
    %523 = arith.mulf %522, %521 : vector<8x128xf32>
    %524 = arith.mulf %513, %490 : vector<8x128xf32>
    %525 = arith.mulf %505, %515 : vector<8x128xf32>
    %526 = arith.addf %524, %525 : vector<8x128xf32>
    %527 = math.tanh %526 : vector<8x128xf32>
    %528 = arith.mulf %523, %527 : vector<8x128xf32>
    %c40_227 = arith.constant 40 : index
    %c0_228 = arith.constant 0 : index
    %529 = vector.load %arg11[%c40_227, %c0_228] : memref<64x512xf32, #tpu.memory_space<vmem>>, vector<8x512xf32>
    %530 = arith.truncf %528 : vector<8x128xf32> to vector<8x128xbf16>
    %c0_229 = arith.constant 0 : index
    %c0_230 = arith.constant 0 : index
    %531 = vector.load %arg13[%c0_229, %c0_230] : memref<128x512xbf16, #tpu.memory_space<vmem>>, vector<128x512xbf16>
    %cst_231 = arith.constant dense<0.000000e+00> : vector<8x512xf32>
    %532 = tpu.matmul %530, %531, %cst_231 {dimension_numbers = #tpu.dot_dimension_numbers<[1], [0], [0], [1], [0, 0, 1, 1], [], []>} : vector<8x128xbf16>, vector<128x512xbf16>, vector<8x512xf32> -> vector<8x512xf32>
    %533 = arith.addf %529, %532 : vector<8x512xf32>
    %534 = vector.extract_strided_slice %533 {offsets = [0, 0], sizes = [8, 128], strides = [1, 1]} : vector<8x512xf32> to vector<8x128xf32>
    %cst_232 = arith.constant 5.000000e-01 : f32
    %535 = vector.broadcast %cst_232 : f32 to vector<8x128xf32>
    %536 = arith.mulf %535, %534 : vector<8x128xf32>
    %537 = math.tanh %536 : vector<8x128xf32>
    %cst_233 = arith.constant 1.000000e+00 : f32
    %538 = vector.broadcast %cst_233 : f32 to vector<8x128xf32>
    %539 = arith.addf %538, %537 : vector<8x128xf32>
    %cst_234 = arith.constant 5.000000e-01 : f32
    %540 = vector.broadcast %cst_234 : f32 to vector<8x128xf32>
    %541 = arith.mulf %540, %539 : vector<8x128xf32>
    %542 = vector.extract_strided_slice %533 {offsets = [0, 128], sizes = [8, 128], strides = [1, 1]} : vector<8x512xf32> to vector<8x128xf32>
    %cst_235 = arith.constant 5.000000e-01 : f32
    %543 = vector.broadcast %cst_235 : f32 to vector<8x128xf32>
    %544 = arith.mulf %543, %542 : vector<8x128xf32>
    %545 = math.tanh %544 : vector<8x128xf32>
    %cst_236 = arith.constant 1.000000e+00 : f32
    %546 = vector.broadcast %cst_236 : f32 to vector<8x128xf32>
    %547 = arith.addf %546, %545 : vector<8x128xf32>
    %cst_237 = arith.constant 5.000000e-01 : f32
    %548 = vector.broadcast %cst_237 : f32 to vector<8x128xf32>
    %549 = arith.mulf %548, %547 : vector<8x128xf32>
    %550 = vector.extract_strided_slice %533 {offsets = [0, 256], sizes = [8, 128], strides = [1, 1]} : vector<8x512xf32> to vector<8x128xf32>
    %551 = math.tanh %550 : vector<8x128xf32>
    %552 = vector.extract_strided_slice %533 {offsets = [0, 384], sizes = [8, 128], strides = [1, 1]} : vector<8x512xf32> to vector<8x128xf32>
    %cst_238 = arith.constant 5.000000e-01 : f32
    %553 = vector.broadcast %cst_238 : f32 to vector<8x128xf32>
    %554 = arith.mulf %553, %552 : vector<8x128xf32>
    %555 = math.tanh %554 : vector<8x128xf32>
    %cst_239 = arith.constant 1.000000e+00 : f32
    %556 = vector.broadcast %cst_239 : f32 to vector<8x128xf32>
    %557 = arith.addf %556, %555 : vector<8x128xf32>
    %cst_240 = arith.constant 5.000000e-01 : f32
    %558 = vector.broadcast %cst_240 : f32 to vector<8x128xf32>
    %559 = arith.mulf %558, %557 : vector<8x128xf32>
    %560 = arith.mulf %549, %526 : vector<8x128xf32>
    %561 = arith.mulf %541, %551 : vector<8x128xf32>
    %562 = arith.addf %560, %561 : vector<8x128xf32>
    %563 = math.tanh %562 : vector<8x128xf32>
    %564 = arith.mulf %559, %563 : vector<8x128xf32>
    %c48_241 = arith.constant 48 : index
    %c0_242 = arith.constant 0 : index
    %565 = vector.load %arg11[%c48_241, %c0_242] : memref<64x512xf32, #tpu.memory_space<vmem>>, vector<8x512xf32>
    %566 = arith.truncf %564 : vector<8x128xf32> to vector<8x128xbf16>
    %c0_243 = arith.constant 0 : index
    %c0_244 = arith.constant 0 : index
    %567 = vector.load %arg13[%c0_243, %c0_244] : memref<128x512xbf16, #tpu.memory_space<vmem>>, vector<128x512xbf16>
    %cst_245 = arith.constant dense<0.000000e+00> : vector<8x512xf32>
    %568 = tpu.matmul %566, %567, %cst_245 {dimension_numbers = #tpu.dot_dimension_numbers<[1], [0], [0], [1], [0, 0, 1, 1], [], []>} : vector<8x128xbf16>, vector<128x512xbf16>, vector<8x512xf32> -> vector<8x512xf32>
    %569 = arith.addf %565, %568 : vector<8x512xf32>
    %570 = vector.extract_strided_slice %569 {offsets = [0, 0], sizes = [8, 128], strides = [1, 1]} : vector<8x512xf32> to vector<8x128xf32>
    %cst_246 = arith.constant 5.000000e-01 : f32
    %571 = vector.broadcast %cst_246 : f32 to vector<8x128xf32>
    %572 = arith.mulf %571, %570 : vector<8x128xf32>
    %573 = math.tanh %572 : vector<8x128xf32>
    %cst_247 = arith.constant 1.000000e+00 : f32
    %574 = vector.broadcast %cst_247 : f32 to vector<8x128xf32>
    %575 = arith.addf %574, %573 : vector<8x128xf32>
    %cst_248 = arith.constant 5.000000e-01 : f32
    %576 = vector.broadcast %cst_248 : f32 to vector<8x128xf32>
    %577 = arith.mulf %576, %575 : vector<8x128xf32>
    %578 = vector.extract_strided_slice %569 {offsets = [0, 128], sizes = [8, 128], strides = [1, 1]} : vector<8x512xf32> to vector<8x128xf32>
    %cst_249 = arith.constant 5.000000e-01 : f32
    %579 = vector.broadcast %cst_249 : f32 to vector<8x128xf32>
    %580 = arith.mulf %579, %578 : vector<8x128xf32>
    %581 = math.tanh %580 : vector<8x128xf32>
    %cst_250 = arith.constant 1.000000e+00 : f32
    %582 = vector.broadcast %cst_250 : f32 to vector<8x128xf32>
    %583 = arith.addf %582, %581 : vector<8x128xf32>
    %cst_251 = arith.constant 5.000000e-01 : f32
    %584 = vector.broadcast %cst_251 : f32 to vector<8x128xf32>
    %585 = arith.mulf %584, %583 : vector<8x128xf32>
    %586 = vector.extract_strided_slice %569 {offsets = [0, 256], sizes = [8, 128], strides = [1, 1]} : vector<8x512xf32> to vector<8x128xf32>
    %587 = math.tanh %586 : vector<8x128xf32>
    %588 = vector.extract_strided_slice %569 {offsets = [0, 384], sizes = [8, 128], strides = [1, 1]} : vector<8x512xf32> to vector<8x128xf32>
    %cst_252 = arith.constant 5.000000e-01 : f32
    %589 = vector.broadcast %cst_252 : f32 to vector<8x128xf32>
    %590 = arith.mulf %589, %588 : vector<8x128xf32>
    %591 = math.tanh %590 : vector<8x128xf32>
    %cst_253 = arith.constant 1.000000e+00 : f32
    %592 = vector.broadcast %cst_253 : f32 to vector<8x128xf32>
    %593 = arith.addf %592, %591 : vector<8x128xf32>
    %cst_254 = arith.constant 5.000000e-01 : f32
    %594 = vector.broadcast %cst_254 : f32 to vector<8x128xf32>
    %595 = arith.mulf %594, %593 : vector<8x128xf32>
    %596 = arith.mulf %585, %562 : vector<8x128xf32>
    %597 = arith.mulf %577, %587 : vector<8x128xf32>
    %598 = arith.addf %596, %597 : vector<8x128xf32>
    %599 = math.tanh %598 : vector<8x128xf32>
    %600 = arith.mulf %595, %599 : vector<8x128xf32>
    %c56_255 = arith.constant 56 : index
    %c0_256 = arith.constant 0 : index
    %601 = vector.load %arg11[%c56_255, %c0_256] : memref<64x512xf32, #tpu.memory_space<vmem>>, vector<8x512xf32>
    %602 = arith.truncf %600 : vector<8x128xf32> to vector<8x128xbf16>
    %c0_257 = arith.constant 0 : index
    %c0_258 = arith.constant 0 : index
    %603 = vector.load %arg13[%c0_257, %c0_258] : memref<128x512xbf16, #tpu.memory_space<vmem>>, vector<128x512xbf16>
    %cst_259 = arith.constant dense<0.000000e+00> : vector<8x512xf32>
    %604 = tpu.matmul %602, %603, %cst_259 {dimension_numbers = #tpu.dot_dimension_numbers<[1], [0], [0], [1], [0, 0, 1, 1], [], []>} : vector<8x128xbf16>, vector<128x512xbf16>, vector<8x512xf32> -> vector<8x512xf32>
    %605 = arith.addf %601, %604 : vector<8x512xf32>
    %606 = vector.extract_strided_slice %605 {offsets = [0, 0], sizes = [8, 128], strides = [1, 1]} : vector<8x512xf32> to vector<8x128xf32>
    %cst_260 = arith.constant 5.000000e-01 : f32
    %607 = vector.broadcast %cst_260 : f32 to vector<8x128xf32>
    %608 = arith.mulf %607, %606 : vector<8x128xf32>
    %609 = math.tanh %608 : vector<8x128xf32>
    %cst_261 = arith.constant 1.000000e+00 : f32
    %610 = vector.broadcast %cst_261 : f32 to vector<8x128xf32>
    %611 = arith.addf %610, %609 : vector<8x128xf32>
    %cst_262 = arith.constant 5.000000e-01 : f32
    %612 = vector.broadcast %cst_262 : f32 to vector<8x128xf32>
    %613 = arith.mulf %612, %611 : vector<8x128xf32>
    %614 = vector.extract_strided_slice %605 {offsets = [0, 128], sizes = [8, 128], strides = [1, 1]} : vector<8x512xf32> to vector<8x128xf32>
    %cst_263 = arith.constant 5.000000e-01 : f32
    %615 = vector.broadcast %cst_263 : f32 to vector<8x128xf32>
    %616 = arith.mulf %615, %614 : vector<8x128xf32>
    %617 = math.tanh %616 : vector<8x128xf32>
    %cst_264 = arith.constant 1.000000e+00 : f32
    %618 = vector.broadcast %cst_264 : f32 to vector<8x128xf32>
    %619 = arith.addf %618, %617 : vector<8x128xf32>
    %cst_265 = arith.constant 5.000000e-01 : f32
    %620 = vector.broadcast %cst_265 : f32 to vector<8x128xf32>
    %621 = arith.mulf %620, %619 : vector<8x128xf32>
    %622 = vector.extract_strided_slice %605 {offsets = [0, 256], sizes = [8, 128], strides = [1, 1]} : vector<8x512xf32> to vector<8x128xf32>
    %623 = math.tanh %622 : vector<8x128xf32>
    %624 = vector.extract_strided_slice %605 {offsets = [0, 384], sizes = [8, 128], strides = [1, 1]} : vector<8x512xf32> to vector<8x128xf32>
    %cst_266 = arith.constant 5.000000e-01 : f32
    %625 = vector.broadcast %cst_266 : f32 to vector<8x128xf32>
    %626 = arith.mulf %625, %624 : vector<8x128xf32>
    %627 = math.tanh %626 : vector<8x128xf32>
    %cst_267 = arith.constant 1.000000e+00 : f32
    %628 = vector.broadcast %cst_267 : f32 to vector<8x128xf32>
    %629 = arith.addf %628, %627 : vector<8x128xf32>
    %cst_268 = arith.constant 5.000000e-01 : f32
    %630 = vector.broadcast %cst_268 : f32 to vector<8x128xf32>
    %631 = arith.mulf %630, %629 : vector<8x128xf32>
    %632 = arith.mulf %621, %598 : vector<8x128xf32>
    %633 = arith.mulf %613, %623 : vector<8x128xf32>
    %634 = arith.addf %632, %633 : vector<8x128xf32>
    %635 = math.tanh %634 : vector<8x128xf32>
    %636 = arith.mulf %631, %635 : vector<8x128xf32>
    %c2_i32_269 = arith.constant 2 : i32
    %637 = tpu.memref_slice %arg15[%c2_i32_269] : memref<3x!tpu.dma_semaphore, #tpu.memory_space<semaphore_mem>> -> memref<1x!tpu.dma_semaphore, #tpu.memory_space<semaphore_mem>>
    %638 = tpu.memref_squeeze %637 : memref<1x!tpu.dma_semaphore, #tpu.memory_space<semaphore_mem>> -> memref<!tpu.dma_semaphore, #tpu.memory_space<semaphore_mem>>
    tpu.wait_dma2 semaphore(%638 : memref<!tpu.dma_semaphore, #tpu.memory_space<semaphore_mem>>) src(%arg8 : memref<128x128xbf16, #tpu.memory_space<any>>) dst(%arg14 : memref<128x128xbf16, #tpu.memory_space<vmem>>)
    %639 = arith.truncf %636 : vector<8x128xf32> to vector<8x128xbf16>
    %c0_270 = arith.constant 0 : index
    %c0_271 = arith.constant 0 : index
    %640 = vector.load %arg14[%c0_270, %c0_271] : memref<128x128xbf16, #tpu.memory_space<vmem>>, vector<128x128xbf16>
    %cst_272 = arith.constant dense<0.000000e+00> : vector<8x128xf32>
    %641 = tpu.matmul %639, %640, %cst_272 {dimension_numbers = #tpu.dot_dimension_numbers<[1], [0], [0], [1], [0, 0, 1, 1], [], []>} : vector<8x128xbf16>, vector<128x128xbf16>, vector<8x128xf32> -> vector<8x128xf32>
    %c0_273 = arith.constant 0 : index
    %c0_274 = arith.constant 0 : index
    %642 = vector.load %arg5[%c0_273, %c0_274] : memref<1x128xf32, #tpu.memory_space<vmem>>, vector<1x128xf32>
    %643 = vector.broadcast %642 : vector<1x128xf32> to vector<8x128xf32>
    %644 = arith.addf %641, %643 : vector<8x128xf32>
    %c0_275 = arith.constant 0 : index
    %c0_276 = arith.constant 0 : index
    %645 = vector.load %arg9[%c0_275, %c0_276] : memref<8x128xf32, #tpu.memory_space<vmem>>, vector<8x128xf32>
    tpu.vector_store %arg9[%c0_275, %c0_276], %644 {strides = array<i32>} : memref<8x128xf32, #tpu.memory_space<vmem>>, vector<8x128xf32>,
    return
  }
}

</mosaic_0001>

<llo_original>
// kernel: rnn_classifier_forward.1
$region0: #{rnn_classifier_forward.1}
  #allocation0 [shape = 'u32[]', space=smem, size = 0x4, offset = 0x4, fixed_abs, tag = 'smem constant byte address 0x4 - core index']
  #allocation1 [shape = 'u32[72,128]{1,0:T(1,128)}', space=vmem, size = 0x9000, scoped, tag = 'internal scratch']
  #allocation2 [shape = 'f32[64,512]{1,0:T(8,128)}', space=vmem, size = 0x20000, scoped, tag = 'scratch operand']
  #allocation3 [shape = 'f32[64,512]{1,0:T(8,128)}', space=vmem, size = 0x20000, scoped, tag = 'scratch operand']
  #allocation4 [shape = 'bf16[128,512]{1,0:T(8,128)(2,1)}', space=vmem, size = 0x20000, scoped, tag = 'scratch operand']
  #allocation5 [shape = 'bf16[128,512]{1,0:T(8,128)(2,1)}', space=vmem, size = 0x20000, scoped, tag = 'scratch operand']
  #allocation6 [shape = 'bf16[128,128]{1,0:T(8,128)(2,1)}', space=vmem, size = 0x8000, scoped, tag = 'scratch operand']
  #allocation7 [shape = 's32[3]{0}', space=sflag, size = 0xc, scoped, tag = 'scratch operand']
  #allocation12 [shape = 's32[]', space=sflag, size = 0x4, offset = 0, fixed_abs, tag = 'sflag constant byte address 0x0 - dummy sync flag']
  #allocation13 [shape = 's32[]', space=sflag, size = 0x4, offset = 0, fixed_abs, tag = 'sflag constant byte address 0x0 - dummy sync flag']
  #allocation14 [shape = 'u32[]', space=smem, size = 0x4, offset = 0x44, fixed_abs, tag = 'smem constant byte address 0x44 - assertion arg 0']
  #allocation15 [shape = 'u32[]', space=smem, size = 0x4, offset = 0x48, fixed_abs, tag = 'smem constant byte address 0x48 - assertion arg 1']
  #allocation16 [shape = 's32[]', space=sflag, size = 0x4, offset = 0, fixed_abs, tag = 'sflag constant byte address 0x0 - dummy sync flag']
  #allocation17 [shape = 's32[]', space=sflag, size = 0x4, offset = 0, fixed_abs, tag = 'sflag constant byte address 0x0 - dummy sync flag']
  #allocation18 [shape = 's32[]', space=sflag, size = 0x4, offset = 0, fixed_abs, tag = 'sflag constant byte address 0x0 - dummy sync flag']
  %s0 = inlined_call_operand.vmem [shape: bf16[64,64], index: 0, kind: input, shape index: {}]
  %s1 = inlined_call_operand.hbm [shape: bf16[64,512], index: 1, kind: input, shape index: {}]
  %s2 = inlined_call_operand.hbm [shape: bf16[128,512], index: 2, kind: input, shape index: {}]
  %s3 = inlined_call_operand.vmem [shape: f32[1,512], index: 3, kind: input, shape index: {}]
  %s4 = inlined_call_operand.vmem [shape: f32[1,512], index: 4, kind: input, shape index: {}]
  %s5 = inlined_call_operand.vmem [shape: f32[1,128], index: 5, kind: input, shape index: {}]
  %s6 = inlined_call_operand.hbm [shape: bf16[128,512], index: 6, kind: input, shape index: {}]
  %s7 = inlined_call_operand.hbm [shape: bf16[128,512], index: 7, kind: input, shape index: {}]
  %s8 = inlined_call_operand.vmem [shape: bf16[128,128], index: 8, kind: input, shape index: {}]
  %s9 = inlined_call_operand.vmem [shape: f32[8,128], index: 9, kind: output, shape index: {}]
  %s10 = sld [smem:[#allocation0]]
  $region69: #{rnn_classifier_forward.1} parent=0
    _
  %s12 = ssub.s32 1, %s10
  %s13 = scalar_select 0, %s12, %s10
  $region1: #{rnn_classifier_forward.1} parent=0
    #allocation8 [shape = 'u8[65536]{0}', space=vmem, size = 0x10000, scoped, tag = 'input window, operand 1, single buffered']
    #allocation9 [shape = 's32[1]{0}', space=sflag, size = 0x4, scoped, tag = 'scoped memory for rnn_classifier_forward.1']
    #allocation10 [shape = 'u8[131072]{0}', space=vmem, size = 0x20000, scoped, tag = 'input window, operand 2, single buffered']
    #allocation11 [shape = 's32[1]{0}', space=sflag, size = 0x4, scoped, tag = 'scoped memory for rnn_classifier_forward.1']
    %14 = vsyncpa [#allocation9], 0
    %15 = vsyncpa [#allocation11], 0
    // Predicated region
    $region2: #{rnn_classifier_forward.1} parent=1 // pred_check
      _
    $region3: #{rnn_classifier_forward.1} parent=1 // pred_check_branch
      %17 = sbr.rel (0) target = $region5
    $region4: #{rnn_classifier_forward.1} parent=1 // pred_region
      _
    $region5: #{rnn_classifier_forward.1} parent=1 // pred_fallthru
      _
    // Predicated region
    $region6: #{rnn_classifier_forward.1} parent=1 // pred_check
      _
    $region7: #{rnn_classifier_forward.1} parent=1 // pred_check_branch
      %19 = sbr.rel (0) target = $region9
    $region8: #{rnn_classifier_forward.1} parent=1 // pred_region
      %21 = vsyncadd [#allocation9], 0
      %s22 = sshll.u32 %s1, 4
      %s23 = int_to_ptr.hbm [resolvable:$true] %s22
      %s24 = sshll.u32 [#allocation8], 4
      %s25 = int_to_ptr.vmem [resolvable:$true] %s24
      %30 = dma.hbm_to_vmem [thread:$0]  %s23, 2048, %s25, [#allocation9], 256, 256, 16
    $region9: #{rnn_classifier_forward.1} parent=1 // pred_fallthru
      _
    // Predicated region
    $region10: #{rnn_classifier_forward.1} parent=1 // pred_check
      _
    $region11: #{rnn_classifier_forward.1} parent=1 // pred_check_branch
      %32 = sbr.rel (0) target = $region13
    $region12: #{rnn_classifier_forward.1} parent=1 // pred_region
      %34 = vsyncadd [#allocation11], 0
      %s35 = sshll.u32 %s2, 4
      %s36 = int_to_ptr.hbm [resolvable:$true] %s35
      %s37 = sshll.u32 [#allocation10], 4
      %s38 = int_to_ptr.vmem [resolvable:$true] %s37
      %43 = dma.hbm_to_vmem [thread:$0]  %s36, 4096, %s38, [#allocation11], 256, 256, 16
    $region13: #{rnn_classifier_forward.1} parent=1 // pred_fallthru
      _
    // Predicated region
    $region14: #{rnn_classifier_forward.1} parent=1 // pred_check
      _
    $region15: #{rnn_classifier_forward.1} parent=1 // pred_check_branch
      %45 = sbr.rel (0) target = $region17
    $region16: #{rnn_classifier_forward.1} parent=1 // pred_region
      _
    $region17: #{rnn_classifier_forward.1} parent=1 // pred_fallthru
      _
    // Predicated region
    $region18: #{rnn_classifier_forward.1} parent=1 // pred_check
      _
    $region19: #{rnn_classifier_forward.1} parent=1 // pred_check_branch
      %47 = sbr.rel (0) target = $region21
    $region20: #{rnn_classifier_forward.1} parent=1 // pred_region
      _
    $region21: #{rnn_classifier_forward.1} parent=1 // pred_fallthru
      _
    // Predicated region
    $region22: #{rnn_classifier_forward.1} parent=1 // pred_check
      _
    $region23: #{rnn_classifier_forward.1} parent=1 // pred_check_branch
      %49 = sbr.rel (0) target = $region25
    $region24: #{rnn_classifier_forward.1} parent=1 // pred_region
      _
    $region25: #{rnn_classifier_forward.1} parent=1 // pred_fallthru
      _
    // Predicated region
    $region26: #{rnn_classifier_forward.1} parent=1 // pred_check
      _
    $region27: #{rnn_classifier_forward.1} parent=1 // pred_check_branch
      %51 = sbr.rel (0) target = $region29
    $region28: #{rnn_classifier_forward.1} parent=1 // pred_region
      %53 = dma.done [#allocation9], 2048
    $region29: #{rnn_classifier_forward.1} parent=1 // pred_fallthru
      _
    // Predicated region
    $region30: #{rnn_classifier_forward.1} parent=1 // pred_check
      _
    $region31: #{rnn_classifier_forward.1} parent=1 // pred_check_branch
      %55 = sbr.rel (0) target = $region33
    $region32: #{rnn_classifier_forward.1} parent=1 // pred_region
      %57 = dma.done [#allocation11], 4096
    $region33: #{rnn_classifier_forward.1} parent=1 // pred_fallthru
      _
    // Predicated region
    $region34: #{rnn_classifier_forward.1} parent=1 // pred_check
      _
    $region35: #{rnn_classifier_forward.1} parent=1 // pred_check_branch
      %60 = sbr.rel target = $region37
    $region36: #{rnn_classifier_forward.1} parent=1 // pred_region
      %61 = sst [smem:[#allocation14]] [#allocation13]
      %62 = sst [smem:[#allocation15]] [#allocation12]
    $region37: #{rnn_classifier_forward.1} parent=1 // pred_fallthru
      _
    %64 = shalt.err (0)
    %s66 = sshll.u32 %s6, 4
    %s67 = int_to_ptr.hbm [resolvable:$true] %s66
    %s68 = sshll.u32 [#allocation4], 4
    %s69 = int_to_ptr.vmem [resolvable:$true] %s68
    %71 = dma.hbm_to_vmem [thread:$0]  %s67, 4096, %s69, [#allocation7]
    %s72 = scalar_lea.sflag [#allocation7], 1
    // Predicated region
    $region38: #{rnn_classifier_forward.1} parent=1 // pred_check
      _
    $region39: #{rnn_classifier_forward.1} parent=1 // pred_check_branch
      %74 = sbr.rel target = $region41
    $region40: #{rnn_classifier_forward.1} parent=1 // pred_region
      %75 = sst [smem:[#allocation14]] [#allocation17]
      %76 = sst [smem:[#allocation15]] [#allocation16]
    $region41: #{rnn_classifier_forward.1} parent=1 // pred_fallthru
      _
    %78 = shalt.err (0)
    %s80 = sshll.u32 %s7, 4
    %s81 = int_to_ptr.hbm [resolvable:$true] %s80
    %s82 = sshll.u32 [#allocation5], 4
    %s83 = int_to_ptr.vmem [resolvable:$true] %s82
    %85 = dma.hbm_to_vmem [thread:$0]  %s81, 4096, %s83, %s72
    %s86 = scalar_lea.sflag [#allocation7], 2
    // Predicated region
    $region42: #{rnn_classifier_forward.1} parent=1 // pred_check
      _
    $region43: #{rnn_classifier_forward.1} parent=1 // pred_check_branch
      %88 = sbr.rel (0) target = $region45
    $region44: #{rnn_classifier_forward.1} parent=1 // pred_region
      loop: start=0, step=1, limit=1
      $region46: #{rnn_classifier_forward.1} parent=44 // loop_pre_header
        _
      $region47: #{rnn_classifier_forward.1} parent=44 // loop_header
        %s90 = sphi 0, %s94
        %p91 = scmp.ge.s32.totalorder %s90, 1
        %s95 = sphi %s8, %s8
        %s96 = sphi [#allocation6], [#allocation6]
      $region48: #{rnn_classifier_forward.1} parent=44 // loop_header_branch
        %93 = sbr.rel (%p91) target = $region52
      $region49: #{rnn_classifier_forward.1} parent=44 // loop_body
        %v97 = vld [vmem:[%s95] sm:$0xff]
        %98 = vst [vmem:[%s96] sm:$0xff] %v97
        %v99 = vld [vmem:[%s95 + $0x8] sm:$0xff]
        %100 = vst [vmem:[%s96 + $0x8] sm:$0xff] %v99
        %v101 = vld [vmem:[%s95 + $0x10] sm:$0xff]
        %102 = vst [vmem:[%s96 + $0x10] sm:$0xff] %v101
        %v103 = vld [vmem:[%s95 + $0x18] sm:$0xff]
        %104 = vst [vmem:[%s96 + $0x18] sm:$0xff] %v103
        %v105 = vld [vmem:[%s95 + $0x20] sm:$0xff]
        %106 = vst [vmem:[%s96 + $0x20] sm:$0xff] %v105
        %v107 = vld [vmem:[%s95 + $0x28] sm:$0xff]
        %108 = vst [vmem:[%s96 + $0x28] sm:$0xff] %v107
        %v109 = vld [vmem:[%s95 + $0x30] sm:$0xff]
        %110 = vst [vmem:[%s96 + $0x30] sm:$0xff] %v109
        %v111 = vld [vmem:[%s95 + $0x38] sm:$0xff]
        %112 = vst [vmem:[%s96 + $0x38] sm:$0xff] %v111
      $region50: #{rnn_classifier_forward.1} parent=44 // loop_footer
        %s94 = sadd.s32 1, %s90
      $region51: #{rnn_classifier_forward.1} parent=44 // loop_footer_branch
        %89 = sbr.rel target = $region47
      $region52: #{rnn_classifier_forward.1} parent=44 // loop_exit
        _
    $region45: #{rnn_classifier_forward.1} parent=1 // pred_fallthru
      _
    // Predicated region
    $region53: #{rnn_classifier_forward.1} parent=1 // pred_check
      _
    $region54: #{rnn_classifier_forward.1} parent=1 // pred_check_branch
      %114 = sbr.rel target = $region56
    $region55: #{rnn_classifier_forward.1} parent=1 // pred_region
      _
    $region56: #{rnn_classifier_forward.1} parent=1 // pred_fallthru
      _
    // Predicated region
    $region57: #{rnn_classifier_forward.1} parent=1 // pred_check
      _
    $region58: #{rnn_classifier_forward.1} parent=1 // pred_check_branch
      %117 = sbr.rel (0) target = $region60
    $region59: #{rnn_classifier_forward.1} parent=1 // pred_region
      %118 = vsyncadd %s86, 1024
    $region60: #{rnn_classifier_forward.1} parent=1 // pred_fallthru
      _
    %v119 = vld [vmem:[%s0] sm:$0xf]
    %v120 = vld [vmem:[%s0 + $0x4] sm:$0xf]
    %v121 = vld [vmem:[%s0 + $0x8] sm:$0xf]
    %v122 = vld [vmem:[%s0 + $0xc] sm:$0xf]
    %v123 = vld [vmem:[%s0 + $0x10] sm:$0xf]
    %v124 = vld [vmem:[%s0 + $0x14] sm:$0xf]
    %v125 = vld [vmem:[%s0 + $0x18] sm:$0xf]
    %v126 = vld [vmem:[%s0 + $0x1c] sm:$0xf]
    %v127 = vld [vmem:[#allocation8] sm:$0xff]
    %v128 = vld [vmem:[#allocation8 + $0x8] sm:$0xff]
    %v129 = vld [vmem:[#allocation8 + $0x10] sm:$0xff]
    %v130 = vld [vmem:[#allocation8 + $0x18] sm:$0xff]
    %v131 = vld [vmem:[#allocation8 + $0x20] sm:$0xff]
    %v132 = vld [vmem:[#allocation8 + $0x28] sm:$0xff]
    %v133 = vld [vmem:[#allocation8 + $0x30] sm:$0xff]
    %v134 = vld [vmem:[#allocation8 + $0x38] sm:$0xff]
    %v135 = vld [vmem:[#allocation8 + $0x40] sm:$0xff]
    %v136 = vld [vmem:[#allocation8 + $0x48] sm:$0xff]
    %v137 = vld [vmem:[#allocation8 + $0x50] sm:$0xff]
    %v138 = vld [vmem:[#allocation8 + $0x58] sm:$0xff]
    %v139 = vld [vmem:[#allocation8 + $0x60] sm:$0xff]
    %v140 = vld [vmem:[#allocation8 + $0x68] sm:$0xff]
    %v141 = vld [vmem:[#allocation8 + $0x70] sm:$0xff]
    %v142 = vld [vmem:[#allocation8 + $0x78] sm:$0xff]
    %v143 = vld [vmem:[%s3] sm:$0xf]
    %v145 = vperm.slane %v143, 0
    %v146 = vperm.slane %v143, 1
    %v147 = vperm.slane %v143, 2
    %v148 = vperm.slane %v143, 3
    %v161 = vunpack.c.l.b16 %v119
    %v162 = vunpack.c.l.b16 %v120
    %v163 = vunpack.c.l.b16 %v121
    %v164 = vunpack.c.l.b16 %v122
    %v165 = vunpack.c.l.b16 %v123
    %v166 = vunpack.c.l.b16 %v124
    %v167 = vunpack.c.l.b16 %v125
    %v168 = vunpack.c.l.b16 %v126
    %v169 = vpack.c.b16 %v162, %v161
    %v170 = vpack.c.b16 %v164, %v163
    %v171 = vpack.c.b16 %v166, %v165
    %v172 = vpack.c.b16 %v168, %v167
    %v189 = vunpack.c.l.b16 %v127
    %v190 = vunpack.c.h.b16 %v127
    %v191 = vunpack.c.l.b16 %v128
    %v192 = vunpack.c.h.b16 %v128
    %v193 = vunpack.c.l.b16 %v129
    %v194 = vunpack.c.h.b16 %v129
    %v195 = vunpack.c.l.b16 %v130
    %v196 = vunpack.c.h.b16 %v130
    %v197 = vunpack.c.l.b16 %v131
    %v198 = vunpack.c.h.b16 %v131
    %v199 = vunpack.c.l.b16 %v132
    %v200 = vunpack.c.h.b16 %v132
    %v201 = vunpack.c.l.b16 %v133
    %v202 = vunpack.c.h.b16 %v133
    %v203 = vunpack.c.l.b16 %v134
    %v204 = vunpack.c.h.b16 %v134
    %v205 = vunpack.c.l.b16 %v135
    %v206 = vunpack.c.h.b16 %v135
    %v207 = vunpack.c.l.b16 %v136
    %v208 = vunpack.c.h.b16 %v136
    %v209 = vunpack.c.l.b16 %v137
    %v210 = vunpack.c.h.b16 %v137
    %v211 = vunpack.c.l.b16 %v138
    %v212 = vunpack.c.h.b16 %v138
    %v213 = vunpack.c.l.b16 %v139
    %v214 = vunpack.c.h.b16 %v139
    %v215 = vunpack.c.l.b16 %v140
    %v216 = vunpack.c.h.b16 %v140
    %v217 = vunpack.c.l.b16 %v141
    %v218 = vunpack.c.h.b16 %v141
    %v219 = vunpack.c.l.b16 %v142
    %v220 = vunpack.c.h.b16 %v142
    %v221 = vpack.c.b16 %v193, %v189
    %v222 = vpack.c.b16 %v194, %v190
    %v223 = vpack.c.b16 %v195, %v191
    %v224 = vpack.c.b16 %v196, %v192
    %v225 = vpack.c.b16 %v201, %v197
    %v226 = vpack.c.b16 %v202, %v198
    %v227 = vpack.c.b16 %v203, %v199
    %v228 = vpack.c.b16 %v204, %v200
    %v229 = vpack.c.b16 %v209, %v205
    %v230 = vpack.c.b16 %v210, %v206
    %v231 = vpack.c.b16 %v211, %v207
    %v232 = vpack.c.b16 %v212, %v208
    %v233 = vpack.c.b16 %v217, %v213
    %v234 = vpack.c.b16 %v218, %v214
    %v235 = vpack.c.b16 %v219, %v215
    %v236 = vpack.c.b16 %v220, %v216
    %vm253 = vcmask 523264
    %v255 = vsel %vm253, %v169, 0
    %v258 = vsel %vm253, %v170, 0
    %v261 = vsel %vm253, %v171, 0
    %v264 = vsel %vm253, %v172, 0
    %266 = vmatpush.bf16.msra.mxu0 0
    %267 = vmatpush.bf16.msra.mxu0 0
    %268 = vmatpush.bf16.msra.mxu0 0
    %269 = vmatpush.bf16.msra.mxu0 0
    %270 = vmatpush.bf16.msra.mxu0 %v233
    %271 = vmatpush.bf16.msra.mxu0 %v229
    %272 = vmatpush.bf16.msra.mxu0 %v225
    %273 = vmatpush.bf16.msra.mxu0 %v221
    %274 = vmatmul.bf16.gmra.mxu0 %v255
    %v275 = vpop.f32.mrf.mxu0
    %v276 = vadd.f32 %v145, %v275
    %v277 = vpop.f32.mrf.mxu0
    %v278 = vadd.f32 %v145, %v277
    %279 = vmatmul.bf16.gmra.mxu0 %v258
    %v280 = vpop.f32.mrf.mxu0
    %v281 = vadd.f32 %v145, %v280
    %v282 = vpop.f32.mrf.mxu0
    %v283 = vadd.f32 %v145, %v282
    %284 = vmatmul.bf16.gmra.mxu0 %v261
    %v285 = vpop.f32.mrf.mxu0
    %v286 = vadd.f32 %v145, %v285
    %v287 = vpop.f32.mrf.mxu0
    %v288 = vadd.f32 %v145, %v287
    %289 = vmatmul.bf16.gmra.mxu0 %v264
    %v290 = vpop.f32.mrf.mxu0
    %v291 = vadd.f32 %v145, %v290
    %v292 = vpop.f32.mrf.mxu0
    %v293 = vadd.f32 %v145, %v292
    %294 = vdwg.mxu0
    %295 = vmatpush.bf16.msra.mxu0 0
    %296 = vmatpush.bf16.msra.mxu0 0
    %297 = vmatpush.bf16.msra.mxu0 0
    %298 = vmatpush.bf16.msra.mxu0 0
    %299 = vmatpush.bf16.msra.mxu0 %v234
    %300 = vmatpush.bf16.msra.mxu0 %v230
    %301 = vmatpush.bf16.msra.mxu0 %v226
    %302 = vmatpush.bf16.msra.mxu0 %v222
    %303 = vmatmul.bf16.gmra.mxu0 %v255
    %v304 = vpop.f32.mrf.mxu0
    %v305 = vadd.f32 %v146, %v304
    %v306 = vpop.f32.mrf.mxu0
    %v307 = vadd.f32 %v146, %v306
    %308 = vmatmul.bf16.gmra.mxu0 %v258
    %v309 = vpop.f32.mrf.mxu0
    %v310 = vadd.f32 %v146, %v309
    %v311 = vpop.f32.mrf.mxu0
    %v312 = vadd.f32 %v146, %v311
    %313 = vmatmul.bf16.gmra.mxu0 %v261
    %v314 = vpop.f32.mrf.mxu0
    %v315 = vadd.f32 %v146, %v314
    %v316 = vpop.f32.mrf.mxu0
    %v317 = vadd.f32 %v146, %v316
    %318 = vmatmul.bf16.gmra.mxu0 %v264
    %v319 = vpop.f32.mrf.mxu0
    %v320 = vadd.f32 %v146, %v319
    %v321 = vpop.f32.mrf.mxu0
    %v322 = vadd.f32 %v146, %v321
    %323 = vdwg.mxu0
    %324 = vmatpush.bf16.msra.mxu0 0
    %325 = vmatpush.bf16.msra.mxu0 0
    %326 = vmatpush.bf16.msra.mxu0 0
    %327 = vmatpush.bf16.msra.mxu0 0
    %328 = vmatpush.bf16.msra.mxu0 %v235
    %329 = vmatpush.bf16.msra.mxu0 %v231
    %330 = vmatpush.bf16.msra.mxu0 %v227
    %331 = vmatpush.bf16.msra.mxu0 %v223
    %332 = vmatmul.bf16.gmra.mxu0 %v255
    %v333 = vpop.f32.mrf.mxu0
    %v334 = vadd.f32 %v147, %v333
    %v335 = vpop.f32.mrf.mxu0
    %v336 = vadd.f32 %v147, %v335
    %337 = vmatmul.bf16.gmra.mxu0 %v258
    %v338 = vpop.f32.mrf.mxu0
    %v339 = vadd.f32 %v147, %v338
    %v340 = vpop.f32.mrf.mxu0
    %v341 = vadd.f32 %v147, %v340
    %342 = vmatmul.bf16.gmra.mxu0 %v261
    %v343 = vpop.f32.mrf.mxu0
    %v344 = vadd.f32 %v147, %v343
    %v345 = vpop.f32.mrf.mxu0
    %v346 = vadd.f32 %v147, %v345
    %347 = vmatmul.bf16.gmra.mxu0 %v264
    %v348 = vpop.f32.mrf.mxu0
    %v349 = vadd.f32 %v147, %v348
    %v350 = vpop.f32.mrf.mxu0
    %v351 = vadd.f32 %v147, %v350
    %352 = vdwg.mxu0
    %353 = vmatpush.bf16.msra.mxu0 0
    %354 = vmatpush.bf16.msra.mxu0 0
    %355 = vmatpush.bf16.msra.mxu0 0
    %356 = vmatpush.bf16.msra.mxu0 0
    %357 = vmatpush.bf16.msra.mxu0 %v236
    %358 = vmatpush.bf16.msra.mxu0 %v232
    %359 = vmatpush.bf16.msra.mxu0 %v228
    %360 = vmatpush.bf16.msra.mxu0 %v224
    %361 = vmatmul.bf16.gmra.mxu0 %v255
    %v362 = vpop.f32.mrf.mxu0
    %v363 = vadd.f32 %v148, %v362
    %v364 = vpop.f32.mrf.mxu0
    %v365 = vadd.f32 %v148, %v364
    %366 = vmatmul.bf16.gmra.mxu0 %v258
    %v367 = vpop.f32.mrf.mxu0
    %v368 = vadd.f32 %v148, %v367
    %v369 = vpop.f32.mrf.mxu0
    %v370 = vadd.f32 %v148, %v369
    %371 = vmatmul.bf16.gmra.mxu0 %v261
    %v372 = vpop.f32.mrf.mxu0
    %v373 = vadd.f32 %v148, %v372
    %v374 = vpop.f32.mrf.mxu0
    %v375 = vadd.f32 %v148, %v374
    %376 = vmatmul.bf16.gmra.mxu0 %v264
    %v377 = vpop.f32.mrf.mxu0
    %v378 = vadd.f32 %v148, %v377
    %v379 = vpop.f32.mrf.mxu0
    %v380 = vadd.f32 %v148, %v379
    %381 = vdwg.mxu0
    %382 = vst [vmem:[#allocation2] sm:$0xff] %v276
    %383 = vst [vmem:[#allocation2 + $0x8] sm:$0xff] %v305
    %384 = vst [vmem:[#allocation2 + $0x10] sm:$0xff] %v334
    %385 = vst [vmem:[#allocation2 + $0x18] sm:$0xff] %v363
    %386 = vst [vmem:[#allocation2 + $0x20] sm:$0xff] %v278
    %387 = vst [vmem:[#allocation2 + $0x28] sm:$0xff] %v307
    %388 = vst [vmem:[#allocation2 + $0x30] sm:$0xff] %v336
    %389 = vst [vmem:[#allocation2 + $0x38] sm:$0xff] %v365
    %390 = vst [vmem:[#allocation2 + $0x40] sm:$0xff] %v281
    %391 = vst [vmem:[#allocation2 + $0x48] sm:$0xff] %v310
    %392 = vst [vmem:[#allocation2 + $0x50] sm:$0xff] %v339
    %393 = vst [vmem:[#allocation2 + $0x58] sm:$0xff] %v368
    %394 = vst [vmem:[#allocation2 + $0x60] sm:$0xff] %v283
    %395 = vst [vmem:[#allocation2 + $0x68] sm:$0xff] %v312
    %396 = vst [vmem:[#allocation2 + $0x70] sm:$0xff] %v341
    %397 = vst [vmem:[#allocation2 + $0x78] sm:$0xff] %v370
    %398 = vst [vmem:[#allocation2 + $0x80] sm:$0xff] %v286
    %399 = vst [vmem:[#allocation2 + $0x88] sm:$0xff] %v315
    %400 = vst [vmem:[#allocation2 + $0x90] sm:$0xff] %v344
    %401 = vst [vmem:[#allocation2 + $0x98] sm:$0xff] %v373
    %402 = vst [vmem:[#allocation2 + $0xa0] sm:$0xff] %v288
    %403 = vst [vmem:[#allocation2 + $0xa8] sm:$0xff] %v317
    %404 = vst [vmem:[#allocation2 + $0xb0] sm:$0xff] %v346
    %405 = vst [vmem:[#allocation2 + $0xb8] sm:$0xff] %v375
    %406 = vst [vmem:[#allocation2 + $0xc0] sm:$0xff] %v291
    %407 = vst [vmem:[#allocation2 + $0xc8] sm:$0xff] %v320
    %408 = vst [vmem:[#allocation2 + $0xd0] sm:$0xff] %v349
    %409 = vst [vmem:[#allocation2 + $0xd8] sm:$0xff] %v378
    %410 = vst [vmem:[#allocation2 + $0xe0] sm:$0xff] %v293
    %411 = vst [vmem:[#allocation2 + $0xe8] sm:$0xff] %v322
    %412 = vst [vmem:[#allocation2 + $0xf0] sm:$0xff] %v351
    %413 = vst [vmem:[#allocation2 + $0xf8] sm:$0xff] %v380
    %s414 = smul.u32 4, 16
    %s415 = smul.u32 %s414, 4
    %s416 = sshll.u32 %s415, 4
    %417 = dma.done [#allocation7], %s416
    %v418 = vld [vmem:[%s4] sm:$0xf]
    %v420 = vperm.slane %v418, 0
    %v421 = vperm.slane %v418, 1
    %v422 = vperm.slane %v418, 2
    %v423 = vperm.slane %v418, 3
    %v428 = vld [vmem:[#allocation2] sm:$0xff]
    %v429 = vld [vmem:[#allocation2 + $0x8] sm:$0xff]
    %v430 = vld [vmem:[#allocation2 + $0x10] sm:$0xff]
    %v431 = vld [vmem:[#allocation2 + $0x18] sm:$0xff]
    %v432 = vld [vmem:[#allocation10] sm:$0xff]
    %v433 = vld [vmem:[#allocation10 + $0x8] sm:$0xff]
    %v434 = vld [vmem:[#allocation10 + $0x10] sm:$0xff]
    %v435 = vld [vmem:[#allocation10 + $0x18] sm:$0xff]
    %v436 = vld [vmem:[#allocation10 + $0x20] sm:$0xff]
    %v437 = vld [vmem:[#allocation10 + $0x28] sm:$0xff]
    %v438 = vld [vmem:[#allocation10 + $0x30] sm:$0xff]
    %v439 = vld [vmem:[#allocation10 + $0x38] sm:$0xff]
    %v440 = vld [vmem:[#allocation10 + $0x40] sm:$0xff]
    %v441 = vld [vmem:[#allocation10 + $0x48] sm:$0xff]
    %v442 = vld [vmem:[#allocation10 + $0x50] sm:$0xff]
    %v443 = vld [vmem:[#allocation10 + $0x58] sm:$0xff]
    %v444 = vld [vmem:[#allocation10 + $0x60] sm:$0xff]
    %v445 = vld [vmem:[#allocation10 + $0x68] sm:$0xff]
    %v446 = vld [vmem:[#allocation10 + $0x70] sm:$0xff]
    %v447 = vld [vmem:[#allocation10 + $0x78] sm:$0xff]
    %v448 = vld [vmem:[#allocation10 + $0x80] sm:$0xff]
    %v449 = vld [vmem:[#allocation10 + $0x88] sm:$0xff]
    %v450 = vld [vmem:[#allocation10 + $0x90] sm:$0xff]
    %v451 = vld [vmem:[#allocation10 + $0x98] sm:$0xff]
    %v452 = vld [vmem:[#allocation10 + $0xa0] sm:$0xff]
    %v453 = vld [vmem:[#allocation10 + $0xa8] sm:$0xff]
    %v454 = vld [vmem:[#allocation10 + $0xb0] sm:$0xff]
    %v455 = vld [vmem:[#allocation10 + $0xb8] sm:$0xff]
    %v456 = vld [vmem:[#allocation10 + $0xc0] sm:$0xff]
    %v457 = vld [vmem:[#allocation10 + $0xc8] sm:$0xff]
    %v458 = vld [vmem:[#allocation10 + $0xd0] sm:$0xff]
    %v459 = vld [vmem:[#allocation10 + $0xd8] sm:$0xff]
    %v460 = vld [vmem:[#allocation10 + $0xe0] sm:$0xff]
    %v461 = vld [vmem:[#allocation10 + $0xe8] sm:$0xff]
    %v462 = vld [vmem:[#allocation10 + $0xf0] sm:$0xff]
    %v463 = vld [vmem:[#allocation10 + $0xf8] sm:$0xff]
    %v496 = vunpack.c.l.b16 %v432
    %v497 = vunpack.c.h.b16 %v432
    %v498 = vunpack.c.l.b16 %v433
    %v499 = vunpack.c.h.b16 %v433
    %v500 = vunpack.c.l.b16 %v434
    %v501 = vunpack.c.h.b16 %v434
    %v502 = vunpack.c.l.b16 %v435
    %v503 = vunpack.c.h.b16 %v435
    %v504 = vunpack.c.l.b16 %v436
    %v505 = vunpack.c.h.b16 %v436
    %v506 = vunpack.c.l.b16 %v437
    %v507 = vunpack.c.h.b16 %v437
    %v508 = vunpack.c.l.b16 %v438
    %v509 = vunpack.c.h.b16 %v438
    %v510 = vunpack.c.l.b16 %v439
    %v511 = vunpack.c.h.b16 %v439
    %v512 = vunpack.c.l.b16 %v440
    %v513 = vunpack.c.h.b16 %v440
    %v514 = vunpack.c.l.b16 %v441
    %v515 = vunpack.c.h.b16 %v441
    %v516 = vunpack.c.l.b16 %v442
    %v517 = vunpack.c.h.b16 %v442
    %v518 = vunpack.c.l.b16 %v443
    %v519 = vunpack.c.h.b16 %v443
    %v520 = vunpack.c.l.b16 %v444
    %v521 = vunpack.c.h.b16 %v444
    %v522 = vunpack.c.l.b16 %v445
    %v523 = vunpack.c.h.b16 %v445
    %v524 = vunpack.c.l.b16 %v446
    %v525 = vunpack.c.h.b16 %v446
    %v526 = vunpack.c.l.b16 %v447
    %v527 = vunpack.c.h.b16 %v447
    %v528 = vunpack.c.l.b16 %v448
    %v529 = vunpack.c.h.b16 %v448
    %v530 = vunpack.c.l.b16 %v449
    %v531 = vunpack.c.h.b16 %v449
    %v532 = vunpack.c.l.b16 %v450
    %v533 = vunpack.c.h.b16 %v450
    %v534 = vunpack.c.l.b16 %v451
    %v535 = vunpack.c.h.b16 %v451
    %v536 = vunpack.c.l.b16 %v452
    %v537 = vunpack.c.h.b16 %v452
    %v538 = vunpack.c.l.b16 %v453
    %v539 = vunpack.c.h.b16 %v453
    %v540 = vunpack.c.l.b16 %v454
    %v541 = vunpack.c.h.b16 %v454
    %v542 = vunpack.c.l.b16 %v455
    %v543 = vunpack.c.h.b16 %v455
    %v544 = vunpack.c.l.b16 %v456
    %v545 = vunpack.c.h.b16 %v456
    %v546 = vunpack.c.l.b16 %v457
    %v547 = vunpack.c.h.b16 %v457
    %v548 = vunpack.c.l.b16 %v458
    %v549 = vunpack.c.h.b16 %v458
    %v550 = vunpack.c.l.b16 %v459
    %v551 = vunpack.c.h.b16 %v459
    %v552 = vunpack.c.l.b16 %v460
    %v553 = vunpack.c.h.b16 %v460
    %v554 = vunpack.c.l.b16 %v461
    %v555 = vunpack.c.h.b16 %v461
    %v556 = vunpack.c.l.b16 %v462
    %v557 = vunpack.c.h.b16 %v462
    %v558 = vunpack.c.l.b16 %v463
    %v559 = vunpack.c.h.b16 %v463
    %v560 = vpack.c.b16 %v500, %v496
    %v561 = vpack.c.b16 %v501, %v497
    %v562 = vpack.c.b16 %v502, %v498
    %v563 = vpack.c.b16 %v503, %v499
    %v564 = vpack.c.b16 %v508, %v504
    %v565 = vpack.c.b16 %v509, %v505
    %v566 = vpack.c.b16 %v510, %v506
    %v567 = vpack.c.b16 %v511, %v507
    %v568 = vpack.c.b16 %v516, %v512
    %v569 = vpack.c.b16 %v517, %v513
    %v570 = vpack.c.b16 %v518, %v514
    %v571 = vpack.c.b16 %v519, %v515
    %v572 = vpack.c.b16 %v524, %v520
    %v573 = vpack.c.b16 %v525, %v521
    %v574 = vpack.c.b16 %v526, %v522
    %v575 = vpack.c.b16 %v527, %v523
    %v576 = vpack.c.b16 %v532, %v528
    %v577 = vpack.c.b16 %v533, %v529
    %v578 = vpack.c.b16 %v534, %v530
    %v579 = vpack.c.b16 %v535, %v531
    %v580 = vpack.c.b16 %v540, %v536
    %v581 = vpack.c.b16 %v541, %v537
    %v582 = vpack.c.b16 %v542, %v538
    %v583 = vpack.c.b16 %v543, %v539
    %v584 = vpack.c.b16 %v548, %v544
    %v585 = vpack.c.b16 %v549, %v545
    %v586 = vpack.c.b16 %v550, %v546
    %v587 = vpack.c.b16 %v551, %v547
    %v588 = vpack.c.b16 %v556, %v552
    %v589 = vpack.c.b16 %v557, %v553
    %v590 = vpack.c.b16 %v558, %v554
    %v591 = vpack.c.b16 %v559, %v555
    %624 = vmatpush.bf16.msra.mxu0 %v588
    %625 = vmatpush.bf16.msra.mxu0 %v584
    %626 = vmatpush.bf16.msra.mxu0 %v580
    %627 = vmatpush.bf16.msra.mxu0 %v576
    %628 = vmatpush.bf16.msra.mxu0 %v572
    %629 = vmatpush.bf16.msra.mxu0 %v568
    %630 = vmatpush.bf16.msra.mxu0 %v564
    %631 = vmatpush.bf16.msra.mxu0 %v560
    %632 = vmatmul.bf16.gmra.mxu0 0
    %v633 = vpop.f32.mrf.mxu0
    %v634 = vadd.f32 0.0, %v633
    %v635 = vpop.f32.mrf.mxu0
    %636 = vdwg.mxu0
    %637 = vmatpush.bf16.msra.mxu0 %v589
    %638 = vmatpush.bf16.msra.mxu0 %v585
    %639 = vmatpush.bf16.msra.mxu0 %v581
    %640 = vmatpush.bf16.msra.mxu0 %v577
    %641 = vmatpush.bf16.msra.mxu0 %v573
    %642 = vmatpush.bf16.msra.mxu0 %v569
    %643 = vmatpush.bf16.msra.mxu0 %v565
    %644 = vmatpush.bf16.msra.mxu0 %v561
    %645 = vmatmul.bf16.gmra.mxu0 0
    %v646 = vpop.f32.mrf.mxu0
    %v647 = vadd.f32 0.0, %v646
    %v648 = vpop.f32.mrf.mxu0
    %649 = vdwg.mxu0
    %650 = vmatpush.bf16.msra.mxu0 %v590
    %651 = vmatpush.bf16.msra.mxu0 %v586
    %652 = vmatpush.bf16.msra.mxu0 %v582
    %653 = vmatpush.bf16.msra.mxu0 %v578
    %654 = vmatpush.bf16.msra.mxu0 %v574
    %655 = vmatpush.bf16.msra.mxu0 %v570
    %656 = vmatpush.bf16.msra.mxu0 %v566
    %657 = vmatpush.bf16.msra.mxu0 %v562
    %658 = vmatmul.bf16.gmra.mxu0 0
    %v659 = vpop.f32.mrf.mxu0
    %v660 = vadd.f32 0.0, %v659
    %v661 = vpop.f32.mrf.mxu0
    %662 = vdwg.mxu0
    %663 = vmatpush.bf16.msra.mxu0 %v591
    %664 = vmatpush.bf16.msra.mxu0 %v587
    %665 = vmatpush.bf16.msra.mxu0 %v583
    %666 = vmatpush.bf16.msra.mxu0 %v579
    %667 = vmatpush.bf16.msra.mxu0 %v575
    %668 = vmatpush.bf16.msra.mxu0 %v571
    %669 = vmatpush.bf16.msra.mxu0 %v567
    %670 = vmatpush.bf16.msra.mxu0 %v563
    %671 = vmatmul.bf16.gmra.mxu0 0
    %v672 = vpop.f32.mrf.mxu0
    %v673 = vadd.f32 0.0, %v672
    %v674 = vpop.f32.mrf.mxu0
    %675 = vdwg.mxu0
    %v676 = vadd.f32 %v428, %v634
    %v677 = vadd.f32 %v429, %v647
    %v678 = vadd.f32 %v430, %v660
    %v679 = vadd.f32 %v431, %v673
    %v680 = vmul.f32 %v676, 0.5
    %v681 = vtanh.pop %v680
    %v682 = vadd.f32 %v681, 1.0
    %v683 = vmul.f32 %v682, 0.5
    %v684 = vmul.f32 %v677, 0.5
    %v685 = vtanh.pop %v684
    %v686 = vadd.f32 %v685, 1.0
    %v687 = vmul.f32 %v686, 0.5
    %v688 = vtanh.pop %v678
    %v689 = vmul.f32 %v679, 0.5
    %v690 = vtanh.pop %v689
    %v691 = vadd.f32 %v690, 1.0
    %v692 = vmul.f32 %v691, 0.5
    %v693 = vmul.f32 %v687, 0.0
    %v694 = vmul.f32 %v683, %v688
    %v695 = vadd.f32 %v693, %v694
    %v696 = vtanh.pop %v695
    %v697 = vmul.f32 %v692, %v696
    %v698 = vpack.c.bf16 %v697, %v697
    %v699 = vld [vmem:[#allocation4] sm:$0xff]
    %v700 = vld [vmem:[#allocation4 + $0x8] sm:$0xff]
    %v701 = vld [vmem:[#allocation4 + $0x10] sm:$0xff]
    %v702 = vld [vmem:[#allocation4 + $0x18] sm:$0xff]
    %v703 = vld [vmem:[#allocation4 + $0x20] sm:$0xff]
    %v704 = vld [vmem:[#allocation4 + $0x28] sm:$0xff]
    %v705 = vld [vmem:[#allocation4 + $0x30] sm:$0xff]
    %v706 = vld [vmem:[#allocation4 + $0x38] sm:$0xff]
    %v707 = vld [vmem:[#allocation4 + $0x40] sm:$0xff]
    %v708 = vld [vmem:[#allocation4 + $0x48] sm:$0xff]
    %v709 = vld [vmem:[#allocation4 + $0x50] sm:$0xff]
    %v710 = vld [vmem:[#allocation4 + $0x58] sm:$0xff]
    %v711 = vld [vmem:[#allocation4 + $0x60] sm:$0xff]
    %v712 = vld [vmem:[#allocation4 + $0x68] sm:$0xff]
    %v713 = vld [vmem:[#allocation4 + $0x70] sm:$0xff]
    %v714 = vld [vmem:[#allocation4 + $0x78] sm:$0xff]
    %v715 = vld [vmem:[#allocation4 + $0x80] sm:$0xff]
    %v716 = vld [vmem:[#allocation4 + $0x88] sm:$0xff]
    %v717 = vld [vmem:[#allocation4 + $0x90] sm:$0xff]
    %v718 = vld [vmem:[#allocation4 + $0x98] sm:$0xff]
    %v719 = vld [vmem:[#allocation4 + $0xa0] sm:$0xff]
    %v720 = vld [vmem:[#allocation4 + $0xa8] sm:$0xff]
    %v721 = vld [vmem:[#allocation4 + $0xb0] sm:$0xff]
    %v722 = vld [vmem:[#allocation4 + $0xb8] sm:$0xff]
    %v723 = vld [vmem:[#allocation4 + $0xc0] sm:$0xff]
    %v724 = vld [vmem:[#allocation4 + $0xc8] sm:$0xff]
    %v725 = vld [vmem:[#allocation4 + $0xd0] sm:$0xff]
    %v726 = vld [vmem:[#allocation4 + $0xd8] sm:$0xff]
    %v727 = vld [vmem:[#allocation4 + $0xe0] sm:$0xff]
    %v728 = vld [vmem:[#allocation4 + $0xe8] sm:$0xff]
    %v729 = vld [vmem:[#allocation4 + $0xf0] sm:$0xff]
    %v730 = vld [vmem:[#allocation4 + $0xf8] sm:$0xff]
    %v763 = vunpack.c.l.b16 %v699
    %v764 = vunpack.c.h.b16 %v699
    %v765 = vunpack.c.l.b16 %v700
    %v766 = vunpack.c.h.b16 %v700
    %v767 = vunpack.c.l.b16 %v701
    %v768 = vunpack.c.h.b16 %v701
    %v769 = vunpack.c.l.b16 %v702
    %v770 = vunpack.c.h.b16 %v702
    %v771 = vunpack.c.l.b16 %v703
    %v772 = vunpack.c.h.b16 %v703
    %v773 = vunpack.c.l.b16 %v704
    %v774 = vunpack.c.h.b16 %v704
    %v775 = vunpack.c.l.b16 %v705
    %v776 = vunpack.c.h.b16 %v705
    %v777 = vunpack.c.l.b16 %v706
    %v778 = vunpack.c.h.b16 %v706
    %v779 = vunpack.c.l.b16 %v707
    %v780 = vunpack.c.h.b16 %v707
    %v781 = vunpack.c.l.b16 %v708
    %v782 = vunpack.c.h.b16 %v708
    %v783 = vunpack.c.l.b16 %v709
    %v784 = vunpack.c.h.b16 %v709
    %v785 = vunpack.c.l.b16 %v710
    %v786 = vunpack.c.h.b16 %v710
    %v787 = vunpack.c.l.b16 %v711
    %v788 = vunpack.c.h.b16 %v711
    %v789 = vunpack.c.l.b16 %v712
    %v790 = vunpack.c.h.b16 %v712
    %v791 = vunpack.c.l.b16 %v713
    %v792 = vunpack.c.h.b16 %v713
    %v793 = vunpack.c.l.b16 %v714
    %v794 = vunpack.c.h.b16 %v714
    %v795 = vunpack.c.l.b16 %v715
    %v796 = vunpack.c.h.b16 %v715
    %v797 = vunpack.c.l.b16 %v716
    %v798 = vunpack.c.h.b16 %v716
    %v799 = vunpack.c.l.b16 %v717
    %v800 = vunpack.c.h.b16 %v717
    %v801 = vunpack.c.l.b16 %v718
    %v802 = vunpack.c.h.b16 %v718
    %v803 = vunpack.c.l.b16 %v719
    %v804 = vunpack.c.h.b16 %v719
    %v805 = vunpack.c.l.b16 %v720
    %v806 = vunpack.c.h.b16 %v720
    %v807 = vunpack.c.l.b16 %v721
    %v808 = vunpack.c.h.b16 %v721
    %v809 = vunpack.c.l.b16 %v722
    %v810 = vunpack.c.h.b16 %v722
    %v811 = vunpack.c.l.b16 %v723
    %v812 = vunpack.c.h.b16 %v723
    %v813 = vunpack.c.l.b16 %v724
    %v814 = vunpack.c.h.b16 %v724
    %v815 = vunpack.c.l.b16 %v725
    %v816 = vunpack.c.h.b16 %v725
    %v817 = vunpack.c.l.b16 %v726
    %v818 = vunpack.c.h.b16 %v726
    %v819 = vunpack.c.l.b16 %v727
    %v820 = vunpack.c.h.b16 %v727
    %v821 = vunpack.c.l.b16 %v728
    %v822 = vunpack.c.h.b16 %v728
    %v823 = vunpack.c.l.b16 %v729
    %v824 = vunpack.c.h.b16 %v729
    %v825 = vunpack.c.l.b16 %v730
    %v826 = vunpack.c.h.b16 %v730
    %v827 = vpack.c.b16 %v767, %v763
    %v828 = vpack.c.b16 %v768, %v764
    %v829 = vpack.c.b16 %v769, %v765
    %v830 = vpack.c.b16 %v770, %v766
    %v831 = vpack.c.b16 %v775, %v771
    %v832 = vpack.c.b16 %v776, %v772
    %v833 = vpack.c.b16 %v777, %v773
    %v834 = vpack.c.b16 %v778, %v774
    %v835 = vpack.c.b16 %v783, %v779
    %v836 = vpack.c.b16 %v784, %v780
    %v837 = vpack.c.b16 %v785, %v781
    %v838 = vpack.c.b16 %v786, %v782
    %v839 = vpack.c.b16 %v791, %v787
    %v840 = vpack.c.b16 %v792, %v788
    %v841 = vpack.c.b16 %v793, %v789
    %v842 = vpack.c.b16 %v794, %v790
    %v843 = vpack.c.b16 %v799, %v795
    %v844 = vpack.c.b16 %v800, %v796
    %v845 = vpack.c.b16 %v801, %v797
    %v846 = vpack.c.b16 %v802, %v798
    %v847 = vpack.c.b16 %v807, %v803
    %v848 = vpack.c.b16 %v808, %v804
    %v849 = vpack.c.b16 %v809, %v805
    %v850 = vpack.c.b16 %v810, %v806
    %v851 = vpack.c.b16 %v815, %v811
    %v852 = vpack.c.b16 %v816, %v812
    %v853 = vpack.c.b16 %v817, %v813
    %v854 = vpack.c.b16 %v818, %v814
    %v855 = vpack.c.b16 %v823, %v819
    %v856 = vpack.c.b16 %v824, %v820
    %v857 = vpack.c.b16 %v825, %v821
    %v858 = vpack.c.b16 %v826, %v822
    %891 = vmatpush.bf16.msra.mxu0 %v855
    %892 = vmatpush.bf16.msra.mxu0 %v851
    %893 = vmatpush.bf16.msra.mxu0 %v847
    %894 = vmatpush.bf16.msra.mxu0 %v843
    %895 = vmatpush.bf16.msra.mxu0 %v839
    %896 = vmatpush.bf16.msra.mxu0 %v835
    %897 = vmatpush.bf16.msra.mxu0 %v831
    %898 = vmatpush.bf16.msra.mxu0 %v827
    %899 = vmatmul.bf16.gmra.mxu0 %v698
    %v900 = vpop.f32.mrf.mxu0
    %v901 = vadd.f32 %v420, %v900
    %v902 = vpop.f32.mrf.mxu0
    %903 = vdwg.mxu0
    %904 = vmatpush.bf16.msra.mxu0 %v856
    %905 = vmatpush.bf16.msra.mxu0 %v852
    %906 = vmatpush.bf16.msra.mxu0 %v848
    %907 = vmatpush.bf16.msra.mxu0 %v844
    %908 = vmatpush.bf16.msra.mxu0 %v840
    %909 = vmatpush.bf16.msra.mxu0 %v836
    %910 = vmatpush.bf16.msra.mxu0 %v832
    %911 = vmatpush.bf16.msra.mxu0 %v828
    %912 = vmatmul.bf16.gmra.mxu0 %v698
    %v913 = vpop.f32.mrf.mxu0
    %v914 = vadd.f32 %v421, %v913
    %v915 = vpop.f32.mrf.mxu0
    %916 = vdwg.mxu0
    %917 = vmatpush.bf16.msra.mxu0 %v857
    %918 = vmatpush.bf16.msra.mxu0 %v853
    %919 = vmatpush.bf16.msra.mxu0 %v849
    %920 = vmatpush.bf16.msra.mxu0 %v845
    %921 = vmatpush.bf16.msra.mxu0 %v841
    %922 = vmatpush.bf16.msra.mxu0 %v837
    %923 = vmatpush.bf16.msra.mxu0 %v833
    %924 = vmatpush.bf16.msra.mxu0 %v829
    %925 = vmatmul.bf16.gmra.mxu0 %v698
    %v926 = vpop.f32.mrf.mxu0
    %v927 = vadd.f32 %v422, %v926
    %v928 = vpop.f32.mrf.mxu0
    %929 = vdwg.mxu0
    %930 = vmatpush.bf16.msra.mxu0 %v858
    %931 = vmatpush.bf16.msra.mxu0 %v854
    %932 = vmatpush.bf16.msra.mxu0 %v850
    %933 = vmatpush.bf16.msra.mxu0 %v846
    %934 = vmatpush.bf16.msra.mxu0 %v842
    %935 = vmatpush.bf16.msra.mxu0 %v838
    %936 = vmatpush.bf16.msra.mxu0 %v834
    %937 = vmatpush.bf16.msra.mxu0 %v830
    %938 = vmatmul.bf16.gmra.mxu0 %v698
    %v939 = vpop.f32.mrf.mxu0
    %v940 = vadd.f32 %v423, %v939
    %v941 = vpop.f32.mrf.mxu0
    %942 = vdwg.mxu0
    %943 = vst [vmem:[#allocation3] sm:$0xff] %v901
    %944 = vst [vmem:[#allocation3 + $0x8] sm:$0xff] %v914
    %945 = vst [vmem:[#allocation3 + $0x10] sm:$0xff] %v927
    %946 = vst [vmem:[#allocation3 + $0x18] sm:$0xff] %v940
    %v947 = vld [vmem:[#allocation2 + $0x20] sm:$0xff]
    %v948 = vld [vmem:[#allocation2 + $0x28] sm:$0xff]
    %v949 = vld [vmem:[#allocation2 + $0x30] sm:$0xff]
    %v950 = vld [vmem:[#allocation2 + $0x38] sm:$0xff]
    %v951 = vld [vmem:[#allocation10] sm:$0xff]
    %v952 = vld [vmem:[#allocation10 + $0x8] sm:$0xff]
    %v953 = vld [vmem:[#allocation10 + $0x10] sm:$0xff]
    %v954 = vld [vmem:[#allocation10 + $0x18] sm:$0xff]
    %v955 = vld [vmem:[#allocation10 + $0x20] sm:$0xff]
    %v956 = vld [vmem:[#allocation10 + $0x28] sm:$0xff]
    %v957 = vld [vmem:[#allocation10 + $0x30] sm:$0xff]
    %v958 = vld [vmem:[#allocation10 + $0x38] sm:$0xff]
    %v959 = vld [vmem:[#allocation10 + $0x40] sm:$0xff]
    %v960 = vld [vmem:[#allocation10 + $0x48] sm:$0xff]
    %v961 = vld [vmem:[#allocation10 + $0x50] sm:$0xff]
    %v962 = vld [vmem:[#allocation10 + $0x58] sm:$0xff]
    %v963 = vld [vmem:[#allocation10 + $0x60] sm:$0xff]
    %v964 = vld [vmem:[#allocation10 + $0x68] sm:$0xff]
    %v965 = vld [vmem:[#allocation10 + $0x70] sm:$0xff]
    %v966 = vld [vmem:[#allocation10 + $0x78] sm:$0xff]
    %v967 = vld [vmem:[#allocation10 + $0x80] sm:$0xff]
    %v968 = vld [vmem:[#allocation10 + $0x88] sm:$0xff]
    %v969 = vld [vmem:[#allocation10 + $0x90] sm:$0xff]
    %v970 = vld [vmem:[#allocation10 + $0x98] sm:$0xff]
    %v971 = vld [vmem:[#allocation10 + $0xa0] sm:$0xff]
    %v972 = vld [vmem:[#allocation10 + $0xa8] sm:$0xff]
    %v973 = vld [vmem:[#allocation10 + $0xb0] sm:$0xff]
    %v974 = vld [vmem:[#allocation10 + $0xb8] sm:$0xff]
    %v975 = vld [vmem:[#allocation10 + $0xc0] sm:$0xff]
    %v976 = vld [vmem:[#allocation10 + $0xc8] sm:$0xff]
    %v977 = vld [vmem:[#allocation10 + $0xd0] sm:$0xff]
    %v978 = vld [vmem:[#allocation10 + $0xd8] sm:$0xff]
    %v979 = vld [vmem:[#allocation10 + $0xe0] sm:$0xff]
    %v980 = vld [vmem:[#allocation10 + $0xe8] sm:$0xff]
    %v981 = vld [vmem:[#allocation10 + $0xf0] sm:$0xff]
    %v982 = vld [vmem:[#allocation10 + $0xf8] sm:$0xff]
    %v1015 = vunpack.c.l.b16 %v951
    %v1016 = vunpack.c.h.b16 %v951
    %v1017 = vunpack.c.l.b16 %v952
    %v1018 = vunpack.c.h.b16 %v952
    %v1019 = vunpack.c.l.b16 %v953
    %v1020 = vunpack.c.h.b16 %v953
    %v1021 = vunpack.c.l.b16 %v954
    %v1022 = vunpack.c.h.b16 %v954
    %v1023 = vunpack.c.l.b16 %v955
    %v1024 = vunpack.c.h.b16 %v955
    %v1025 = vunpack.c.l.b16 %v956
    %v1026 = vunpack.c.h.b16 %v956
    %v1027 = vunpack.c.l.b16 %v957
    %v1028 = vunpack.c.h.b16 %v957
    %v1029 = vunpack.c.l.b16 %v958
    %v1030 = vunpack.c.h.b16 %v958
    %v1031 = vunpack.c.l.b16 %v959
    %v1032 = vunpack.c.h.b16 %v959
    %v1033 = vunpack.c.l.b16 %v960
    %v1034 = vunpack.c.h.b16 %v960
    %v1035 = vunpack.c.l.b16 %v961
    %v1036 = vunpack.c.h.b16 %v961
    %v1037 = vunpack.c.l.b16 %v962
    %v1038 = vunpack.c.h.b16 %v962
    %v1039 = vunpack.c.l.b16 %v963
    %v1040 = vunpack.c.h.b16 %v963
    %v1041 = vunpack.c.l.b16 %v964
    %v1042 = vunpack.c.h.b16 %v964
    %v1043 = vunpack.c.l.b16 %v965
    %v1044 = vunpack.c.h.b16 %v965
    %v1045 = vunpack.c.l.b16 %v966
    %v1046 = vunpack.c.h.b16 %v966
    %v1047 = vunpack.c.l.b16 %v967
    %v1048 = vunpack.c.h.b16 %v967
    %v1049 = vunpack.c.l.b16 %v968
    %v1050 = vunpack.c.h.b16 %v968
    %v1051 = vunpack.c.l.b16 %v969
    %v1052 = vunpack.c.h.b16 %v969
    %v1053 = vunpack.c.l.b16 %v970
    %v1054 = vunpack.c.h.b16 %v970
    %v1055 = vunpack.c.l.b16 %v971
    %v1056 = vunpack.c.h.b16 %v971
    %v1057 = vunpack.c.l.b16 %v972
    %v1058 = vunpack.c.h.b16 %v972
    %v1059 = vunpack.c.l.b16 %v973
    %v1060 = vunpack.c.h.b16 %v973
    %v1061 = vunpack.c.l.b16 %v974
    %v1062 = vunpack.c.h.b16 %v974
    %v1063 = vunpack.c.l.b16 %v975
    %v1064 = vunpack.c.h.b16 %v975
    %v1065 = vunpack.c.l.b16 %v976
    %v1066 = vunpack.c.h.b16 %v976
    %v1067 = vunpack.c.l.b16 %v977
    %v1068 = vunpack.c.h.b16 %v977
    %v1069 = vunpack.c.l.b16 %v978
    %v1070 = vunpack.c.h.b16 %v978
    %v1071 = vunpack.c.l.b16 %v979
    %v1072 = vunpack.c.h.b16 %v979
    %v1073 = vunpack.c.l.b16 %v980
    %v1074 = vunpack.c.h.b16 %v980
    %v1075 = vunpack.c.l.b16 %v981
    %v1076 = vunpack.c.h.b16 %v981
    %v1077 = vunpack.c.l.b16 %v982
    %v1078 = vunpack.c.h.b16 %v982
    %v1079 = vpack.c.b16 %v1019, %v1015
    %v1080 = vpack.c.b16 %v1020, %v1016
    %v1081 = vpack.c.b16 %v1021, %v1017
    %v1082 = vpack.c.b16 %v1022, %v1018
    %v1083 = vpack.c.b16 %v1027, %v1023
    %v1084 = vpack.c.b16 %v1028, %v1024
    %v1085 = vpack.c.b16 %v1029, %v1025
    %v1086 = vpack.c.b16 %v1030, %v1026
    %v1087 = vpack.c.b16 %v1035, %v1031
    %v1088 = vpack.c.b16 %v1036, %v1032
    %v1089 = vpack.c.b16 %v1037, %v1033
    %v1090 = vpack.c.b16 %v1038, %v1034
    %v1091 = vpack.c.b16 %v1043, %v1039
    %v1092 = vpack.c.b16 %v1044, %v1040
    %v1093 = vpack.c.b16 %v1045, %v1041
    %v1094 = vpack.c.b16 %v1046, %v1042
    %v1095 = vpack.c.b16 %v1051, %v1047
    %v1096 = vpack.c.b16 %v1052, %v1048
    %v1097 = vpack.c.b16 %v1053, %v1049
    %v1098 = vpack.c.b16 %v1054, %v1050
    %v1099 = vpack.c.b16 %v1059, %v1055
    %v1100 = vpack.c.b16 %v1060, %v1056
    %v1101 = vpack.c.b16 %v1061, %v1057
    %v1102 = vpack.c.b16 %v1062, %v1058
    %v1103 = vpack.c.b16 %v1067, %v1063
    %v1104 = vpack.c.b16 %v1068, %v1064
    %v1105 = vpack.c.b16 %v1069, %v1065
    %v1106 = vpack.c.b16 %v1070, %v1066
    %v1107 = vpack.c.b16 %v1075, %v1071
    %v1108 = vpack.c.b16 %v1076, %v1072
    %v1109 = vpack.c.b16 %v1077, %v1073
    %v1110 = vpack.c.b16 %v1078, %v1074
    %1143 = vmatpush.bf16.msra.mxu0 %v1107
    %1144 = vmatpush.bf16.msra.mxu0 %v1103
    %1145 = vmatpush.bf16.msra.mxu0 %v1099
    %1146 = vmatpush.bf16.msra.mxu0 %v1095
    %1147 = vmatpush.bf16.msra.mxu0 %v1091
    %1148 = vmatpush.bf16.msra.mxu0 %v1087
    %1149 = vmatpush.bf16.msra.mxu0 %v1083
    %1150 = vmatpush.bf16.msra.mxu0 %v1079
    %1151 = vmatmul.bf16.gmra.mxu0 %v698
    %v1152 = vpop.f32.mrf.mxu0
    %v1153 = vadd.f32 0.0, %v1152
    %v1154 = vpop.f32.mrf.mxu0
    %1155 = vdwg.mxu0
    %1156 = vmatpush.bf16.msra.mxu0 %v1108
    %1157 = vmatpush.bf16.msra.mxu0 %v1104
    %1158 = vmatpush.bf16.msra.mxu0 %v1100
    %1159 = vmatpush.bf16.msra.mxu0 %v1096
    %1160 = vmatpush.bf16.msra.mxu0 %v1092
    %1161 = vmatpush.bf16.msra.mxu0 %v1088
    %1162 = vmatpush.bf16.msra.mxu0 %v1084
    %1163 = vmatpush.bf16.msra.mxu0 %v1080
    %1164 = vmatmul.bf16.gmra.mxu0 %v698
    %v1165 = vpop.f32.mrf.mxu0
    %v1166 = vadd.f32 0.0, %v1165
    %v1167 = vpop.f32.mrf.mxu0
    %1168 = vdwg.mxu0
    %1169 = vmatpush.bf16.msra.mxu0 %v1109
    %1170 = vmatpush.bf16.msra.mxu0 %v1105
    %1171 = vmatpush.bf16.msra.mxu0 %v1101
    %1172 = vmatpush.bf16.msra.mxu0 %v1097
    %1173 = vmatpush.bf16.msra.mxu0 %v1093
    %1174 = vmatpush.bf16.msra.mxu0 %v1089
    %1175 = vmatpush.bf16.msra.mxu0 %v1085
    %1176 = vmatpush.bf16.msra.mxu0 %v1081
    %1177 = vmatmul.bf16.gmra.mxu0 %v698
    %v1178 = vpop.f32.mrf.mxu0
    %v1179 = vadd.f32 0.0, %v1178
    %v1180 = vpop.f32.mrf.mxu0
    %1181 = vdwg.mxu0
    %1182 = vmatpush.bf16.msra.mxu0 %v1110
    %1183 = vmatpush.bf16.msra.mxu0 %v1106
    %1184 = vmatpush.bf16.msra.mxu0 %v1102
    %1185 = vmatpush.bf16.msra.mxu0 %v1098
    %1186 = vmatpush.bf16.msra.mxu0 %v1094
    %1187 = vmatpush.bf16.msra.mxu0 %v1090
    %1188 = vmatpush.bf16.msra.mxu0 %v1086
    %1189 = vmatpush.bf16.msra.mxu0 %v1082
    %1190 = vmatmul.bf16.gmra.mxu0 %v698
    %v1191 = vpop.f32.mrf.mxu0
    %v1192 = vadd.f32 0.0, %v1191
    %v1193 = vpop.f32.mrf.mxu0
    %1194 = vdwg.mxu0
    %v1195 = vadd.f32 %v947, %v1153
    %v1196 = vadd.f32 %v948, %v1166
    %v1197 = vadd.f32 %v949, %v1179
    %v1198 = vadd.f32 %v950, %v1192
    %v1199 = vmul.f32 %v1195, 0.5
    %v1200 = vtanh.pop %v1199
    %v1201 = vadd.f32 %v1200, 1.0
    %v1202 = vmul.f32 %v1201, 0.5
    %v1203 = vmul.f32 %v1196, 0.5
    %v1204 = vtanh.pop %v1203
    %v1205 = vadd.f32 %v1204, 1.0
    %v1206 = vmul.f32 %v1205, 0.5
    %v1207 = vtanh.pop %v1197
    %v1208 = vmul.f32 %v1198, 0.5
    %v1209 = vtanh.pop %v1208
    %v1210 = vadd.f32 %v1209, 1.0
    %v1211 = vmul.f32 %v1210, 0.5
    %v1212 = vmul.f32 %v1206, %v695
    %v1213 = vmul.f32 %v1202, %v1207
    %v1214 = vadd.f32 %v1212, %v1213
    %v1215 = vtanh.pop %v1214
    %v1216 = vmul.f32 %v1211, %v1215
    %v1217 = vpack.c.bf16 %v1216, %v1216
    %v1218 = vld [vmem:[#allocation4] sm:$0xff]
    %v1219 = vld [vmem:[#allocation4 + $0x8] sm:$0xff]
    %v1220 = vld [vmem:[#allocation4 + $0x10] sm:$0xff]
    %v1221 = vld [vmem:[#allocation4 + $0x18] sm:$0xff]
    %v1222 = vld [vmem:[#allocation4 + $0x20] sm:$0xff]
    %v1223 = vld [vmem:[#allocation4 + $0x28] sm:$0xff]
    %v1224 = vld [vmem:[#allocation4 + $0x30] sm:$0xff]
    %v1225 = vld [vmem:[#allocation4 + $0x38] sm:$0xff]
    %v1226 = vld [vmem:[#allocation4 + $0x40] sm:$0xff]
    %v1227 = vld [vmem:[#allocation4 + $0x48] sm:$0xff]
    %v1228 = vld [vmem:[#allocation4 + $0x50] sm:$0xff]
    %v1229 = vld [vmem:[#allocation4 + $0x58] sm:$0xff]
    %v1230 = vld [vmem:[#allocation4 + $0x60] sm:$0xff]
    %v1231 = vld [vmem:[#allocation4 + $0x68] sm:$0xff]
    %v1232 = vld [vmem:[#allocation4 + $0x70] sm:$0xff]
    %v1233 = vld [vmem:[#allocation4 + $0x78] sm:$0xff]
    %v1234 = vld [vmem:[#allocation4 + $0x80] sm:$0xff]
    %v1235 = vld [vmem:[#allocation4 + $0x88] sm:$0xff]
    %v1236 = vld [vmem:[#allocation4 + $0x90] sm:$0xff]
    %v1237 = vld [vmem:[#allocation4 + $0x98] sm:$0xff]
    %v1238 = vld [vmem:[#allocation4 + $0xa0] sm:$0xff]
    %v1239 = vld [vmem:[#allocation4 + $0xa8] sm:$0xff]
    %v1240 = vld [vmem:[#allocation4 + $0xb0] sm:$0xff]
    %v1241 = vld [vmem:[#allocation4 + $0xb8] sm:$0xff]
    %v1242 = vld [vmem:[#allocation4 + $0xc0] sm:$0xff]
    %v1243 = vld [vmem:[#allocation4 + $0xc8] sm:$0xff]
    %v1244 = vld [vmem:[#allocation4 + $0xd0] sm:$0xff]
    %v1245 = vld [vmem:[#allocation4 + $0xd8] sm:$0xff]
    %v1246 = vld [vmem:[#allocation4 + $0xe0] sm:$0xff]
    %v1247 = vld [vmem:[#allocation4 + $0xe8] sm:$0xff]
    %v1248 = vld [vmem:[#allocation4 + $0xf0] sm:$0xff]
    %v1249 = vld [vmem:[#allocation4 + $0xf8] sm:$0xff]
    %v1282 = vunpack.c.l.b16 %v1218
    %v1283 = vunpack.c.h.b16 %v1218
    %v1284 = vunpack.c.l.b16 %v1219
    %v1285 = vunpack.c.h.b16 %v1219
    %v1286 = vunpack.c.l.b16 %v1220
    %v1287 = vunpack.c.h.b16 %v1220
    %v1288 = vunpack.c.l.b16 %v1221
    %v1289 = vunpack.c.h.b16 %v1221
    %v1290 = vunpack.c.l.b16 %v1222
    %v1291 = vunpack.c.h.b16 %v1222
    %v1292 = vunpack.c.l.b16 %v1223
    %v1293 = vunpack.c.h.b16 %v1223
    %v1294 = vunpack.c.l.b16 %v1224
    %v1295 = vunpack.c.h.b16 %v1224
    %v1296 = vunpack.c.l.b16 %v1225
    %v1297 = vunpack.c.h.b16 %v1225
    %v1298 = vunpack.c.l.b16 %v1226
    %v1299 = vunpack.c.h.b16 %v1226
    %v1300 = vunpack.c.l.b16 %v1227
    %v1301 = vunpack.c.h.b16 %v1227
    %v1302 = vunpack.c.l.b16 %v1228
    %v1303 = vunpack.c.h.b16 %v1228
    %v1304 = vunpack.c.l.b16 %v1229
    %v1305 = vunpack.c.h.b16 %v1229
    %v1306 = vunpack.c.l.b16 %v1230
    %v1307 = vunpack.c.h.b16 %v1230
    %v1308 = vunpack.c.l.b16 %v1231
    %v1309 = vunpack.c.h.b16 %v1231
    %v1310 = vunpack.c.l.b16 %v1232
    %v1311 = vunpack.c.h.b16 %v1232
    %v1312 = vunpack.c.l.b16 %v1233
    %v1313 = vunpack.c.h.b16 %v1233
    %v1314 = vunpack.c.l.b16 %v1234
    %v1315 = vunpack.c.h.b16 %v1234
    %v1316 = vunpack.c.l.b16 %v1235
    %v1317 = vunpack.c.h.b16 %v1235
    %v1318 = vunpack.c.l.b16 %v1236
    %v1319 = vunpack.c.h.b16 %v1236
    %v1320 = vunpack.c.l.b16 %v1237
    %v1321 = vunpack.c.h.b16 %v1237
    %v1322 = vunpack.c.l.b16 %v1238
    %v1323 = vunpack.c.h.b16 %v1238
    %v1324 = vunpack.c.l.b16 %v1239
    %v1325 = vunpack.c.h.b16 %v1239
    %v1326 = vunpack.c.l.b16 %v1240
    %v1327 = vunpack.c.h.b16 %v1240
    %v1328 = vunpack.c.l.b16 %v1241
    %v1329 = vunpack.c.h.b16 %v1241
    %v1330 = vunpack.c.l.b16 %v1242
    %v1331 = vunpack.c.h.b16 %v1242
    %v1332 = vunpack.c.l.b16 %v1243
    %v1333 = vunpack.c.h.b16 %v1243
    %v1334 = vunpack.c.l.b16 %v1244
    %v1335 = vunpack.c.h.b16 %v1244
    %v1336 = vunpack.c.l.b16 %v1245
    %v1337 = vunpack.c.h.b16 %v1245
    %v1338 = vunpack.c.l.b16 %v1246
    %v1339 = vunpack.c.h.b16 %v1246
    %v1340 = vunpack.c.l.b16 %v1247
    %v1341 = vunpack.c.h.b16 %v1247
    %v1342 = vunpack.c.l.b16 %v1248
    %v1343 = vunpack.c.h.b16 %v1248
    %v1344 = vunpack.c.l.b16 %v1249
    %v1345 = vunpack.c.h.b16 %v1249
    %v1346 = vpack.c.b16 %v1286, %v1282
    %v1347 = vpack.c.b16 %v1287, %v1283
    %v1348 = vpack.c.b16 %v1288, %v1284
    %v1349 = vpack.c.b16 %v1289, %v1285
    %v1350 = vpack.c.b16 %v1294, %v1290
    %v1351 = vpack.c.b16 %v1295, %v1291
    %v1352 = vpack.c.b16 %v1296, %v1292
    %v1353 = vpack.c.b16 %v1297, %v1293
    %v1354 = vpack.c.b16 %v1302, %v1298
    %v1355 = vpack.c.b16 %v1303, %v1299
    %v1356 = vpack.c.b16 %v1304, %v1300
    %v1357 = vpack.c.b16 %v1305, %v1301
    %v1358 = vpack.c.b16 %v1310, %v1306
    %v1359 = vpack.c.b16 %v1311, %v1307
    %v1360 = vpack.c.b16 %v1312, %v1308
    %v1361 = vpack.c.b16 %v1313, %v1309
    %v1362 = vpack.c.b16 %v1318, %v1314
    %v1363 = vpack.c.b16 %v1319, %v1315
    %v1364 = vpack.c.b16 %v1320, %v1316
    %v1365 = vpack.c.b16 %v1321, %v1317
    %v1366 = vpack.c.b16 %v1326, %v1322
    %v1367 = vpack.c.b16 %v1327, %v1323
    %v1368 = vpack.c.b16 %v1328, %v1324
    %v1369 = vpack.c.b16 %v1329, %v1325
    %v1370 = vpack.c.b16 %v1334, %v1330
    %v1371 = vpack.c.b16 %v1335, %v1331
    %v1372 = vpack.c.b16 %v1336, %v1332
    %v1373 = vpack.c.b16 %v1337, %v1333
    %v1374 = vpack.c.b16 %v1342, %v1338
    %v1375 = vpack.c.b16 %v1343, %v1339
    %v1376 = vpack.c.b16 %v1344, %v1340
    %v1377 = vpack.c.b16 %v1345, %v1341
    %1410 = vmatpush.bf16.msra.mxu0 %v1374
    %1411 = vmatpush.bf16.msra.mxu0 %v1370
    %1412 = vmatpush.bf16.msra.mxu0 %v1366
    %1413 = vmatpush.bf16.msra.mxu0 %v1362
    %1414 = vmatpush.bf16.msra.mxu0 %v1358
    %1415 = vmatpush.bf16.msra.mxu0 %v1354
    %1416 = vmatpush.bf16.msra.mxu0 %v1350
    %1417 = vmatpush.bf16.msra.mxu0 %v1346
    %1418 = vmatmul.bf16.gmra.mxu0 %v1217
    %v1419 = vpop.f32.mrf.mxu0
    %v1420 = vadd.f32 %v420, %v1419
    %v1421 = vpop.f32.mrf.mxu0
    %1422 = vdwg.mxu0
    %1423 = vmatpush.bf16.msra.mxu0 %v1375
    %1424 = vmatpush.bf16.msra.mxu0 %v1371
    %1425 = vmatpush.bf16.msra.mxu0 %v1367
    %1426 = vmatpush.bf16.msra.mxu0 %v1363
    %1427 = vmatpush.bf16.msra.mxu0 %v1359
    %1428 = vmatpush.bf16.msra.mxu0 %v1355
    %1429 = vmatpush.bf16.msra.mxu0 %v1351
    %1430 = vmatpush.bf16.msra.mxu0 %v1347
    %1431 = vmatmul.bf16.gmra.mxu0 %v1217
    %v1432 = vpop.f32.mrf.mxu0
    %v1433 = vadd.f32 %v421, %v1432
    %v1434 = vpop.f32.mrf.mxu0
    %1435 = vdwg.mxu0
    %1436 = vmatpush.bf16.msra.mxu0 %v1376
    %1437 = vmatpush.bf16.msra.mxu0 %v1372
    %1438 = vmatpush.bf16.msra.mxu0 %v1368
    %1439 = vmatpush.bf16.msra.mxu0 %v1364
    %1440 = vmatpush.bf16.msra.mxu0 %v1360
    %1441 = vmatpush.bf16.msra.mxu0 %v1356
    %1442 = vmatpush.bf16.msra.mxu0 %v1352
    %1443 = vmatpush.bf16.msra.mxu0 %v1348
    %1444 = vmatmul.bf16.gmra.mxu0 %v1217
    %v1445 = vpop.f32.mrf.mxu0
    %v1446 = vadd.f32 %v422, %v1445
    %v1447 = vpop.f32.mrf.mxu0
    %1448 = vdwg.mxu0
    %1449 = vmatpush.bf16.msra.mxu0 %v1377
    %1450 = vmatpush.bf16.msra.mxu0 %v1373
    %1451 = vmatpush.bf16.msra.mxu0 %v1369
    %1452 = vmatpush.bf16.msra.mxu0 %v1365
    %1453 = vmatpush.bf16.msra.mxu0 %v1361
    %1454 = vmatpush.bf16.msra.mxu0 %v1357
    %1455 = vmatpush.bf16.msra.mxu0 %v1353
    %1456 = vmatpush.bf16.msra.mxu0 %v1349
    %1457 = vmatmul.bf16.gmra.mxu0 %v1217
    %v1458 = vpop.f32.mrf.mxu0
    %v1459 = vadd.f32 %v423, %v1458
    %v1460 = vpop.f32.mrf.mxu0
    %1461 = vdwg.mxu0
    %1462 = vst [vmem:[#allocation3 + $0x20] sm:$0xff] %v1420
    %1463 = vst [vmem:[#allocation3 + $0x28] sm:$0xff] %v1433
    %1464 = vst [vmem:[#allocation3 + $0x30] sm:$0xff] %v1446
    %1465 = vst [vmem:[#allocation3 + $0x38] sm:$0xff] %v1459
    %v1466 = vld [vmem:[#allocation2 + $0x40] sm:$0xff]
    %v1467 = vld [vmem:[#allocation2 + $0x48] sm:$0xff]
    %v1468 = vld [vmem:[#allocation2 + $0x50] sm:$0xff]
    %v1469 = vld [vmem:[#allocation2 + $0x58] sm:$0xff]
    %v1470 = vld [vmem:[#allocation10] sm:$0xff]
    %v1471 = vld [vmem:[#allocation10 + $0x8] sm:$0xff]
    %v1472 = vld [vmem:[#allocation10 + $0x10] sm:$0xff]
    %v1473 = vld [vmem:[#allocation10 + $0x18] sm:$0xff]
    %v1474 = vld [vmem:[#allocation10 + $0x20] sm:$0xff]
    %v1475 = vld [vmem:[#allocation10 + $0x28] sm:$0xff]
    %v1476 = vld [vmem:[#allocation10 + $0x30] sm:$0xff]
    %v1477 = vld [vmem:[#allocation10 + $0x38] sm:$0xff]
    %v1478 = vld [vmem:[#allocation10 + $0x40] sm:$0xff]
    %v1479 = vld [vmem:[#allocation10 + $0x48] sm:$0xff]
    %v1480 = vld [vmem:[#allocation10 + $0x50] sm:$0xff]
    %v1481 = vld [vmem:[#allocation10 + $0x58] sm:$0xff]
    %v1482 = vld [vmem:[#allocation10 + $0x60] sm:$0xff]
    %v1483 = vld [vmem:[#allocation10 + $0x68] sm:$0xff]
    %v1484 = vld [vmem:[#allocation10 + $0x70] sm:$0xff]
    %v1485 = vld [vmem:[#allocation10 + $0x78] sm:$0xff]
    %v1486 = vld [vmem:[#allocation10 + $0x80] sm:$0xff]
    %v1487 = vld [vmem:[#allocation10 + $0x88] sm:$0xff]
    %v1488 = vld [vmem:[#allocation10 + $0x90] sm:$0xff]
    %v1489 = vld [vmem:[#allocation10 + $0x98] sm:$0xff]
    %v1490 = vld [vmem:[#allocation10 + $0xa0] sm:$0xff]
    %v1491 = vld [vmem:[#allocation10 + $0xa8] sm:$0xff]
    %v1492 = vld [vmem:[#allocation10 + $0xb0] sm:$0xff]
    %v1493 = vld [vmem:[#allocation10 + $0xb8] sm:$0xff]
    %v1494 = vld [vmem:[#allocation10 + $0xc0] sm:$0xff]
    %v1495 = vld [vmem:[#allocation10 + $0xc8] sm:$0xff]
    %v1496 = vld [vmem:[#allocation10 + $0xd0] sm:$0xff]
    %v1497 = vld [vmem:[#allocation10 + $0xd8] sm:$0xff]
    %v1498 = vld [vmem:[#allocation10 + $0xe0] sm:$0xff]
    %v1499 = vld [vmem:[#allocation10 + $0xe8] sm:$0xff]
    %v1500 = vld [vmem:[#allocation10 + $0xf0] sm:$0xff]
    %v1501 = vld [vmem:[#allocation10 + $0xf8] sm:$0xff]
    %v1534 = vunpack.c.l.b16 %v1470
    %v1535 = vunpack.c.h.b16 %v1470
    %v1536 = vunpack.c.l.b16 %v1471
    %v1537 = vunpack.c.h.b16 %v1471
    %v1538 = vunpack.c.l.b16 %v1472
    %v1539 = vunpack.c.h.b16 %v1472
    %v1540 = vunpack.c.l.b16 %v1473
    %v1541 = vunpack.c.h.b16 %v1473
    %v1542 = vunpack.c.l.b16 %v1474
    %v1543 = vunpack.c.h.b16 %v1474
    %v1544 = vunpack.c.l.b16 %v1475
    %v1545 = vunpack.c.h.b16 %v1475
    %v1546 = vunpack.c.l.b16 %v1476
    %v1547 = vunpack.c.h.b16 %v1476
    %v1548 = vunpack.c.l.b16 %v1477
    %v1549 = vunpack.c.h.b16 %v1477
    %v1550 = vunpack.c.l.b16 %v1478
    %v1551 = vunpack.c.h.b16 %v1478
    %v1552 = vunpack.c.l.b16 %v1479
    %v1553 = vunpack.c.h.b16 %v1479
    %v1554 = vunpack.c.l.b16 %v1480
    %v1555 = vunpack.c.h.b16 %v1480
    %v1556 = vunpack.c.l.b16 %v1481
    %v1557 = vunpack.c.h.b16 %v1481
    %v1558 = vunpack.c.l.b16 %v1482
    %v1559 = vunpack.c.h.b16 %v1482
    %v1560 = vunpack.c.l.b16 %v1483
    %v1561 = vunpack.c.h.b16 %v1483
    %v1562 = vunpack.c.l.b16 %v1484
    %v1563 = vunpack.c.h.b16 %v1484
    %v1564 = vunpack.c.l.b16 %v1485
    %v1565 = vunpack.c.h.b16 %v1485
    %v1566 = vunpack.c.l.b16 %v1486
    %v1567 = vunpack.c.h.b16 %v1486
    %v1568 = vunpack.c.l.b16 %v1487
    %v1569 = vunpack.c.h.b16 %v1487
    %v1570 = vunpack.c.l.b16 %v1488
    %v1571 = vunpack.c.h.b16 %v1488
    %v1572 = vunpack.c.l.b16 %v1489
    %v1573 = vunpack.c.h.b16 %v1489
    %v1574 = vunpack.c.l.b16 %v1490
    %v1575 = vunpack.c.h.b16 %v1490
    %v1576 = vunpack.c.l.b16 %v1491
    %v1577 = vunpack.c.h.b16 %v1491
    %v1578 = vunpack.c.l.b16 %v1492
    %v1579 = vunpack.c.h.b16 %v1492
    %v1580 = vunpack.c.l.b16 %v1493
    %v1581 = vunpack.c.h.b16 %v1493
    %v1582 = vunpack.c.l.b16 %v1494
    %v1583 = vunpack.c.h.b16 %v1494
    %v1584 = vunpack.c.l.b16 %v1495
    %v1585 = vunpack.c.h.b16 %v1495
    %v1586 = vunpack.c.l.b16 %v1496
    %v1587 = vunpack.c.h.b16 %v1496
    %v1588 = vunpack.c.l.b16 %v1497
    %v1589 = vunpack.c.h.b16 %v1497
    %v1590 = vunpack.c.l.b16 %v1498
    %v1591 = vunpack.c.h.b16 %v1498
    %v1592 = vunpack.c.l.b16 %v1499
    %v1593 = vunpack.c.h.b16 %v1499
    %v1594 = vunpack.c.l.b16 %v1500
    %v1595 = vunpack.c.h.b16 %v1500
    %v1596 = vunpack.c.l.b16 %v1501
    %v1597 = vunpack.c.h.b16 %v1501
    %v1598 = vpack.c.b16 %v1538, %v1534
    %v1599 = vpack.c.b16 %v1539, %v1535
    %v1600 = vpack.c.b16 %v1540, %v1536
    %v1601 = vpack.c.b16 %v1541, %v1537
    %v1602 = vpack.c.b16 %v1546, %v1542
    %v1603 = vpack.c.b16 %v1547, %v1543
    %v1604 = vpack.c.b16 %v1548, %v1544
    %v1605 = vpack.c.b16 %v1549, %v1545
    %v1606 = vpack.c.b16 %v1554, %v1550
    %v1607 = vpack.c.b16 %v1555, %v1551
    %v1608 = vpack.c.b16 %v1556, %v1552
    %v1609 = vpack.c.b16 %v1557, %v1553
    %v1610 = vpack.c.b16 %v1562, %v1558
    %v1611 = vpack.c.b16 %v1563, %v1559
    %v1612 = vpack.c.b16 %v1564, %v1560
    %v1613 = vpack.c.b16 %v1565, %v1561
    %v1614 = vpack.c.b16 %v1570, %v1566
    %v1615 = vpack.c.b16 %v1571, %v1567
    %v1616 = vpack.c.b16 %v1572, %v1568
    %v1617 = vpack.c.b16 %v1573, %v1569
    %v1618 = vpack.c.b16 %v1578, %v1574
    %v1619 = vpack.c.b16 %v1579, %v1575
    %v1620 = vpack.c.b16 %v1580, %v1576
    %v1621 = vpack.c.b16 %v1581, %v1577
    %v1622 = vpack.c.b16 %v1586, %v1582
    %v1623 = vpack.c.b16 %v1587, %v1583
    %v1624 = vpack.c.b16 %v1588, %v1584
    %v1625 = vpack.c.b16 %v1589, %v1585
    %v1626 = vpack.c.b16 %v1594, %v1590
    %v1627 = vpack.c.b16 %v1595, %v1591
    %v1628 = vpack.c.b16 %v1596, %v1592
    %v1629 = vpack.c.b16 %v1597, %v1593
    %1662 = vmatpush.bf16.msra.mxu0 %v1626
    %1663 = vmatpush.bf16.msra.mxu0 %v1622
    %1664 = vmatpush.bf16.msra.mxu0 %v1618
    %1665 = vmatpush.bf16.msra.mxu0 %v1614
    %1666 = vmatpush.bf16.msra.mxu0 %v1610
    %1667 = vmatpush.bf16.msra.mxu0 %v1606
    %1668 = vmatpush.bf16.msra.mxu0 %v1602
    %1669 = vmatpush.bf16.msra.mxu0 %v1598
    %1670 = vmatmul.bf16.gmra.mxu0 %v1217
    %v1671 = vpop.f32.mrf.mxu0
    %v1672 = vadd.f32 0.0, %v1671
    %v1673 = vpop.f32.mrf.mxu0
    %1674 = vdwg.mxu0
    %1675 = vmatpush.bf16.msra.mxu0 %v1627
    %1676 = vmatpush.bf16.msra.mxu0 %v1623
    %1677 = vmatpush.bf16.msra.mxu0 %v1619
    %1678 = vmatpush.bf16.msra.mxu0 %v1615
    %1679 = vmatpush.bf16.msra.mxu0 %v1611
    %1680 = vmatpush.bf16.msra.mxu0 %v1607
    %1681 = vmatpush.bf16.msra.mxu0 %v1603
    %1682 = vmatpush.bf16.msra.mxu0 %v1599
    %1683 = vmatmul.bf16.gmra.mxu0 %v1217
    %v1684 = vpop.f32.mrf.mxu0
    %v1685 = vadd.f32 0.0, %v1684
    %v1686 = vpop.f32.mrf.mxu0
    %1687 = vdwg.mxu0
    %1688 = vmatpush.bf16.msra.mxu0 %v1628
    %1689 = vmatpush.bf16.msra.mxu0 %v1624
    %1690 = vmatpush.bf16.msra.mxu0 %v1620
    %1691 = vmatpush.bf16.msra.mxu0 %v1616
    %1692 = vmatpush.bf16.msra.mxu0 %v1612
    %1693 = vmatpush.bf16.msra.mxu0 %v1608
    %1694 = vmatpush.bf16.msra.mxu0 %v1604
    %1695 = vmatpush.bf16.msra.mxu0 %v1600
    %1696 = vmatmul.bf16.gmra.mxu0 %v1217
    %v1697 = vpop.f32.mrf.mxu0
    %v1698 = vadd.f32 0.0, %v1697
    %v1699 = vpop.f32.mrf.mxu0
    %1700 = vdwg.mxu0
    %1701 = vmatpush.bf16.msra.mxu0 %v1629
    %1702 = vmatpush.bf16.msra.mxu0 %v1625
    %1703 = vmatpush.bf16.msra.mxu0 %v1621
    %1704 = vmatpush.bf16.msra.mxu0 %v1617
    %1705 = vmatpush.bf16.msra.mxu0 %v1613
    %1706 = vmatpush.bf16.msra.mxu0 %v1609
    %1707 = vmatpush.bf16.msra.mxu0 %v1605
    %1708 = vmatpush.bf16.msra.mxu0 %v1601
    %1709 = vmatmul.bf16.gmra.mxu0 %v1217
    %v1710 = vpop.f32.mrf.mxu0
    %v1711 = vadd.f32 0.0, %v1710
    %v1712 = vpop.f32.mrf.mxu0
    %1713 = vdwg.mxu0
    %v1714 = vadd.f32 %v1466, %v1672
    %v1715 = vadd.f32 %v1467, %v1685
    %v1716 = vadd.f32 %v1468, %v1698
    %v1717 = vadd.f32 %v1469, %v1711
    %v1718 = vmul.f32 %v1714, 0.5
    %v1719 = vtanh.pop %v1718
    %v1720 = vadd.f32 %v1719, 1.0
    %v1721 = vmul.f32 %v1720, 0.5
    %v1722 = vmul.f32 %v1715, 0.5
    %v1723 = vtanh.pop %v1722
    %v1724 = vadd.f32 %v1723, 1.0
    %v1725 = vmul.f32 %v1724, 0.5
    %v1726 = vtanh.pop %v1716
    %v1727 = vmul.f32 %v1717, 0.5
    %v1728 = vtanh.pop %v1727
    %v1729 = vadd.f32 %v1728, 1.0
    %v1730 = vmul.f32 %v1729, 0.5
    %v1731 = vmul.f32 %v1725, %v1214
    %v1732 = vmul.f32 %v1721, %v1726
    %v1733 = vadd.f32 %v1731, %v1732
    %v1734 = vtanh.pop %v1733
    %v1735 = vmul.f32 %v1730, %v1734
    %v1736 = vpack.c.bf16 %v1735, %v1735
    %v1737 = vld [vmem:[#allocation4] sm:$0xff]
    %v1738 = vld [vmem:[#allocation4 + $0x8] sm:$0xff]
    %v1739 = vld [vmem:[#allocation4 + $0x10] sm:$0xff]
    %v1740 = vld [vmem:[#allocation4 + $0x18] sm:$0xff]
    %v1741 = vld [vmem:[#allocation4 + $0x20] sm:$0xff]
    %v1742 = vld [vmem:[#allocation4 + $0x28] sm:$0xff]
    %v1743 = vld [vmem:[#allocation4 + $0x30] sm:$0xff]
    %v1744 = vld [vmem:[#allocation4 + $0x38] sm:$0xff]
    %v1745 = vld [vmem:[#allocation4 + $0x40] sm:$0xff]
    %v1746 = vld [vmem:[#allocation4 + $0x48] sm:$0xff]
    %v1747 = vld [vmem:[#allocation4 + $0x50] sm:$0xff]
    %v1748 = vld [vmem:[#allocation4 + $0x58] sm:$0xff]
    %v1749 = vld [vmem:[#allocation4 + $0x60] sm:$0xff]
    %v1750 = vld [vmem:[#allocation4 + $0x68] sm:$0xff]
    %v1751 = vld [vmem:[#allocation4 + $0x70] sm:$0xff]
    %v1752 = vld [vmem:[#allocation4 + $0x78] sm:$0xff]
    %v1753 = vld [vmem:[#allocation4 + $0x80] sm:$0xff]
    %v1754 = vld [vmem:[#allocation4 + $0x88] sm:$0xff]
    %v1755 = vld [vmem:[#allocation4 + $0x90] sm:$0xff]
    %v1756 = vld [vmem:[#allocation4 + $0x98] sm:$0xff]
    %v1757 = vld [vmem:[#allocation4 + $0xa0] sm:$0xff]
    %v1758 = vld [vmem:[#allocation4 + $0xa8] sm:$0xff]
    %v1759 = vld [vmem:[#allocation4 + $0xb0] sm:$0xff]
    %v1760 = vld [vmem:[#allocation4 + $0xb8] sm:$0xff]
    %v1761 = vld [vmem:[#allocation4 + $0xc0] sm:$0xff]
    %v1762 = vld [vmem:[#allocation4 + $0xc8] sm:$0xff]
    %v1763 = vld [vmem:[#allocation4 + $0xd0] sm:$0xff]
    %v1764 = vld [vmem:[#allocation4 + $0xd8] sm:$0xff]
    %v1765 = vld [vmem:[#allocation4 + $0xe0] sm:$0xff]
    %v1766 = vld [vmem:[#allocation4 + $0xe8] sm:$0xff]
    %v1767 = vld [vmem:[#allocation4 + $0xf0] sm:$0xff]
    %v1768 = vld [vmem:[#allocation4 + $0xf8] sm:$0xff]
    %v1801 = vunpack.c.l.b16 %v1737
    %v1802 = vunpack.c.h.b16 %v1737
    %v1803 = vunpack.c.l.b16 %v1738
    %v1804 = vunpack.c.h.b16 %v1738
    %v1805 = vunpack.c.l.b16 %v1739
    %v1806 = vunpack.c.h.b16 %v1739
    %v1807 = vunpack.c.l.b16 %v1740
    %v1808 = vunpack.c.h.b16 %v1740
    %v1809 = vunpack.c.l.b16 %v1741
    %v1810 = vunpack.c.h.b16 %v1741
    %v1811 = vunpack.c.l.b16 %v1742
    %v1812 = vunpack.c.h.b16 %v1742
    %v1813 = vunpack.c.l.b16 %v1743
    %v1814 = vunpack.c.h.b16 %v1743
    %v1815 = vunpack.c.l.b16 %v1744
    %v1816 = vunpack.c.h.b16 %v1744
    %v1817 = vunpack.c.l.b16 %v1745
    %v1818 = vunpack.c.h.b16 %v1745
    %v1819 = vunpack.c.l.b16 %v1746
    %v1820 = vunpack.c.h.b16 %v1746
    %v1821 = vunpack.c.l.b16 %v1747
    %v1822 = vunpack.c.h.b16 %v1747
    %v1823 = vunpack.c.l.b16 %v1748
    %v1824 = vunpack.c.h.b16 %v1748
    %v1825 = vunpack.c.l.b16 %v1749
    %v1826 = vunpack.c.h.b16 %v1749
    %v1827 = vunpack.c.l.b16 %v1750
    %v1828 = vunpack.c.h.b16 %v1750
    %v1829 = vunpack.c.l.b16 %v1751
    %v1830 = vunpack.c.h.b16 %v1751
    %v1831 = vunpack.c.l.b16 %v1752
    %v1832 = vunpack.c.h.b16 %v1752
    %v1833 = vunpack.c.l.b16 %v1753
    %v1834 = vunpack.c.h.b16 %v1753
    %v1835 = vunpack.c.l.b16 %v1754
    %v1836 = vunpack.c.h.b16 %v1754
    %v1837 = vunpack.c.l.b16 %v1755
    %v1838 = vunpack.c.h.b16 %v1755
    %v1839 = vunpack.c.l.b16 %v1756
    %v1840 = vunpack.c.h.b16 %v1756
    %v1841 = vunpack.c.l.b16 %v1757
    %v1842 = vunpack.c.h.b16 %v1757
    %v1843 = vunpack.c.l.b16 %v1758
    %v1844 = vunpack.c.h.b16 %v1758
    %v1845 = vunpack.c.l.b16 %v1759
    %v1846 = vunpack.c.h.b16 %v1759
    %v1847 = vunpack.c.l.b16 %v1760
    %v1848 = vunpack.c.h.b16 %v1760
    %v1849 = vunpack.c.l.b16 %v1761
    %v1850 = vunpack.c.h.b16 %v1761
    %v1851 = vunpack.c.l.b16 %v1762
    %v1852 = vunpack.c.h.b16 %v1762
    %v1853 = vunpack.c.l.b16 %v1763
    %v1854 = vunpack.c.h.b16 %v1763
    %v1855 = vunpack.c.l.b16 %v1764
    %v1856 = vunpack.c.h.b16 %v1764
    %v1857 = vunpack.c.l.b16 %v1765
    %v1858 = vunpack.c.h.b16 %v1765
    %v1859 = vunpack.c.l.b16 %v1766
    %v1860 = vunpack.c.h.b16 %v1766
    %v1861 = vunpack.c.l.b16 %v1767
    %v1862 = vunpack.c.h.b16 %v1767
    %v1863 = vunpack.c.l.b16 %v1768
    %v1864 = vunpack.c.h.b16 %v1768
    %v1865 = vpack.c.b16 %v1805, %v1801
    %v1866 = vpack.c.b16 %v1806, %v1802
    %v1867 = vpack.c.b16 %v1807, %v1803
    %v1868 = vpack.c.b16 %v1808, %v1804
    %v1869 = vpack.c.b16 %v1813, %v1809
    %v1870 = vpack.c.b16 %v1814, %v1810
    %v1871 = vpack.c.b16 %v1815, %v1811
    %v1872 = vpack.c.b16 %v1816, %v1812
    %v1873 = vpack.c.b16 %v1821, %v1817
    %v1874 = vpack.c.b16 %v1822, %v1818
    %v1875 = vpack.c.b16 %v1823, %v1819
    %v1876 = vpack.c.b16 %v1824, %v1820
    %v1877 = vpack.c.b16 %v1829, %v1825
    %v1878 = vpack.c.b16 %v1830, %v1826
    %v1879 = vpack.c.b16 %v1831, %v1827
    %v1880 = vpack.c.b16 %v1832, %v1828
    %v1881 = vpack.c.b16 %v1837, %v1833
    %v1882 = vpack.c.b16 %v1838, %v1834
    %v1883 = vpack.c.b16 %v1839, %v1835
    %v1884 = vpack.c.b16 %v1840, %v1836
    %v1885 = vpack.c.b16 %v1845, %v1841
    %v1886 = vpack.c.b16 %v1846, %v1842
    %v1887 = vpack.c.b16 %v1847, %v1843
    %v1888 = vpack.c.b16 %v1848, %v1844
    %v1889 = vpack.c.b16 %v1853, %v1849
    %v1890 = vpack.c.b16 %v1854, %v1850
    %v1891 = vpack.c.b16 %v1855, %v1851
    %v1892 = vpack.c.b16 %v1856, %v1852
    %v1893 = vpack.c.b16 %v1861, %v1857
    %v1894 = vpack.c.b16 %v1862, %v1858
    %v1895 = vpack.c.b16 %v1863, %v1859
    %v1896 = vpack.c.b16 %v1864, %v1860
    %1929 = vmatpush.bf16.msra.mxu0 %v1893
    %1930 = vmatpush.bf16.msra.mxu0 %v1889
    %1931 = vmatpush.bf16.msra.mxu0 %v1885
    %1932 = vmatpush.bf16.msra.mxu0 %v1881
    %1933 = vmatpush.bf16.msra.mxu0 %v1877
    %1934 = vmatpush.bf16.msra.mxu0 %v1873
    %1935 = vmatpush.bf16.msra.mxu0 %v1869
    %1936 = vmatpush.bf16.msra.mxu0 %v1865
    %1937 = vmatmul.bf16.gmra.mxu0 %v1736
    %v1938 = vpop.f32.mrf.mxu0
    %v1939 = vadd.f32 %v420, %v1938
    %v1940 = vpop.f32.mrf.mxu0
    %1941 = vdwg.mxu0
    %1942 = vmatpush.bf16.msra.mxu0 %v1894
    %1943 = vmatpush.bf16.msra.mxu0 %v1890
    %1944 = vmatpush.bf16.msra.mxu0 %v1886
    %1945 = vmatpush.bf16.msra.mxu0 %v1882
    %1946 = vmatpush.bf16.msra.mxu0 %v1878
    %1947 = vmatpush.bf16.msra.mxu0 %v1874
    %1948 = vmatpush.bf16.msra.mxu0 %v1870
    %1949 = vmatpush.bf16.msra.mxu0 %v1866
    %1950 = vmatmul.bf16.gmra.mxu0 %v1736
    %v1951 = vpop.f32.mrf.mxu0
    %v1952 = vadd.f32 %v421, %v1951
    %v1953 = vpop.f32.mrf.mxu0
    %1954 = vdwg.mxu0
    %1955 = vmatpush.bf16.msra.mxu0 %v1895
    %1956 = vmatpush.bf16.msra.mxu0 %v1891
    %1957 = vmatpush.bf16.msra.mxu0 %v1887
    %1958 = vmatpush.bf16.msra.mxu0 %v1883
    %1959 = vmatpush.bf16.msra.mxu0 %v1879
    %1960 = vmatpush.bf16.msra.mxu0 %v1875
    %1961 = vmatpush.bf16.msra.mxu0 %v1871
    %1962 = vmatpush.bf16.msra.mxu0 %v1867
    %1963 = vmatmul.bf16.gmra.mxu0 %v1736
    %v1964 = vpop.f32.mrf.mxu0
    %v1965 = vadd.f32 %v422, %v1964
    %v1966 = vpop.f32.mrf.mxu0
    %1967 = vdwg.mxu0
    %1968 = vmatpush.bf16.msra.mxu0 %v1896
    %1969 = vmatpush.bf16.msra.mxu0 %v1892
    %1970 = vmatpush.bf16.msra.mxu0 %v1888
    %1971 = vmatpush.bf16.msra.mxu0 %v1884
    %1972 = vmatpush.bf16.msra.mxu0 %v1880
    %1973 = vmatpush.bf16.msra.mxu0 %v1876
    %1974 = vmatpush.bf16.msra.mxu0 %v1872
    %1975 = vmatpush.bf16.msra.mxu0 %v1868
    %1976 = vmatmul.bf16.gmra.mxu0 %v1736
    %v1977 = vpop.f32.mrf.mxu0
    %v1978 = vadd.f32 %v423, %v1977
    %v1979 = vpop.f32.mrf.mxu0
    %1980 = vdwg.mxu0
    %1981 = vst [vmem:[#allocation3 + $0x40] sm:$0xff] %v1939
    %1982 = vst [vmem:[#allocation3 + $0x48] sm:$0xff] %v1952
    %1983 = vst [vmem:[#allocation3 + $0x50] sm:$0xff] %v1965
    %1984 = vst [vmem:[#allocation3 + $0x58] sm:$0xff] %v1978
    %v1985 = vld [vmem:[#allocation2 + $0x60] sm:$0xff]
    %v1986 = vld [vmem:[#allocation2 + $0x68] sm:$0xff]
    %v1987 = vld [vmem:[#allocation2 + $0x70] sm:$0xff]
    %v1988 = vld [vmem:[#allocation2 + $0x78] sm:$0xff]
    %v1989 = vld [vmem:[#allocation10] sm:$0xff]
    %v1990 = vld [vmem:[#allocation10 + $0x8] sm:$0xff]
    %v1991 = vld [vmem:[#allocation10 + $0x10] sm:$0xff]
    %v1992 = vld [vmem:[#allocation10 + $0x18] sm:$0xff]
    %v1993 = vld [vmem:[#allocation10 + $0x20] sm:$0xff]
    %v1994 = vld [vmem:[#allocation10 + $0x28] sm:$0xff]
    %v1995 = vld [vmem:[#allocation10 + $0x30] sm:$0xff]
    %v1996 = vld [vmem:[#allocation10 + $0x38] sm:$0xff]
    %v1997 = vld [vmem:[#allocation10 + $0x40] sm:$0xff]
    %v1998 = vld [vmem:[#allocation10 + $0x48] sm:$0xff]
    %v1999 = vld [vmem:[#allocation10 + $0x50] sm:$0xff]
    %v2000 = vld [vmem:[#allocation10 + $0x58] sm:$0xff]
    %v2001 = vld [vmem:[#allocation10 + $0x60] sm:$0xff]
    %v2002 = vld [vmem:[#allocation10 + $0x68] sm:$0xff]
    %v2003 = vld [vmem:[#allocation10 + $0x70] sm:$0xff]
    %v2004 = vld [vmem:[#allocation10 + $0x78] sm:$0xff]
    %v2005 = vld [vmem:[#allocation10 + $0x80] sm:$0xff]
    %v2006 = vld [vmem:[#allocation10 + $0x88] sm:$0xff]
    %v2007 = vld [vmem:[#allocation10 + $0x90] sm:$0xff]
    %v2008 = vld [vmem:[#allocation10 + $0x98] sm:$0xff]
    %v2009 = vld [vmem:[#allocation10 + $0xa0] sm:$0xff]
    %v2010 = vld [vmem:[#allocation10 + $0xa8] sm:$0xff]
    %v2011 = vld [vmem:[#allocation10 + $0xb0] sm:$0xff]
    %v2012 = vld [vmem:[#allocation10 + $0xb8] sm:$0xff]
    %v2013 = vld [vmem:[#allocation10 + $0xc0] sm:$0xff]
    %v2014 = vld [vmem:[#allocation10 + $0xc8] sm:$0xff]
    %v2015 = vld [vmem:[#allocation10 + $0xd0] sm:$0xff]
    %v2016 = vld [vmem:[#allocation10 + $0xd8] sm:$0xff]
    %v2017 = vld [vmem:[#allocation10 + $0xe0] sm:$0xff]
    %v2018 = vld [vmem:[#allocation10 + $0xe8] sm:$0xff]
    %v2019 = vld [vmem:[#allocation10 + $0xf0] sm:$0xff]
    %v2020 = vld [vmem:[#allocation10 + $0xf8] sm:$0xff]
    %v2053 = vunpack.c.l.b16 %v1989
    %v2054 = vunpack.c.h.b16 %v1989
    %v2055 = vunpack.c.l.b16 %v1990
    %v2056 = vunpack.c.h.b16 %v1990
    %v2057 = vunpack.c.l.b16 %v1991
    %v2058 = vunpack.c.h.b16 %v1991
    %v2059 = vunpack.c.l.b16 %v1992
    %v2060 = vunpack.c.h.b16 %v1992
    %v2061 = vunpack.c.l.b16 %v1993
    %v2062 = vunpack.c.h.b16 %v1993
    %v2063 = vunpack.c.l.b16 %v1994
    %v2064 = vunpack.c.h.b16 %v1994
    %v2065 = vunpack.c.l.b16 %v1995
    %v2066 = vunpack.c.h.b16 %v1995
    %v2067 = vunpack.c.l.b16 %v1996
    %v2068 = vunpack.c.h.b16 %v1996
    %v2069 = vunpack.c.l.b16 %v1997
    %v2070 = vunpack.c.h.b16 %v1997
    %v2071 = vunpack.c.l.b16 %v1998
    %v2072 = vunpack.c.h.b16 %v1998
    %v2073 = vunpack.c.l.b16 %v1999
    %v2074 = vunpack.c.h.b16 %v1999
    %v2075 = vunpack.c.l.b16 %v2000
    %v2076 = vunpack.c.h.b16 %v2000
    %v2077 = vunpack.c.l.b16 %v2001
    %v2078 = vunpack.c.h.b16 %v2001
    %v2079 = vunpack.c.l.b16 %v2002
    %v2080 = vunpack.c.h.b16 %v2002
    %v2081 = vunpack.c.l.b16 %v2003
    %v2082 = vunpack.c.h.b16 %v2003
    %v2083 = vunpack.c.l.b16 %v2004
    %v2084 = vunpack.c.h.b16 %v2004
    %v2085 = vunpack.c.l.b16 %v2005
    %v2086 = vunpack.c.h.b16 %v2005
    %v2087 = vunpack.c.l.b16 %v2006
    %v2088 = vunpack.c.h.b16 %v2006
    %v2089 = vunpack.c.l.b16 %v2007
    %v2090 = vunpack.c.h.b16 %v2007
    %v2091 = vunpack.c.l.b16 %v2008
    %v2092 = vunpack.c.h.b16 %v2008
    %v2093 = vunpack.c.l.b16 %v2009
    %v2094 = vunpack.c.h.b16 %v2009
    %v2095 = vunpack.c.l.b16 %v2010
    %v2096 = vunpack.c.h.b16 %v2010
    %v2097 = vunpack.c.l.b16 %v2011
    %v2098 = vunpack.c.h.b16 %v2011
    %v2099 = vunpack.c.l.b16 %v2012
    %v2100 = vunpack.c.h.b16 %v2012
    %v2101 = vunpack.c.l.b16 %v2013
    %v2102 = vunpack.c.h.b16 %v2013
    %v2103 = vunpack.c.l.b16 %v2014
    %v2104 = vunpack.c.h.b16 %v2014
    %v2105 = vunpack.c.l.b16 %v2015
    %v2106 = vunpack.c.h.b16 %v2015
    %v2107 = vunpack.c.l.b16 %v2016
    %v2108 = vunpack.c.h.b16 %v2016
    %v2109 = vunpack.c.l.b16 %v2017
    %v2110 = vunpack.c.h.b16 %v2017
    %v2111 = vunpack.c.l.b16 %v2018
    %v2112 = vunpack.c.h.b16 %v2018
    %v2113 = vunpack.c.l.b16 %v2019
    %v2114 = vunpack.c.h.b16 %v2019
    %v2115 = vunpack.c.l.b16 %v2020
    %v2116 = vunpack.c.h.b16 %v2020
    %v2117 = vpack.c.b16 %v2057, %v2053
    %v2118 = vpack.c.b16 %v2058, %v2054
    %v2119 = vpack.c.b16 %v2059, %v2055
    %v2120 = vpack.c.b16 %v2060, %v2056
    %v2121 = vpack.c.b16 %v2065, %v2061
    %v2122 = vpack.c.b16 %v2066, %v2062
    %v2123 = vpack.c.b16 %v2067, %v2063
    %v2124 = vpack.c.b16 %v2068, %v2064
    %v2125 = vpack.c.b16 %v2073, %v2069
    %v2126 = vpack.c.b16 %v2074, %v2070
    %v2127 = vpack.c.b16 %v2075, %v2071
    %v2128 = vpack.c.b16 %v2076, %v2072
    %v2129 = vpack.c.b16 %v2081, %v2077
    %v2130 = vpack.c.b16 %v2082, %v2078
    %v2131 = vpack.c.b16 %v2083, %v2079
    %v2132 = vpack.c.b16 %v2084, %v2080
    %v2133 = vpack.c.b16 %v2089, %v2085
    %v2134 = vpack.c.b16 %v2090, %v2086
    %v2135 = vpack.c.b16 %v2091, %v2087
    %v2136 = vpack.c.b16 %v2092, %v2088
    %v2137 = vpack.c.b16 %v2097, %v2093
    %v2138 = vpack.c.b16 %v2098, %v2094
    %v2139 = vpack.c.b16 %v2099, %v2095
    %v2140 = vpack.c.b16 %v2100, %v2096
    %v2141 = vpack.c.b16 %v2105, %v2101
    %v2142 = vpack.c.b16 %v2106, %v2102
    %v2143 = vpack.c.b16 %v2107, %v2103
    %v2144 = vpack.c.b16 %v2108, %v2104
    %v2145 = vpack.c.b16 %v2113, %v2109
    %v2146 = vpack.c.b16 %v2114, %v2110
    %v2147 = vpack.c.b16 %v2115, %v2111
    %v2148 = vpack.c.b16 %v2116, %v2112
    %2181 = vmatpush.bf16.msra.mxu0 %v2145
    %2182 = vmatpush.bf16.msra.mxu0 %v2141
    %2183 = vmatpush.bf16.msra.mxu0 %v2137
    %2184 = vmatpush.bf16.msra.mxu0 %v2133
    %2185 = vmatpush.bf16.msra.mxu0 %v2129
    %2186 = vmatpush.bf16.msra.mxu0 %v2125
    %2187 = vmatpush.bf16.msra.mxu0 %v2121
    %2188 = vmatpush.bf16.msra.mxu0 %v2117
    %2189 = vmatmul.bf16.gmra.mxu0 %v1736
    %v2190 = vpop.f32.mrf.mxu0
    %v2191 = vadd.f32 0.0, %v2190
    %v2192 = vpop.f32.mrf.mxu0
    %2193 = vdwg.mxu0
    %2194 = vmatpush.bf16.msra.mxu0 %v2146
    %2195 = vmatpush.bf16.msra.mxu0 %v2142
    %2196 = vmatpush.bf16.msra.mxu0 %v2138
    %2197 = vmatpush.bf16.msra.mxu0 %v2134
    %2198 = vmatpush.bf16.msra.mxu0 %v2130
    %2199 = vmatpush.bf16.msra.mxu0 %v2126
    %2200 = vmatpush.bf16.msra.mxu0 %v2122
    %2201 = vmatpush.bf16.msra.mxu0 %v2118
    %2202 = vmatmul.bf16.gmra.mxu0 %v1736
    %v2203 = vpop.f32.mrf.mxu0
    %v2204 = vadd.f32 0.0, %v2203
    %v2205 = vpop.f32.mrf.mxu0
    %2206 = vdwg.mxu0
    %2207 = vmatpush.bf16.msra.mxu0 %v2147
    %2208 = vmatpush.bf16.msra.mxu0 %v2143
    %2209 = vmatpush.bf16.msra.mxu0 %v2139
    %2210 = vmatpush.bf16.msra.mxu0 %v2135
    %2211 = vmatpush.bf16.msra.mxu0 %v2131
    %2212 = vmatpush.bf16.msra.mxu0 %v2127
    %2213 = vmatpush.bf16.msra.mxu0 %v2123
    %2214 = vmatpush.bf16.msra.mxu0 %v2119
    %2215 = vmatmul.bf16.gmra.mxu0 %v1736
    %v2216 = vpop.f32.mrf.mxu0
    %v2217 = vadd.f32 0.0, %v2216
    %v2218 = vpop.f32.mrf.mxu0
    %2219 = vdwg.mxu0
    %2220 = vmatpush.bf16.msra.mxu0 %v2148
    %2221 = vmatpush.bf16.msra.mxu0 %v2144
    %2222 = vmatpush.bf16.msra.mxu0 %v2140
    %2223 = vmatpush.bf16.msra.mxu0 %v2136
    %2224 = vmatpush.bf16.msra.mxu0 %v2132
    %2225 = vmatpush.bf16.msra.mxu0 %v2128
    %2226 = vmatpush.bf16.msra.mxu0 %v2124
    %2227 = vmatpush.bf16.msra.mxu0 %v2120
    %2228 = vmatmul.bf16.gmra.mxu0 %v1736
    %v2229 = vpop.f32.mrf.mxu0
    %v2230 = vadd.f32 0.0, %v2229
    %v2231 = vpop.f32.mrf.mxu0
    %2232 = vdwg.mxu0
    %v2233 = vadd.f32 %v1985, %v2191
    %v2234 = vadd.f32 %v1986, %v2204
    %v2235 = vadd.f32 %v1987, %v2217
    %v2236 = vadd.f32 %v1988, %v2230
    %v2237 = vmul.f32 %v2233, 0.5
    %v2238 = vtanh.pop %v2237
    %v2239 = vadd.f32 %v2238, 1.0
    %v2240 = vmul.f32 %v2239, 0.5
    %v2241 = vmul.f32 %v2234, 0.5
    %v2242 = vtanh.pop %v2241
    %v2243 = vadd.f32 %v2242, 1.0
    %v2244 = vmul.f32 %v2243, 0.5
    %v2245 = vtanh.pop %v2235
    %v2246 = vmul.f32 %v2236, 0.5
    %v2247 = vtanh.pop %v2246
    %v2248 = vadd.f32 %v2247, 1.0
    %v2249 = vmul.f32 %v2248, 0.5
    %v2250 = vmul.f32 %v2244, %v1733
    %v2251 = vmul.f32 %v2240, %v2245
    %v2252 = vadd.f32 %v2250, %v2251
    %v2253 = vtanh.pop %v2252
    %v2254 = vmul.f32 %v2249, %v2253
    %v2255 = vpack.c.bf16 %v2254, %v2254
    %v2256 = vld [vmem:[#allocation4] sm:$0xff]
    %v2257 = vld [vmem:[#allocation4 + $0x8] sm:$0xff]
    %v2258 = vld [vmem:[#allocation4 + $0x10] sm:$0xff]
    %v2259 = vld [vmem:[#allocation4 + $0x18] sm:$0xff]
    %v2260 = vld [vmem:[#allocation4 + $0x20] sm:$0xff]
    %v2261 = vld [vmem:[#allocation4 + $0x28] sm:$0xff]
    %v2262 = vld [vmem:[#allocation4 + $0x30] sm:$0xff]
    %v2263 = vld [vmem:[#allocation4 + $0x38] sm:$0xff]
    %v2264 = vld [vmem:[#allocation4 + $0x40] sm:$0xff]
    %v2265 = vld [vmem:[#allocation4 + $0x48] sm:$0xff]
    %v2266 = vld [vmem:[#allocation4 + $0x50] sm:$0xff]
    %v2267 = vld [vmem:[#allocation4 + $0x58] sm:$0xff]
    %v2268 = vld [vmem:[#allocation4 + $0x60] sm:$0xff]
    %v2269 = vld [vmem:[#allocation4 + $0x68] sm:$0xff]
    %v2270 = vld [vmem:[#allocation4 + $0x70] sm:$0xff]
    %v2271 = vld [vmem:[#allocation4 + $0x78] sm:$0xff]
    %v2272 = vld [vmem:[#allocation4 + $0x80] sm:$0xff]
    %v2273 = vld [vmem:[#allocation4 + $0x88] sm:$0xff]
    %v2274 = vld [vmem:[#allocation4 + $0x90] sm:$0xff]
    %v2275 = vld [vmem:[#allocation4 + $0x98] sm:$0xff]
    %v2276 = vld [vmem:[#allocation4 + $0xa0] sm:$0xff]
    %v2277 = vld [vmem:[#allocation4 + $0xa8] sm:$0xff]
    %v2278 = vld [vmem:[#allocation4 + $0xb0] sm:$0xff]
    %v2279 = vld [vmem:[#allocation4 + $0xb8] sm:$0xff]
    %v2280 = vld [vmem:[#allocation4 + $0xc0] sm:$0xff]
    %v2281 = vld [vmem:[#allocation4 + $0xc8] sm:$0xff]
    %v2282 = vld [vmem:[#allocation4 + $0xd0] sm:$0xff]
    %v2283 = vld [vmem:[#allocation4 + $0xd8] sm:$0xff]
    %v2284 = vld [vmem:[#allocation4 + $0xe0] sm:$0xff]
    %v2285 = vld [vmem:[#allocation4 + $0xe8] sm:$0xff]
    %v2286 = vld [vmem:[#allocation4 + $0xf0] sm:$0xff]
    %v2287 = vld [vmem:[#allocation4 + $0xf8] sm:$0xff]
    %v2320 = vunpack.c.l.b16 %v2256
    %v2321 = vunpack.c.h.b16 %v2256
    %v2322 = vunpack.c.l.b16 %v2257
    %v2323 = vunpack.c.h.b16 %v2257
    %v2324 = vunpack.c.l.b16 %v2258
    %v2325 = vunpack.c.h.b16 %v2258
    %v2326 = vunpack.c.l.b16 %v2259
    %v2327 = vunpack.c.h.b16 %v2259
    %v2328 = vunpack.c.l.b16 %v2260
    %v2329 = vunpack.c.h.b16 %v2260
    %v2330 = vunpack.c.l.b16 %v2261
    %v2331 = vunpack.c.h.b16 %v2261
    %v2332 = vunpack.c.l.b16 %v2262
    %v2333 = vunpack.c.h.b16 %v2262
    %v2334 = vunpack.c.l.b16 %v2263
    %v2335 = vunpack.c.h.b16 %v2263
    %v2336 = vunpack.c.l.b16 %v2264
    %v2337 = vunpack.c.h.b16 %v2264
    %v2338 = vunpack.c.l.b16 %v2265
    %v2339 = vunpack.c.h.b16 %v2265
    %v2340 = vunpack.c.l.b16 %v2266
    %v2341 = vunpack.c.h.b16 %v2266
    %v2342 = vunpack.c.l.b16 %v2267
    %v2343 = vunpack.c.h.b16 %v2267
    %v2344 = vunpack.c.l.b16 %v2268
    %v2345 = vunpack.c.h.b16 %v2268
    %v2346 = vunpack.c.l.b16 %v2269
    %v2347 = vunpack.c.h.b16 %v2269
    %v2348 = vunpack.c.l.b16 %v2270
    %v2349 = vunpack.c.h.b16 %v2270
    %v2350 = vunpack.c.l.b16 %v2271
    %v2351 = vunpack.c.h.b16 %v2271
    %v2352 = vunpack.c.l.b16 %v2272
    %v2353 = vunpack.c.h.b16 %v2272
    %v2354 = vunpack.c.l.b16 %v2273
    %v2355 = vunpack.c.h.b16 %v2273
    %v2356 = vunpack.c.l.b16 %v2274
    %v2357 = vunpack.c.h.b16 %v2274
    %v2358 = vunpack.c.l.b16 %v2275
    %v2359 = vunpack.c.h.b16 %v2275
    %v2360 = vunpack.c.l.b16 %v2276
    %v2361 = vunpack.c.h.b16 %v2276
    %v2362 = vunpack.c.l.b16 %v2277
    %v2363 = vunpack.c.h.b16 %v2277
    %v2364 = vunpack.c.l.b16 %v2278
    %v2365 = vunpack.c.h.b16 %v2278
    %v2366 = vunpack.c.l.b16 %v2279
    %v2367 = vunpack.c.h.b16 %v2279
    %v2368 = vunpack.c.l.b16 %v2280
    %v2369 = vunpack.c.h.b16 %v2280
    %v2370 = vunpack.c.l.b16 %v2281
    %v2371 = vunpack.c.h.b16 %v2281
    %v2372 = vunpack.c.l.b16 %v2282
    %v2373 = vunpack.c.h.b16 %v2282
    %v2374 = vunpack.c.l.b16 %v2283
    %v2375 = vunpack.c.h.b16 %v2283
    %v2376 = vunpack.c.l.b16 %v2284
    %v2377 = vunpack.c.h.b16 %v2284
    %v2378 = vunpack.c.l.b16 %v2285
    %v2379 = vunpack.c.h.b16 %v2285
    %v2380 = vunpack.c.l.b16 %v2286
    %v2381 = vunpack.c.h.b16 %v2286
    %v2382 = vunpack.c.l.b16 %v2287
    %v2383 = vunpack.c.h.b16 %v2287
    %v2384 = vpack.c.b16 %v2324, %v2320
    %v2385 = vpack.c.b16 %v2325, %v2321
    %v2386 = vpack.c.b16 %v2326, %v2322
    %v2387 = vpack.c.b16 %v2327, %v2323
    %v2388 = vpack.c.b16 %v2332, %v2328
    %v2389 = vpack.c.b16 %v2333, %v2329
    %v2390 = vpack.c.b16 %v2334, %v2330
    %v2391 = vpack.c.b16 %v2335, %v2331
    %v2392 = vpack.c.b16 %v2340, %v2336
    %v2393 = vpack.c.b16 %v2341, %v2337
    %v2394 = vpack.c.b16 %v2342, %v2338
    %v2395 = vpack.c.b16 %v2343, %v2339
    %v2396 = vpack.c.b16 %v2348, %v2344
    %v2397 = vpack.c.b16 %v2349, %v2345
    %v2398 = vpack.c.b16 %v2350, %v2346
    %v2399 = vpack.c.b16 %v2351, %v2347
    %v2400 = vpack.c.b16 %v2356, %v2352
    %v2401 = vpack.c.b16 %v2357, %v2353
    %v2402 = vpack.c.b16 %v2358, %v2354
    %v2403 = vpack.c.b16 %v2359, %v2355
    %v2404 = vpack.c.b16 %v2364, %v2360
    %v2405 = vpack.c.b16 %v2365, %v2361
    %v2406 = vpack.c.b16 %v2366, %v2362
    %v2407 = vpack.c.b16 %v2367, %v2363
    %v2408 = vpack.c.b16 %v2372, %v2368
    %v2409 = vpack.c.b16 %v2373, %v2369
    %v2410 = vpack.c.b16 %v2374, %v2370
    %v2411 = vpack.c.b16 %v2375, %v2371
    %v2412 = vpack.c.b16 %v2380, %v2376
    %v2413 = vpack.c.b16 %v2381, %v2377
    %v2414 = vpack.c.b16 %v2382, %v2378
    %v2415 = vpack.c.b16 %v2383, %v2379
    %2448 = vmatpush.bf16.msra.mxu0 %v2412
    %2449 = vmatpush.bf16.msra.mxu0 %v2408
    %2450 = vmatpush.bf16.msra.mxu0 %v2404
    %2451 = vmatpush.bf16.msra.mxu0 %v2400
    %2452 = vmatpush.bf16.msra.mxu0 %v2396
    %2453 = vmatpush.bf16.msra.mxu0 %v2392
    %2454 = vmatpush.bf16.msra.mxu0 %v2388
    %2455 = vmatpush.bf16.msra.mxu0 %v2384
    %2456 = vmatmul.bf16.gmra.mxu0 %v2255
    %v2457 = vpop.f32.mrf.mxu0
    %v2458 = vadd.f32 %v420, %v2457
    %v2459 = vpop.f32.mrf.mxu0
    %2460 = vdwg.mxu0
    %2461 = vmatpush.bf16.msra.mxu0 %v2413
    %2462 = vmatpush.bf16.msra.mxu0 %v2409
    %2463 = vmatpush.bf16.msra.mxu0 %v2405
    %2464 = vmatpush.bf16.msra.mxu0 %v2401
    %2465 = vmatpush.bf16.msra.mxu0 %v2397
    %2466 = vmatpush.bf16.msra.mxu0 %v2393
    %2467 = vmatpush.bf16.msra.mxu0 %v2389
    %2468 = vmatpush.bf16.msra.mxu0 %v2385
    %2469 = vmatmul.bf16.gmra.mxu0 %v2255
    %v2470 = vpop.f32.mrf.mxu0
    %v2471 = vadd.f32 %v421, %v2470
    %v2472 = vpop.f32.mrf.mxu0
    %2473 = vdwg.mxu0
    %2474 = vmatpush.bf16.msra.mxu0 %v2414
    %2475 = vmatpush.bf16.msra.mxu0 %v2410
    %2476 = vmatpush.bf16.msra.mxu0 %v2406
    %2477 = vmatpush.bf16.msra.mxu0 %v2402
    %2478 = vmatpush.bf16.msra.mxu0 %v2398
    %2479 = vmatpush.bf16.msra.mxu0 %v2394
    %2480 = vmatpush.bf16.msra.mxu0 %v2390
    %2481 = vmatpush.bf16.msra.mxu0 %v2386
    %2482 = vmatmul.bf16.gmra.mxu0 %v2255
    %v2483 = vpop.f32.mrf.mxu0
    %v2484 = vadd.f32 %v422, %v2483
    %v2485 = vpop.f32.mrf.mxu0
    %2486 = vdwg.mxu0
    %2487 = vmatpush.bf16.msra.mxu0 %v2415
    %2488 = vmatpush.bf16.msra.mxu0 %v2411
    %2489 = vmatpush.bf16.msra.mxu0 %v2407
    %2490 = vmatpush.bf16.msra.mxu0 %v2403
    %2491 = vmatpush.bf16.msra.mxu0 %v2399
    %2492 = vmatpush.bf16.msra.mxu0 %v2395
    %2493 = vmatpush.bf16.msra.mxu0 %v2391
    %2494 = vmatpush.bf16.msra.mxu0 %v2387
    %2495 = vmatmul.bf16.gmra.mxu0 %v2255
    %v2496 = vpop.f32.mrf.mxu0
    %v2497 = vadd.f32 %v423, %v2496
    %v2498 = vpop.f32.mrf.mxu0
    %2499 = vdwg.mxu0
    %2500 = vst [vmem:[#allocation3 + $0x60] sm:$0xff] %v2458
    %2501 = vst [vmem:[#allocation3 + $0x68] sm:$0xff] %v2471
    %2502 = vst [vmem:[#allocation3 + $0x70] sm:$0xff] %v2484
    %2503 = vst [vmem:[#allocation3 + $0x78] sm:$0xff] %v2497
    %v2504 = vld [vmem:[#allocation2 + $0x80] sm:$0xff]
    %v2505 = vld [vmem:[#allocation2 + $0x88] sm:$0xff]
    %v2506 = vld [vmem:[#allocation2 + $0x90] sm:$0xff]
    %v2507 = vld [vmem:[#allocation2 + $0x98] sm:$0xff]
    %v2508 = vld [vmem:[#allocation10] sm:$0xff]
    %v2509 = vld [vmem:[#allocation10 + $0x8] sm:$0xff]
    %v2510 = vld [vmem:[#allocation10 + $0x10] sm:$0xff]
    %v2511 = vld [vmem:[#allocation10 + $0x18] sm:$0xff]
    %v2512 = vld [vmem:[#allocation10 + $0x20] sm:$0xff]
    %v2513 = vld [vmem:[#allocation10 + $0x28] sm:$0xff]
    %v2514 = vld [vmem:[#allocation10 + $0x30] sm:$0xff]
    %v2515 = vld [vmem:[#allocation10 + $0x38] sm:$0xff]
    %v2516 = vld [vmem:[#allocation10 + $0x40] sm:$0xff]
    %v2517 = vld [vmem:[#allocation10 + $0x48] sm:$0xff]
    %v2518 = vld [vmem:[#allocation10 + $0x50] sm:$0xff]
    %v2519 = vld [vmem:[#allocation10 + $0x58] sm:$0xff]
    %v2520 = vld [vmem:[#allocation10 + $0x60] sm:$0xff]
    %v2521 = vld [vmem:[#allocation10 + $0x68] sm:$0xff]
    %v2522 = vld [vmem:[#allocation10 + $0x70] sm:$0xff]
    %v2523 = vld [vmem:[#allocation10 + $0x78] sm:$0xff]
    %v2524 = vld [vmem:[#allocation10 + $0x80] sm:$0xff]
    %v2525 = vld [vmem:[#allocation10 + $0x88] sm:$0xff]
    %v2526 = vld [vmem:[#allocation10 + $0x90] sm:$0xff]
    %v2527 = vld [vmem:[#allocation10 + $0x98] sm:$0xff]
    %v2528 = vld [vmem:[#allocation10 + $0xa0] sm:$0xff]
    %v2529 = vld [vmem:[#allocation10 + $0xa8] sm:$0xff]
    %v2530 = vld [vmem:[#allocation10 + $0xb0] sm:$0xff]
    %v2531 = vld [vmem:[#allocation10 + $0xb8] sm:$0xff]
    %v2532 = vld [vmem:[#allocation10 + $0xc0] sm:$0xff]
    %v2533 = vld [vmem:[#allocation10 + $0xc8] sm:$0xff]
    %v2534 = vld [vmem:[#allocation10 + $0xd0] sm:$0xff]
    %v2535 = vld [vmem:[#allocation10 + $0xd8] sm:$0xff]
    %v2536 = vld [vmem:[#allocation10 + $0xe0] sm:$0xff]
    %v2537 = vld [vmem:[#allocation10 + $0xe8] sm:$0xff]
    %v2538 = vld [vmem:[#allocation10 + $0xf0] sm:$0xff]
    %v2539 = vld [vmem:[#allocation10 + $0xf8] sm:$0xff]
    %v2572 = vunpack.c.l.b16 %v2508
    %v2573 = vunpack.c.h.b16 %v2508
    %v2574 = vunpack.c.l.b16 %v2509
    %v2575 = vunpack.c.h.b16 %v2509
    %v2576 = vunpack.c.l.b16 %v2510
    %v2577 = vunpack.c.h.b16 %v2510
    %v2578 = vunpack.c.l.b16 %v2511
    %v2579 = vunpack.c.h.b16 %v2511
    %v2580 = vunpack.c.l.b16 %v2512
    %v2581 = vunpack.c.h.b16 %v2512
    %v2582 = vunpack.c.l.b16 %v2513
    %v2583 = vunpack.c.h.b16 %v2513
    %v2584 = vunpack.c.l.b16 %v2514
    %v2585 = vunpack.c.h.b16 %v2514
    %v2586 = vunpack.c.l.b16 %v2515
    %v2587 = vunpack.c.h.b16 %v2515
    %v2588 = vunpack.c.l.b16 %v2516
    %v2589 = vunpack.c.h.b16 %v2516
    %v2590 = vunpack.c.l.b16 %v2517
    %v2591 = vunpack.c.h.b16 %v2517
    %v2592 = vunpack.c.l.b16 %v2518
    %v2593 = vunpack.c.h.b16 %v2518
    %v2594 = vunpack.c.l.b16 %v2519
    %v2595 = vunpack.c.h.b16 %v2519
    %v2596 = vunpack.c.l.b16 %v2520
    %v2597 = vunpack.c.h.b16 %v2520
    %v2598 = vunpack.c.l.b16 %v2521
    %v2599 = vunpack.c.h.b16 %v2521
    %v2600 = vunpack.c.l.b16 %v2522
    %v2601 = vunpack.c.h.b16 %v2522
    %v2602 = vunpack.c.l.b16 %v2523
    %v2603 = vunpack.c.h.b16 %v2523
    %v2604 = vunpack.c.l.b16 %v2524
    %v2605 = vunpack.c.h.b16 %v2524
    %v2606 = vunpack.c.l.b16 %v2525
    %v2607 = vunpack.c.h.b16 %v2525
    %v2608 = vunpack.c.l.b16 %v2526
    %v2609 = vunpack.c.h.b16 %v2526
    %v2610 = vunpack.c.l.b16 %v2527
    %v2611 = vunpack.c.h.b16 %v2527
    %v2612 = vunpack.c.l.b16 %v2528
    %v2613 = vunpack.c.h.b16 %v2528
    %v2614 = vunpack.c.l.b16 %v2529
    %v2615 = vunpack.c.h.b16 %v2529
    %v2616 = vunpack.c.l.b16 %v2530
    %v2617 = vunpack.c.h.b16 %v2530
    %v2618 = vunpack.c.l.b16 %v2531
    %v2619 = vunpack.c.h.b16 %v2531
    %v2620 = vunpack.c.l.b16 %v2532
    %v2621 = vunpack.c.h.b16 %v2532
    %v2622 = vunpack.c.l.b16 %v2533
    %v2623 = vunpack.c.h.b16 %v2533
    %v2624 = vunpack.c.l.b16 %v2534
    %v2625 = vunpack.c.h.b16 %v2534
    %v2626 = vunpack.c.l.b16 %v2535
    %v2627 = vunpack.c.h.b16 %v2535
    %v2628 = vunpack.c.l.b16 %v2536
    %v2629 = vunpack.c.h.b16 %v2536
    %v2630 = vunpack.c.l.b16 %v2537
    %v2631 = vunpack.c.h.b16 %v2537
    %v2632 = vunpack.c.l.b16 %v2538
    %v2633 = vunpack.c.h.b16 %v2538
    %v2634 = vunpack.c.l.b16 %v2539
    %v2635 = vunpack.c.h.b16 %v2539
    %v2636 = vpack.c.b16 %v2576, %v2572
    %v2637 = vpack.c.b16 %v2577, %v2573
    %v2638 = vpack.c.b16 %v2578, %v2574
    %v2639 = vpack.c.b16 %v2579, %v2575
    %v2640 = vpack.c.b16 %v2584, %v2580
    %v2641 = vpack.c.b16 %v2585, %v2581
    %v2642 = vpack.c.b16 %v2586, %v2582
    %v2643 = vpack.c.b16 %v2587, %v2583
    %v2644 = vpack.c.b16 %v2592, %v2588
    %v2645 = vpack.c.b16 %v2593, %v2589
    %v2646 = vpack.c.b16 %v2594, %v2590
    %v2647 = vpack.c.b16 %v2595, %v2591
    %v2648 = vpack.c.b16 %v2600, %v2596
    %v2649 = vpack.c.b16 %v2601, %v2597
    %v2650 = vpack.c.b16 %v2602, %v2598
    %v2651 = vpack.c.b16 %v2603, %v2599
    %v2652 = vpack.c.b16 %v2608, %v2604
    %v2653 = vpack.c.b16 %v2609, %v2605
    %v2654 = vpack.c.b16 %v2610, %v2606
    %v2655 = vpack.c.b16 %v2611, %v2607
    %v2656 = vpack.c.b16 %v2616, %v2612
    %v2657 = vpack.c.b16 %v2617, %v2613
    %v2658 = vpack.c.b16 %v2618, %v2614
    %v2659 = vpack.c.b16 %v2619, %v2615
    %v2660 = vpack.c.b16 %v2624, %v2620
    %v2661 = vpack.c.b16 %v2625, %v2621
    %v2662 = vpack.c.b16 %v2626, %v2622
    %v2663 = vpack.c.b16 %v2627, %v2623
    %v2664 = vpack.c.b16 %v2632, %v2628
    %v2665 = vpack.c.b16 %v2633, %v2629
    %v2666 = vpack.c.b16 %v2634, %v2630
    %v2667 = vpack.c.b16 %v2635, %v2631
    %2700 = vmatpush.bf16.msra.mxu0 %v2664
    %2701 = vmatpush.bf16.msra.mxu0 %v2660
    %2702 = vmatpush.bf16.msra.mxu0 %v2656
    %2703 = vmatpush.bf16.msra.mxu0 %v2652
    %2704 = vmatpush.bf16.msra.mxu0 %v2648
    %2705 = vmatpush.bf16.msra.mxu0 %v2644
    %2706 = vmatpush.bf16.msra.mxu0 %v2640
    %2707 = vmatpush.bf16.msra.mxu0 %v2636
    %2708 = vmatmul.bf16.gmra.mxu0 %v2255
    %v2709 = vpop.f32.mrf.mxu0
    %v2710 = vadd.f32 0.0, %v2709
    %v2711 = vpop.f32.mrf.mxu0
    %2712 = vdwg.mxu0
    %2713 = vmatpush.bf16.msra.mxu0 %v2665
    %2714 = vmatpush.bf16.msra.mxu0 %v2661
    %2715 = vmatpush.bf16.msra.mxu0 %v2657
    %2716 = vmatpush.bf16.msra.mxu0 %v2653
    %2717 = vmatpush.bf16.msra.mxu0 %v2649
    %2718 = vmatpush.bf16.msra.mxu0 %v2645
    %2719 = vmatpush.bf16.msra.mxu0 %v2641
    %2720 = vmatpush.bf16.msra.mxu0 %v2637
    %2721 = vmatmul.bf16.gmra.mxu0 %v2255
    %v2722 = vpop.f32.mrf.mxu0
    %v2723 = vadd.f32 0.0, %v2722
    %v2724 = vpop.f32.mrf.mxu0
    %2725 = vdwg.mxu0
    %2726 = vmatpush.bf16.msra.mxu0 %v2666
    %2727 = vmatpush.bf16.msra.mxu0 %v2662
    %2728 = vmatpush.bf16.msra.mxu0 %v2658
    %2729 = vmatpush.bf16.msra.mxu0 %v2654
    %2730 = vmatpush.bf16.msra.mxu0 %v2650
    %2731 = vmatpush.bf16.msra.mxu0 %v2646
    %2732 = vmatpush.bf16.msra.mxu0 %v2642
    %2733 = vmatpush.bf16.msra.mxu0 %v2638
    %2734 = vmatmul.bf16.gmra.mxu0 %v2255
    %v2735 = vpop.f32.mrf.mxu0
    %v2736 = vadd.f32 0.0, %v2735
    %v2737 = vpop.f32.mrf.mxu0
    %2738 = vdwg.mxu0
    %2739 = vmatpush.bf16.msra.mxu0 %v2667
    %2740 = vmatpush.bf16.msra.mxu0 %v2663
    %2741 = vmatpush.bf16.msra.mxu0 %v2659
    %2742 = vmatpush.bf16.msra.mxu0 %v2655
    %2743 = vmatpush.bf16.msra.mxu0 %v2651
    %2744 = vmatpush.bf16.msra.mxu0 %v2647
    %2745 = vmatpush.bf16.msra.mxu0 %v2643
    %2746 = vmatpush.bf16.msra.mxu0 %v2639
    %2747 = vmatmul.bf16.gmra.mxu0 %v2255
    %v2748 = vpop.f32.mrf.mxu0
    %v2749 = vadd.f32 0.0, %v2748
    %v2750 = vpop.f32.mrf.mxu0
    %2751 = vdwg.mxu0
    %v2752 = vadd.f32 %v2504, %v2710
    %v2753 = vadd.f32 %v2505, %v2723
    %v2754 = vadd.f32 %v2506, %v2736
    %v2755 = vadd.f32 %v2507, %v2749
    %v2756 = vmul.f32 %v2752, 0.5
    %v2757 = vtanh.pop %v2756
    %v2758 = vadd.f32 %v2757, 1.0
    %v2759 = vmul.f32 %v2758, 0.5
    %v2760 = vmul.f32 %v2753, 0.5
    %v2761 = vtanh.pop %v2760
    %v2762 = vadd.f32 %v2761, 1.0
    %v2763 = vmul.f32 %v2762, 0.5
    %v2764 = vtanh.pop %v2754
    %v2765 = vmul.f32 %v2755, 0.5
    %v2766 = vtanh.pop %v2765
    %v2767 = vadd.f32 %v2766, 1.0
    %v2768 = vmul.f32 %v2767, 0.5
    %v2769 = vmul.f32 %v2763, %v2252
    %v2770 = vmul.f32 %v2759, %v2764
    %v2771 = vadd.f32 %v2769, %v2770
    %v2772 = vtanh.pop %v2771
    %v2773 = vmul.f32 %v2768, %v2772
    %v2774 = vpack.c.bf16 %v2773, %v2773
    %v2775 = vld [vmem:[#allocation4] sm:$0xff]
    %v2776 = vld [vmem:[#allocation4 + $0x8] sm:$0xff]
    %v2777 = vld [vmem:[#allocation4 + $0x10] sm:$0xff]
    %v2778 = vld [vmem:[#allocation4 + $0x18] sm:$0xff]
    %v2779 = vld [vmem:[#allocation4 + $0x20] sm:$0xff]
    %v2780 = vld [vmem:[#allocation4 + $0x28] sm:$0xff]
    %v2781 = vld [vmem:[#allocation4 + $0x30] sm:$0xff]
    %v2782 = vld [vmem:[#allocation4 + $0x38] sm:$0xff]
    %v2783 = vld [vmem:[#allocation4 + $0x40] sm:$0xff]
    %v2784 = vld [vmem:[#allocation4 + $0x48] sm:$0xff]
    %v2785 = vld [vmem:[#allocation4 + $0x50] sm:$0xff]
    %v2786 = vld [vmem:[#allocation4 + $0x58] sm:$0xff]
    %v2787 = vld [vmem:[#allocation4 + $0x60] sm:$0xff]
    %v2788 = vld [vmem:[#allocation4 + $0x68] sm:$0xff]
    %v2789 = vld [vmem:[#allocation4 + $0x70] sm:$0xff]
    %v2790 = vld [vmem:[#allocation4 + $0x78] sm:$0xff]
    %v2791 = vld [vmem:[#allocation4 + $0x80] sm:$0xff]
    %v2792 = vld [vmem:[#allocation4 + $0x88] sm:$0xff]
    %v2793 = vld [vmem:[#allocation4 + $0x90] sm:$0xff]
    %v2794 = vld [vmem:[#allocation4 + $0x98] sm:$0xff]
    %v2795 = vld [vmem:[#allocation4 + $0xa0] sm:$0xff]
    %v2796 = vld [vmem:[#allocation4 + $0xa8] sm:$0xff]
    %v2797 = vld [vmem:[#allocation4 + $0xb0] sm:$0xff]
    %v2798 = vld [vmem:[#allocation4 + $0xb8] sm:$0xff]
    %v2799 = vld [vmem:[#allocation4 + $0xc0] sm:$0xff]
    %v2800 = vld [vmem:[#allocation4 + $0xc8] sm:$0xff]
    %v2801 = vld [vmem:[#allocation4 + $0xd0] sm:$0xff]
    %v2802 = vld [vmem:[#allocation4 + $0xd8] sm:$0xff]
    %v2803 = vld [vmem:[#allocation4 + $0xe0] sm:$0xff]
    %v2804 = vld [vmem:[#allocation4 + $0xe8] sm:$0xff]
    %v2805 = vld [vmem:[#allocation4 + $0xf0] sm:$0xff]
    %v2806 = vld [vmem:[#allocation4 + $0xf8] sm:$0xff]
    %v2839 = vunpack.c.l.b16 %v2775
    %v2840 = vunpack.c.h.b16 %v2775
    %v2841 = vunpack.c.l.b16 %v2776
    %v2842 = vunpack.c.h.b16 %v2776
    %v2843 = vunpack.c.l.b16 %v2777
    %v2844 = vunpack.c.h.b16 %v2777
    %v2845 = vunpack.c.l.b16 %v2778
    %v2846 = vunpack.c.h.b16 %v2778
    %v2847 = vunpack.c.l.b16 %v2779
    %v2848 = vunpack.c.h.b16 %v2779
    %v2849 = vunpack.c.l.b16 %v2780
    %v2850 = vunpack.c.h.b16 %v2780
    %v2851 = vunpack.c.l.b16 %v2781
    %v2852 = vunpack.c.h.b16 %v2781
    %v2853 = vunpack.c.l.b16 %v2782
    %v2854 = vunpack.c.h.b16 %v2782
    %v2855 = vunpack.c.l.b16 %v2783
    %v2856 = vunpack.c.h.b16 %v2783
    %v2857 = vunpack.c.l.b16 %v2784
    %v2858 = vunpack.c.h.b16 %v2784
    %v2859 = vunpack.c.l.b16 %v2785
    %v2860 = vunpack.c.h.b16 %v2785
    %v2861 = vunpack.c.l.b16 %v2786
    %v2862 = vunpack.c.h.b16 %v2786
    %v2863 = vunpack.c.l.b16 %v2787
    %v2864 = vunpack.c.h.b16 %v2787
    %v2865 = vunpack.c.l.b16 %v2788
    %v2866 = vunpack.c.h.b16 %v2788
    %v2867 = vunpack.c.l.b16 %v2789
    %v2868 = vunpack.c.h.b16 %v2789
    %v2869 = vunpack.c.l.b16 %v2790
    %v2870 = vunpack.c.h.b16 %v2790
    %v2871 = vunpack.c.l.b16 %v2791
    %v2872 = vunpack.c.h.b16 %v2791
    %v2873 = vunpack.c.l.b16 %v2792
    %v2874 = vunpack.c.h.b16 %v2792
    %v2875 = vunpack.c.l.b16 %v2793
    %v2876 = vunpack.c.h.b16 %v2793
    %v2877 = vunpack.c.l.b16 %v2794
    %v2878 = vunpack.c.h.b16 %v2794
    %v2879 = vunpack.c.l.b16 %v2795
    %v2880 = vunpack.c.h.b16 %v2795
    %v2881 = vunpack.c.l.b16 %v2796
    %v2882 = vunpack.c.h.b16 %v2796
    %v2883 = vunpack.c.l.b16 %v2797
    %v2884 = vunpack.c.h.b16 %v2797
    %v2885 = vunpack.c.l.b16 %v2798
    %v2886 = vunpack.c.h.b16 %v2798
    %v2887 = vunpack.c.l.b16 %v2799
    %v2888 = vunpack.c.h.b16 %v2799
    %v2889 = vunpack.c.l.b16 %v2800
    %v2890 = vunpack.c.h.b16 %v2800
    %v2891 = vunpack.c.l.b16 %v2801
    %v2892 = vunpack.c.h.b16 %v2801
    %v2893 = vunpack.c.l.b16 %v2802
    %v2894 = vunpack.c.h.b16 %v2802
    %v2895 = vunpack.c.l.b16 %v2803
    %v2896 = vunpack.c.h.b16 %v2803
    %v2897 = vunpack.c.l.b16 %v2804
    %v2898 = vunpack.c.h.b16 %v2804
    %v2899 = vunpack.c.l.b16 %v2805
    %v2900 = vunpack.c.h.b16 %v2805
    %v2901 = vunpack.c.l.b16 %v2806
    %v2902 = vunpack.c.h.b16 %v2806
    %v2903 = vpack.c.b16 %v2843, %v2839
    %v2904 = vpack.c.b16 %v2844, %v2840
    %v2905 = vpack.c.b16 %v2845, %v2841
    %v2906 = vpack.c.b16 %v2846, %v2842
    %v2907 = vpack.c.b16 %v2851, %v2847
    %v2908 = vpack.c.b16 %v2852, %v2848
    %v2909 = vpack.c.b16 %v2853, %v2849
    %v2910 = vpack.c.b16 %v2854, %v2850
    %v2911 = vpack.c.b16 %v2859, %v2855
    %v2912 = vpack.c.b16 %v2860, %v2856
    %v2913 = vpack.c.b16 %v2861, %v2857
    %v2914 = vpack.c.b16 %v2862, %v2858
    %v2915 = vpack.c.b16 %v2867, %v2863
    %v2916 = vpack.c.b16 %v2868, %v2864
    %v2917 = vpack.c.b16 %v2869, %v2865
    %v2918 = vpack.c.b16 %v2870, %v2866
    %v2919 = vpack.c.b16 %v2875, %v2871
    %v2920 = vpack.c.b16 %v2876, %v2872
    %v2921 = vpack.c.b16 %v2877, %v2873
    %v2922 = vpack.c.b16 %v2878, %v2874
    %v2923 = vpack.c.b16 %v2883, %v2879
    %v2924 = vpack.c.b16 %v2884, %v2880
    %v2925 = vpack.c.b16 %v2885, %v2881
    %v2926 = vpack.c.b16 %v2886, %v2882
    %v2927 = vpack.c.b16 %v2891, %v2887
    %v2928 = vpack.c.b16 %v2892, %v2888
    %v2929 = vpack.c.b16 %v2893, %v2889
    %v2930 = vpack.c.b16 %v2894, %v2890
    %v2931 = vpack.c.b16 %v2899, %v2895
    %v2932 = vpack.c.b16 %v2900, %v2896
    %v2933 = vpack.c.b16 %v2901, %v2897
    %v2934 = vpack.c.b16 %v2902, %v2898
    %2967 = vmatpush.bf16.msra.mxu0 %v2931
    %2968 = vmatpush.bf16.msra.mxu0 %v2927
    %2969 = vmatpush.bf16.msra.mxu0 %v2923
    %2970 = vmatpush.bf16.msra.mxu0 %v2919
    %2971 = vmatpush.bf16.msra.mxu0 %v2915
    %2972 = vmatpush.bf16.msra.mxu0 %v2911
    %2973 = vmatpush.bf16.msra.mxu0 %v2907
    %2974 = vmatpush.bf16.msra.mxu0 %v2903
    %2975 = vmatmul.bf16.gmra.mxu0 %v2774
    %v2976 = vpop.f32.mrf.mxu0
    %v2977 = vadd.f32 %v420, %v2976
    %v2978 = vpop.f32.mrf.mxu0
    %2979 = vdwg.mxu0
    %2980 = vmatpush.bf16.msra.mxu0 %v2932
    %2981 = vmatpush.bf16.msra.mxu0 %v2928
    %2982 = vmatpush.bf16.msra.mxu0 %v2924
    %2983 = vmatpush.bf16.msra.mxu0 %v2920
    %2984 = vmatpush.bf16.msra.mxu0 %v2916
    %2985 = vmatpush.bf16.msra.mxu0 %v2912
    %2986 = vmatpush.bf16.msra.mxu0 %v2908
    %2987 = vmatpush.bf16.msra.mxu0 %v2904
    %2988 = vmatmul.bf16.gmra.mxu0 %v2774
    %v2989 = vpop.f32.mrf.mxu0
    %v2990 = vadd.f32 %v421, %v2989
    %v2991 = vpop.f32.mrf.mxu0
    %2992 = vdwg.mxu0
    %2993 = vmatpush.bf16.msra.mxu0 %v2933
    %2994 = vmatpush.bf16.msra.mxu0 %v2929
    %2995 = vmatpush.bf16.msra.mxu0 %v2925
    %2996 = vmatpush.bf16.msra.mxu0 %v2921
    %2997 = vmatpush.bf16.msra.mxu0 %v2917
    %2998 = vmatpush.bf16.msra.mxu0 %v2913
    %2999 = vmatpush.bf16.msra.mxu0 %v2909
    %3000 = vmatpush.bf16.msra.mxu0 %v2905
    %3001 = vmatmul.bf16.gmra.mxu0 %v2774
    %v3002 = vpop.f32.mrf.mxu0
    %v3003 = vadd.f32 %v422, %v3002
    %v3004 = vpop.f32.mrf.mxu0
    %3005 = vdwg.mxu0
    %3006 = vmatpush.bf16.msra.mxu0 %v2934
    %3007 = vmatpush.bf16.msra.mxu0 %v2930
    %3008 = vmatpush.bf16.msra.mxu0 %v2926
    %3009 = vmatpush.bf16.msra.mxu0 %v2922
    %3010 = vmatpush.bf16.msra.mxu0 %v2918
    %3011 = vmatpush.bf16.msra.mxu0 %v2914
    %3012 = vmatpush.bf16.msra.mxu0 %v2910
    %3013 = vmatpush.bf16.msra.mxu0 %v2906
    %3014 = vmatmul.bf16.gmra.mxu0 %v2774
    %v3015 = vpop.f32.mrf.mxu0
    %v3016 = vadd.f32 %v423, %v3015
    %v3017 = vpop.f32.mrf.mxu0
    %3018 = vdwg.mxu0
    %3019 = vst [vmem:[#allocation3 + $0x80] sm:$0xff] %v2977
    %3020 = vst [vmem:[#allocation3 + $0x88] sm:$0xff] %v2990
    %3021 = vst [vmem:[#allocation3 + $0x90] sm:$0xff] %v3003
    %3022 = vst [vmem:[#allocation3 + $0x98] sm:$0xff] %v3016
    %v3023 = vld [vmem:[#allocation2 + $0xa0] sm:$0xff]
    %v3024 = vld [vmem:[#allocation2 + $0xa8] sm:$0xff]
    %v3025 = vld [vmem:[#allocation2 + $0xb0] sm:$0xff]
    %v3026 = vld [vmem:[#allocation2 + $0xb8] sm:$0xff]
    %v3027 = vld [vmem:[#allocation10] sm:$0xff]
    %v3028 = vld [vmem:[#allocation10 + $0x8] sm:$0xff]
    %v3029 = vld [vmem:[#allocation10 + $0x10] sm:$0xff]
    %v3030 = vld [vmem:[#allocation10 + $0x18] sm:$0xff]
    %v3031 = vld [vmem:[#allocation10 + $0x20] sm:$0xff]
    %v3032 = vld [vmem:[#allocation10 + $0x28] sm:$0xff]
    %v3033 = vld [vmem:[#allocation10 + $0x30] sm:$0xff]
    %v3034 = vld [vmem:[#allocation10 + $0x38] sm:$0xff]
    %v3035 = vld [vmem:[#allocation10 + $0x40] sm:$0xff]
    %v3036 = vld [vmem:[#allocation10 + $0x48] sm:$0xff]
    %v3037 = vld [vmem:[#allocation10 + $0x50] sm:$0xff]
    %v3038 = vld [vmem:[#allocation10 + $0x58] sm:$0xff]
    %v3039 = vld [vmem:[#allocation10 + $0x60] sm:$0xff]
    %v3040 = vld [vmem:[#allocation10 + $0x68] sm:$0xff]
    %v3041 = vld [vmem:[#allocation10 + $0x70] sm:$0xff]
    %v3042 = vld [vmem:[#allocation10 + $0x78] sm:$0xff]
    %v3043 = vld [vmem:[#allocation10 + $0x80] sm:$0xff]
    %v3044 = vld [vmem:[#allocation10 + $0x88] sm:$0xff]
    %v3045 = vld [vmem:[#allocation10 + $0x90] sm:$0xff]
    %v3046 = vld [vmem:[#allocation10 + $0x98] sm:$0xff]
    %v3047 = vld [vmem:[#allocation10 + $0xa0] sm:$0xff]
    %v3048 = vld [vmem:[#allocation10 + $0xa8] sm:$0xff]
    %v3049 = vld [vmem:[#allocation10 + $0xb0] sm:$0xff]
    %v3050 = vld [vmem:[#allocation10 + $0xb8] sm:$0xff]
    %v3051 = vld [vmem:[#allocation10 + $0xc0] sm:$0xff]
    %v3052 = vld [vmem:[#allocation10 + $0xc8] sm:$0xff]
    %v3053 = vld [vmem:[#allocation10 + $0xd0] sm:$0xff]
    %v3054 = vld [vmem:[#allocation10 + $0xd8] sm:$0xff]
    %v3055 = vld [vmem:[#allocation10 + $0xe0] sm:$0xff]
    %v3056 = vld [vmem:[#allocation10 + $0xe8] sm:$0xff]
    %v3057 = vld [vmem:[#allocation10 + $0xf0] sm:$0xff]
    %v3058 = vld [vmem:[#allocation10 + $0xf8] sm:$0xff]
    %v3091 = vunpack.c.l.b16 %v3027
    %v3092 = vunpack.c.h.b16 %v3027
    %v3093 = vunpack.c.l.b16 %v3028
    %v3094 = vunpack.c.h.b16 %v3028
    %v3095 = vunpack.c.l.b16 %v3029
    %v3096 = vunpack.c.h.b16 %v3029
    %v3097 = vunpack.c.l.b16 %v3030
    %v3098 = vunpack.c.h.b16 %v3030
    %v3099 = vunpack.c.l.b16 %v3031
    %v3100 = vunpack.c.h.b16 %v3031
    %v3101 = vunpack.c.l.b16 %v3032
    %v3102 = vunpack.c.h.b16 %v3032
    %v3103 = vunpack.c.l.b16 %v3033
    %v3104 = vunpack.c.h.b16 %v3033
    %v3105 = vunpack.c.l.b16 %v3034
    %v3106 = vunpack.c.h.b16 %v3034
    %v3107 = vunpack.c.l.b16 %v3035
    %v3108 = vunpack.c.h.b16 %v3035
    %v3109 = vunpack.c.l.b16 %v3036
    %v3110 = vunpack.c.h.b16 %v3036
    %v3111 = vunpack.c.l.b16 %v3037
    %v3112 = vunpack.c.h.b16 %v3037
    %v3113 = vunpack.c.l.b16 %v3038
    %v3114 = vunpack.c.h.b16 %v3038
    %v3115 = vunpack.c.l.b16 %v3039
    %v3116 = vunpack.c.h.b16 %v3039
    %v3117 = vunpack.c.l.b16 %v3040
    %v3118 = vunpack.c.h.b16 %v3040
    %v3119 = vunpack.c.l.b16 %v3041
    %v3120 = vunpack.c.h.b16 %v3041
    %v3121 = vunpack.c.l.b16 %v3042
    %v3122 = vunpack.c.h.b16 %v3042
    %v3123 = vunpack.c.l.b16 %v3043
    %v3124 = vunpack.c.h.b16 %v3043
    %v3125 = vunpack.c.l.b16 %v3044
    %v3126 = vunpack.c.h.b16 %v3044
    %v3127 = vunpack.c.l.b16 %v3045
    %v3128 = vunpack.c.h.b16 %v3045
    %v3129 = vunpack.c.l.b16 %v3046
    %v3130 = vunpack.c.h.b16 %v3046
    %v3131 = vunpack.c.l.b16 %v3047
    %v3132 = vunpack.c.h.b16 %v3047
    %v3133 = vunpack.c.l.b16 %v3048
    %v3134 = vunpack.c.h.b16 %v3048
    %v3135 = vunpack.c.l.b16 %v3049
    %v3136 = vunpack.c.h.b16 %v3049
    %v3137 = vunpack.c.l.b16 %v3050
    %v3138 = vunpack.c.h.b16 %v3050
    %v3139 = vunpack.c.l.b16 %v3051
    %v3140 = vunpack.c.h.b16 %v3051
    %v3141 = vunpack.c.l.b16 %v3052
    %v3142 = vunpack.c.h.b16 %v3052
    %v3143 = vunpack.c.l.b16 %v3053
    %v3144 = vunpack.c.h.b16 %v3053
    %v3145 = vunpack.c.l.b16 %v3054
    %v3146 = vunpack.c.h.b16 %v3054
    %v3147 = vunpack.c.l.b16 %v3055
    %v3148 = vunpack.c.h.b16 %v3055
    %v3149 = vunpack.c.l.b16 %v3056
    %v3150 = vunpack.c.h.b16 %v3056
    %v3151 = vunpack.c.l.b16 %v3057
    %v3152 = vunpack.c.h.b16 %v3057
    %v3153 = vunpack.c.l.b16 %v3058
    %v3154 = vunpack.c.h.b16 %v3058
    %v3155 = vpack.c.b16 %v3095, %v3091
    %v3156 = vpack.c.b16 %v3096, %v3092
    %v3157 = vpack.c.b16 %v3097, %v3093
    %v3158 = vpack.c.b16 %v3098, %v3094
    %v3159 = vpack.c.b16 %v3103, %v3099
    %v3160 = vpack.c.b16 %v3104, %v3100
    %v3161 = vpack.c.b16 %v3105, %v3101
    %v3162 = vpack.c.b16 %v3106, %v3102
    %v3163 = vpack.c.b16 %v3111, %v3107
    %v3164 = vpack.c.b16 %v3112, %v3108
    %v3165 = vpack.c.b16 %v3113, %v3109
    %v3166 = vpack.c.b16 %v3114, %v3110
    %v3167 = vpack.c.b16 %v3119, %v3115
    %v3168 = vpack.c.b16 %v3120, %v3116
    %v3169 = vpack.c.b16 %v3121, %v3117
    %v3170 = vpack.c.b16 %v3122, %v3118
    %v3171 = vpack.c.b16 %v3127, %v3123
    %v3172 = vpack.c.b16 %v3128, %v3124
    %v3173 = vpack.c.b16 %v3129, %v3125
    %v3174 = vpack.c.b16 %v3130, %v3126
    %v3175 = vpack.c.b16 %v3135, %v3131
    %v3176 = vpack.c.b16 %v3136, %v3132
    %v3177 = vpack.c.b16 %v3137, %v3133
    %v3178 = vpack.c.b16 %v3138, %v3134
    %v3179 = vpack.c.b16 %v3143, %v3139
    %v3180 = vpack.c.b16 %v3144, %v3140
    %v3181 = vpack.c.b16 %v3145, %v3141
    %v3182 = vpack.c.b16 %v3146, %v3142
    %v3183 = vpack.c.b16 %v3151, %v3147
    %v3184 = vpack.c.b16 %v3152, %v3148
    %v3185 = vpack.c.b16 %v3153, %v3149
    %v3186 = vpack.c.b16 %v3154, %v3150
    %3219 = vmatpush.bf16.msra.mxu0 %v3183
    %3220 = vmatpush.bf16.msra.mxu0 %v3179
    %3221 = vmatpush.bf16.msra.mxu0 %v3175
    %3222 = vmatpush.bf16.msra.mxu0 %v3171
    %3223 = vmatpush.bf16.msra.mxu0 %v3167
    %3224 = vmatpush.bf16.msra.mxu0 %v3163
    %3225 = vmatpush.bf16.msra.mxu0 %v3159
    %3226 = vmatpush.bf16.msra.mxu0 %v3155
    %3227 = vmatmul.bf16.gmra.mxu0 %v2774
    %v3228 = vpop.f32.mrf.mxu0
    %v3229 = vadd.f32 0.0, %v3228
    %v3230 = vpop.f32.mrf.mxu0
    %3231 = vdwg.mxu0
    %3232 = vmatpush.bf16.msra.mxu0 %v3184
    %3233 = vmatpush.bf16.msra.mxu0 %v3180
    %3234 = vmatpush.bf16.msra.mxu0 %v3176
    %3235 = vmatpush.bf16.msra.mxu0 %v3172
    %3236 = vmatpush.bf16.msra.mxu0 %v3168
    %3237 = vmatpush.bf16.msra.mxu0 %v3164
    %3238 = vmatpush.bf16.msra.mxu0 %v3160
    %3239 = vmatpush.bf16.msra.mxu0 %v3156
    %3240 = vmatmul.bf16.gmra.mxu0 %v2774
    %v3241 = vpop.f32.mrf.mxu0
    %v3242 = vadd.f32 0.0, %v3241
    %v3243 = vpop.f32.mrf.mxu0
    %3244 = vdwg.mxu0
    %3245 = vmatpush.bf16.msra.mxu0 %v3185
    %3246 = vmatpush.bf16.msra.mxu0 %v3181
    %3247 = vmatpush.bf16.msra.mxu0 %v3177
    %3248 = vmatpush.bf16.msra.mxu0 %v3173
    %3249 = vmatpush.bf16.msra.mxu0 %v3169
    %3250 = vmatpush.bf16.msra.mxu0 %v3165
    %3251 = vmatpush.bf16.msra.mxu0 %v3161
    %3252 = vmatpush.bf16.msra.mxu0 %v3157
    %3253 = vmatmul.bf16.gmra.mxu0 %v2774
    %v3254 = vpop.f32.mrf.mxu0
    %v3255 = vadd.f32 0.0, %v3254
    %v3256 = vpop.f32.mrf.mxu0
    %3257 = vdwg.mxu0
    %3258 = vmatpush.bf16.msra.mxu0 %v3186
    %3259 = vmatpush.bf16.msra.mxu0 %v3182
    %3260 = vmatpush.bf16.msra.mxu0 %v3178
    %3261 = vmatpush.bf16.msra.mxu0 %v3174
    %3262 = vmatpush.bf16.msra.mxu0 %v3170
    %3263 = vmatpush.bf16.msra.mxu0 %v3166
    %3264 = vmatpush.bf16.msra.mxu0 %v3162
    %3265 = vmatpush.bf16.msra.mxu0 %v3158
    %3266 = vmatmul.bf16.gmra.mxu0 %v2774
    %v3267 = vpop.f32.mrf.mxu0
    %v3268 = vadd.f32 0.0, %v3267
    %v3269 = vpop.f32.mrf.mxu0
    %3270 = vdwg.mxu0
    %v3271 = vadd.f32 %v3023, %v3229
    %v3272 = vadd.f32 %v3024, %v3242
    %v3273 = vadd.f32 %v3025, %v3255
    %v3274 = vadd.f32 %v3026, %v3268
    %v3275 = vmul.f32 %v3271, 0.5
    %v3276 = vtanh.pop %v3275
    %v3277 = vadd.f32 %v3276, 1.0
    %v3278 = vmul.f32 %v3277, 0.5
    %v3279 = vmul.f32 %v3272, 0.5
    %v3280 = vtanh.pop %v3279
    %v3281 = vadd.f32 %v3280, 1.0
    %v3282 = vmul.f32 %v3281, 0.5
    %v3283 = vtanh.pop %v3273
    %v3284 = vmul.f32 %v3274, 0.5
    %v3285 = vtanh.pop %v3284
    %v3286 = vadd.f32 %v3285, 1.0
    %v3287 = vmul.f32 %v3286, 0.5
    %v3288 = vmul.f32 %v3282, %v2771
    %v3289 = vmul.f32 %v3278, %v3283
    %v3290 = vadd.f32 %v3288, %v3289
    %v3291 = vtanh.pop %v3290
    %v3292 = vmul.f32 %v3287, %v3291
    %v3293 = vpack.c.bf16 %v3292, %v3292
    %v3294 = vld [vmem:[#allocation4] sm:$0xff]
    %v3295 = vld [vmem:[#allocation4 + $0x8] sm:$0xff]
    %v3296 = vld [vmem:[#allocation4 + $0x10] sm:$0xff]
    %v3297 = vld [vmem:[#allocation4 + $0x18] sm:$0xff]
    %v3298 = vld [vmem:[#allocation4 + $0x20] sm:$0xff]
    %v3299 = vld [vmem:[#allocation4 + $0x28] sm:$0xff]
    %v3300 = vld [vmem:[#allocation4 + $0x30] sm:$0xff]
    %v3301 = vld [vmem:[#allocation4 + $0x38] sm:$0xff]
    %v3302 = vld [vmem:[#allocation4 + $0x40] sm:$0xff]
    %v3303 = vld [vmem:[#allocation4 + $0x48] sm:$0xff]
    %v3304 = vld [vmem:[#allocation4 + $0x50] sm:$0xff]
    %v3305 = vld [vmem:[#allocation4 + $0x58] sm:$0xff]
    %v3306 = vld [vmem:[#allocation4 + $0x60] sm:$0xff]
    %v3307 = vld [vmem:[#allocation4 + $0x68] sm:$0xff]
    %v3308 = vld [vmem:[#allocation4 + $0x70] sm:$0xff]
    %v3309 = vld [vmem:[#allocation4 + $0x78] sm:$0xff]
    %v3310 = vld [vmem:[#allocation4 + $0x80] sm:$0xff]
    %v3311 = vld [vmem:[#allocation4 + $0x88] sm:$0xff]
    %v3312 = vld [vmem:[#allocation4 + $0x90] sm:$0xff]
    %v3313 = vld [vmem:[#allocation4 + $0x98] sm:$0xff]
    %v3314 = vld [vmem:[#allocation4 + $0xa0] sm:$0xff]
    %v3315 = vld [vmem:[#allocation4 + $0xa8] sm:$0xff]
    %v3316 = vld [vmem:[#allocation4 + $0xb0] sm:$0xff]
    %v3317 = vld [vmem:[#allocation4 + $0xb8] sm:$0xff]
    %v3318 = vld [vmem:[#allocation4 + $0xc0] sm:$0xff]
    %v3319 = vld [vmem:[#allocation4 + $0xc8] sm:$0xff]
    %v3320 = vld [vmem:[#allocation4 + $0xd0] sm:$0xff]
    %v3321 = vld [vmem:[#allocation4 + $0xd8] sm:$0xff]
    %v3322 = vld [vmem:[#allocation4 + $0xe0] sm:$0xff]
    %v3323 = vld [vmem:[#allocation4 + $0xe8] sm:$0xff]
    %v3324 = vld [vmem:[#allocation4 + $0xf0] sm:$0xff]
    %v3325 = vld [vmem:[#allocation4 + $0xf8] sm:$0xff]
    %v3358 = vunpack.c.l.b16 %v3294
    %v3359 = vunpack.c.h.b16 %v3294
    %v3360 = vunpack.c.l.b16 %v3295
    %v3361 = vunpack.c.h.b16 %v3295
    %v3362 = vunpack.c.l.b16 %v3296
    %v3363 = vunpack.c.h.b16 %v3296
    %v3364 = vunpack.c.l.b16 %v3297
    %v3365 = vunpack.c.h.b16 %v3297
    %v3366 = vunpack.c.l.b16 %v3298
    %v3367 = vunpack.c.h.b16 %v3298
    %v3368 = vunpack.c.l.b16 %v3299
    %v3369 = vunpack.c.h.b16 %v3299
    %v3370 = vunpack.c.l.b16 %v3300
    %v3371 = vunpack.c.h.b16 %v3300
    %v3372 = vunpack.c.l.b16 %v3301
    %v3373 = vunpack.c.h.b16 %v3301
    %v3374 = vunpack.c.l.b16 %v3302
    %v3375 = vunpack.c.h.b16 %v3302
    %v3376 = vunpack.c.l.b16 %v3303
    %v3377 = vunpack.c.h.b16 %v3303
    %v3378 = vunpack.c.l.b16 %v3304
    %v3379 = vunpack.c.h.b16 %v3304
    %v3380 = vunpack.c.l.b16 %v3305
    %v3381 = vunpack.c.h.b16 %v3305
    %v3382 = vunpack.c.l.b16 %v3306
    %v3383 = vunpack.c.h.b16 %v3306
    %v3384 = vunpack.c.l.b16 %v3307
    %v3385 = vunpack.c.h.b16 %v3307
    %v3386 = vunpack.c.l.b16 %v3308
    %v3387 = vunpack.c.h.b16 %v3308
    %v3388 = vunpack.c.l.b16 %v3309
    %v3389 = vunpack.c.h.b16 %v3309
    %v3390 = vunpack.c.l.b16 %v3310
    %v3391 = vunpack.c.h.b16 %v3310
    %v3392 = vunpack.c.l.b16 %v3311
    %v3393 = vunpack.c.h.b16 %v3311
    %v3394 = vunpack.c.l.b16 %v3312
    %v3395 = vunpack.c.h.b16 %v3312
    %v3396 = vunpack.c.l.b16 %v3313
    %v3397 = vunpack.c.h.b16 %v3313
    %v3398 = vunpack.c.l.b16 %v3314
    %v3399 = vunpack.c.h.b16 %v3314
    %v3400 = vunpack.c.l.b16 %v3315
    %v3401 = vunpack.c.h.b16 %v3315
    %v3402 = vunpack.c.l.b16 %v3316
    %v3403 = vunpack.c.h.b16 %v3316
    %v3404 = vunpack.c.l.b16 %v3317
    %v3405 = vunpack.c.h.b16 %v3317
    %v3406 = vunpack.c.l.b16 %v3318
    %v3407 = vunpack.c.h.b16 %v3318
    %v3408 = vunpack.c.l.b16 %v3319
    %v3409 = vunpack.c.h.b16 %v3319
    %v3410 = vunpack.c.l.b16 %v3320
    %v3411 = vunpack.c.h.b16 %v3320
    %v3412 = vunpack.c.l.b16 %v3321
    %v3413 = vunpack.c.h.b16 %v3321
    %v3414 = vunpack.c.l.b16 %v3322
    %v3415 = vunpack.c.h.b16 %v3322
    %v3416 = vunpack.c.l.b16 %v3323
    %v3417 = vunpack.c.h.b16 %v3323
    %v3418 = vunpack.c.l.b16 %v3324
    %v3419 = vunpack.c.h.b16 %v3324
    %v3420 = vunpack.c.l.b16 %v3325
    %v3421 = vunpack.c.h.b16 %v3325
    %v3422 = vpack.c.b16 %v3362, %v3358
    %v3423 = vpack.c.b16 %v3363, %v3359
    %v3424 = vpack.c.b16 %v3364, %v3360
    %v3425 = vpack.c.b16 %v3365, %v3361
    %v3426 = vpack.c.b16 %v3370, %v3366
    %v3427 = vpack.c.b16 %v3371, %v3367
    %v3428 = vpack.c.b16 %v3372, %v3368
    %v3429 = vpack.c.b16 %v3373, %v3369
    %v3430 = vpack.c.b16 %v3378, %v3374
    %v3431 = vpack.c.b16 %v3379, %v3375
    %v3432 = vpack.c.b16 %v3380, %v3376
    %v3433 = vpack.c.b16 %v3381, %v3377
    %v3434 = vpack.c.b16 %v3386, %v3382
    %v3435 = vpack.c.b16 %v3387, %v3383
    %v3436 = vpack.c.b16 %v3388, %v3384
    %v3437 = vpack.c.b16 %v3389, %v3385
    %v3438 = vpack.c.b16 %v3394, %v3390
    %v3439 = vpack.c.b16 %v3395, %v3391
    %v3440 = vpack.c.b16 %v3396, %v3392
    %v3441 = vpack.c.b16 %v3397, %v3393
    %v3442 = vpack.c.b16 %v3402, %v3398
    %v3443 = vpack.c.b16 %v3403, %v3399
    %v3444 = vpack.c.b16 %v3404, %v3400
    %v3445 = vpack.c.b16 %v3405, %v3401
    %v3446 = vpack.c.b16 %v3410, %v3406
    %v3447 = vpack.c.b16 %v3411, %v3407
    %v3448 = vpack.c.b16 %v3412, %v3408
    %v3449 = vpack.c.b16 %v3413, %v3409
    %v3450 = vpack.c.b16 %v3418, %v3414
    %v3451 = vpack.c.b16 %v3419, %v3415
    %v3452 = vpack.c.b16 %v3420, %v3416
    %v3453 = vpack.c.b16 %v3421, %v3417
    %3486 = vmatpush.bf16.msra.mxu0 %v3450
    %3487 = vmatpush.bf16.msra.mxu0 %v3446
    %3488 = vmatpush.bf16.msra.mxu0 %v3442
    %3489 = vmatpush.bf16.msra.mxu0 %v3438
    %3490 = vmatpush.bf16.msra.mxu0 %v3434
    %3491 = vmatpush.bf16.msra.mxu0 %v3430
    %3492 = vmatpush.bf16.msra.mxu0 %v3426
    %3493 = vmatpush.bf16.msra.mxu0 %v3422
    %3494 = vmatmul.bf16.gmra.mxu0 %v3293
    %v3495 = vpop.f32.mrf.mxu0
    %v3496 = vadd.f32 %v420, %v3495
    %v3497 = vpop.f32.mrf.mxu0
    %3498 = vdwg.mxu0
    %3499 = vmatpush.bf16.msra.mxu0 %v3451
    %3500 = vmatpush.bf16.msra.mxu0 %v3447
    %3501 = vmatpush.bf16.msra.mxu0 %v3443
    %3502 = vmatpush.bf16.msra.mxu0 %v3439
    %3503 = vmatpush.bf16.msra.mxu0 %v3435
    %3504 = vmatpush.bf16.msra.mxu0 %v3431
    %3505 = vmatpush.bf16.msra.mxu0 %v3427
    %3506 = vmatpush.bf16.msra.mxu0 %v3423
    %3507 = vmatmul.bf16.gmra.mxu0 %v3293
    %v3508 = vpop.f32.mrf.mxu0
    %v3509 = vadd.f32 %v421, %v3508
    %v3510 = vpop.f32.mrf.mxu0
    %3511 = vdwg.mxu0
    %3512 = vmatpush.bf16.msra.mxu0 %v3452
    %3513 = vmatpush.bf16.msra.mxu0 %v3448
    %3514 = vmatpush.bf16.msra.mxu0 %v3444
    %3515 = vmatpush.bf16.msra.mxu0 %v3440
    %3516 = vmatpush.bf16.msra.mxu0 %v3436
    %3517 = vmatpush.bf16.msra.mxu0 %v3432
    %3518 = vmatpush.bf16.msra.mxu0 %v3428
    %3519 = vmatpush.bf16.msra.mxu0 %v3424
    %3520 = vmatmul.bf16.gmra.mxu0 %v3293
    %v3521 = vpop.f32.mrf.mxu0
    %v3522 = vadd.f32 %v422, %v3521
    %v3523 = vpop.f32.mrf.mxu0
    %3524 = vdwg.mxu0
    %3525 = vmatpush.bf16.msra.mxu0 %v3453
    %3526 = vmatpush.bf16.msra.mxu0 %v3449
    %3527 = vmatpush.bf16.msra.mxu0 %v3445
    %3528 = vmatpush.bf16.msra.mxu0 %v3441
    %3529 = vmatpush.bf16.msra.mxu0 %v3437
    %3530 = vmatpush.bf16.msra.mxu0 %v3433
    %3531 = vmatpush.bf16.msra.mxu0 %v3429
    %3532 = vmatpush.bf16.msra.mxu0 %v3425
    %3533 = vmatmul.bf16.gmra.mxu0 %v3293
    %v3534 = vpop.f32.mrf.mxu0
    %v3535 = vadd.f32 %v423, %v3534
    %v3536 = vpop.f32.mrf.mxu0
    %3537 = vdwg.mxu0
    %3538 = vst [vmem:[#allocation3 + $0xa0] sm:$0xff] %v3496
    %3539 = vst [vmem:[#allocation3 + $0xa8] sm:$0xff] %v3509
    %3540 = vst [vmem:[#allocation3 + $0xb0] sm:$0xff] %v3522
    %3541 = vst [vmem:[#allocation3 + $0xb8] sm:$0xff] %v3535
    %v3542 = vld [vmem:[#allocation2 + $0xc0] sm:$0xff]
    %v3543 = vld [vmem:[#allocation2 + $0xc8] sm:$0xff]
    %v3544 = vld [vmem:[#allocation2 + $0xd0] sm:$0xff]
    %v3545 = vld [vmem:[#allocation2 + $0xd8] sm:$0xff]
    %v3546 = vld [vmem:[#allocation10] sm:$0xff]
    %v3547 = vld [vmem:[#allocation10 + $0x8] sm:$0xff]
    %v3548 = vld [vmem:[#allocation10 + $0x10] sm:$0xff]
    %v3549 = vld [vmem:[#allocation10 + $0x18] sm:$0xff]
    %v3550 = vld [vmem:[#allocation10 + $0x20] sm:$0xff]
    %v3551 = vld [vmem:[#allocation10 + $0x28] sm:$0xff]
    %v3552 = vld [vmem:[#allocation10 + $0x30] sm:$0xff]
    %v3553 = vld [vmem:[#allocation10 + $0x38] sm:$0xff]
    %v3554 = vld [vmem:[#allocation10 + $0x40] sm:$0xff]
    %v3555 = vld [vmem:[#allocation10 + $0x48] sm:$0xff]
    %v3556 = vld [vmem:[#allocation10 + $0x50] sm:$0xff]
    %v3557 = vld [vmem:[#allocation10 + $0x58] sm:$0xff]
    %v3558 = vld [vmem:[#allocation10 + $0x60] sm:$0xff]
    %v3559 = vld [vmem:[#allocation10 + $0x68] sm:$0xff]
    %v3560 = vld [vmem:[#allocation10 + $0x70] sm:$0xff]
    %v3561 = vld [vmem:[#allocation10 + $0x78] sm:$0xff]
    %v3562 = vld [vmem:[#allocation10 + $0x80] sm:$0xff]
    %v3563 = vld [vmem:[#allocation10 + $0x88] sm:$0xff]
    %v3564 = vld [vmem:[#allocation10 + $0x90] sm:$0xff]
    %v3565 = vld [vmem:[#allocation10 + $0x98] sm:$0xff]
    %v3566 = vld [vmem:[#allocation10 + $0xa0] sm:$0xff]
    %v3567 = vld [vmem:[#allocation10 + $0xa8] sm:$0xff]
    %v3568 = vld [vmem:[#allocation10 + $0xb0] sm:$0xff]
    %v3569 = vld [vmem:[#allocation10 + $0xb8] sm:$0xff]
    %v3570 = vld [vmem:[#allocation10 + $0xc0] sm:$0xff]
    %v3571 = vld [vmem:[#allocation10 + $0xc8] sm:$0xff]
    %v3572 = vld [vmem:[#allocation10 + $0xd0] sm:$0xff]
    %v3573 = vld [vmem:[#allocation10 + $0xd8] sm:$0xff]
    %v3574 = vld [vmem:[#allocation10 + $0xe0] sm:$0xff]
    %v3575 = vld [vmem:[#allocation10 + $0xe8] sm:$0xff]
    %v3576 = vld [vmem:[#allocation10 + $0xf0] sm:$0xff]
    %v3577 = vld [vmem:[#allocation10 + $0xf8] sm:$0xff]
    %v3610 = vunpack.c.l.b16 %v3546
    %v3611 = vunpack.c.h.b16 %v3546
    %v3612 = vunpack.c.l.b16 %v3547
    %v3613 = vunpack.c.h.b16 %v3547
    %v3614 = vunpack.c.l.b16 %v3548
    %v3615 = vunpack.c.h.b16 %v3548
    %v3616 = vunpack.c.l.b16 %v3549
    %v3617 = vunpack.c.h.b16 %v3549
    %v3618 = vunpack.c.l.b16 %v3550
    %v3619 = vunpack.c.h.b16 %v3550
    %v3620 = vunpack.c.l.b16 %v3551
    %v3621 = vunpack.c.h.b16 %v3551
    %v3622 = vunpack.c.l.b16 %v3552
    %v3623 = vunpack.c.h.b16 %v3552
    %v3624 = vunpack.c.l.b16 %v3553
    %v3625 = vunpack.c.h.b16 %v3553
    %v3626 = vunpack.c.l.b16 %v3554
    %v3627 = vunpack.c.h.b16 %v3554
    %v3628 = vunpack.c.l.b16 %v3555
    %v3629 = vunpack.c.h.b16 %v3555
    %v3630 = vunpack.c.l.b16 %v3556
    %v3631 = vunpack.c.h.b16 %v3556
    %v3632 = vunpack.c.l.b16 %v3557
    %v3633 = vunpack.c.h.b16 %v3557
    %v3634 = vunpack.c.l.b16 %v3558
    %v3635 = vunpack.c.h.b16 %v3558
    %v3636 = vunpack.c.l.b16 %v3559
    %v3637 = vunpack.c.h.b16 %v3559
    %v3638 = vunpack.c.l.b16 %v3560
    %v3639 = vunpack.c.h.b16 %v3560
    %v3640 = vunpack.c.l.b16 %v3561
    %v3641 = vunpack.c.h.b16 %v3561
    %v3642 = vunpack.c.l.b16 %v3562
    %v3643 = vunpack.c.h.b16 %v3562
    %v3644 = vunpack.c.l.b16 %v3563
    %v3645 = vunpack.c.h.b16 %v3563
    %v3646 = vunpack.c.l.b16 %v3564
    %v3647 = vunpack.c.h.b16 %v3564
    %v3648 = vunpack.c.l.b16 %v3565
    %v3649 = vunpack.c.h.b16 %v3565
    %v3650 = vunpack.c.l.b16 %v3566
    %v3651 = vunpack.c.h.b16 %v3566
    %v3652 = vunpack.c.l.b16 %v3567
    %v3653 = vunpack.c.h.b16 %v3567
    %v3654 = vunpack.c.l.b16 %v3568
    %v3655 = vunpack.c.h.b16 %v3568
    %v3656 = vunpack.c.l.b16 %v3569
    %v3657 = vunpack.c.h.b16 %v3569
    %v3658 = vunpack.c.l.b16 %v3570
    %v3659 = vunpack.c.h.b16 %v3570
    %v3660 = vunpack.c.l.b16 %v3571
    %v3661 = vunpack.c.h.b16 %v3571
    %v3662 = vunpack.c.l.b16 %v3572
    %v3663 = vunpack.c.h.b16 %v3572
    %v3664 = vunpack.c.l.b16 %v3573
    %v3665 = vunpack.c.h.b16 %v3573
    %v3666 = vunpack.c.l.b16 %v3574
    %v3667 = vunpack.c.h.b16 %v3574
    %v3668 = vunpack.c.l.b16 %v3575
    %v3669 = vunpack.c.h.b16 %v3575
    %v3670 = vunpack.c.l.b16 %v3576
    %v3671 = vunpack.c.h.b16 %v3576
    %v3672 = vunpack.c.l.b16 %v3577
    %v3673 = vunpack.c.h.b16 %v3577
    %v3674 = vpack.c.b16 %v3614, %v3610
    %v3675 = vpack.c.b16 %v3615, %v3611
    %v3676 = vpack.c.b16 %v3616, %v3612
    %v3677 = vpack.c.b16 %v3617, %v3613
    %v3678 = vpack.c.b16 %v3622, %v3618
    %v3679 = vpack.c.b16 %v3623, %v3619
    %v3680 = vpack.c.b16 %v3624, %v3620
    %v3681 = vpack.c.b16 %v3625, %v3621
    %v3682 = vpack.c.b16 %v3630, %v3626
    %v3683 = vpack.c.b16 %v3631, %v3627
    %v3684 = vpack.c.b16 %v3632, %v3628
    %v3685 = vpack.c.b16 %v3633, %v3629
    %v3686 = vpack.c.b16 %v3638, %v3634
    %v3687 = vpack.c.b16 %v3639, %v3635
    %v3688 = vpack.c.b16 %v3640, %v3636
    %v3689 = vpack.c.b16 %v3641, %v3637
    %v3690 = vpack.c.b16 %v3646, %v3642
    %v3691 = vpack.c.b16 %v3647, %v3643
    %v3692 = vpack.c.b16 %v3648, %v3644
    %v3693 = vpack.c.b16 %v3649, %v3645
    %v3694 = vpack.c.b16 %v3654, %v3650
    %v3695 = vpack.c.b16 %v3655, %v3651
    %v3696 = vpack.c.b16 %v3656, %v3652
    %v3697 = vpack.c.b16 %v3657, %v3653
    %v3698 = vpack.c.b16 %v3662, %v3658
    %v3699 = vpack.c.b16 %v3663, %v3659
    %v3700 = vpack.c.b16 %v3664, %v3660
    %v3701 = vpack.c.b16 %v3665, %v3661
    %v3702 = vpack.c.b16 %v3670, %v3666
    %v3703 = vpack.c.b16 %v3671, %v3667
    %v3704 = vpack.c.b16 %v3672, %v3668
    %v3705 = vpack.c.b16 %v3673, %v3669
    %3738 = vmatpush.bf16.msra.mxu0 %v3702
    %3739 = vmatpush.bf16.msra.mxu0 %v3698
    %3740 = vmatpush.bf16.msra.mxu0 %v3694
    %3741 = vmatpush.bf16.msra.mxu0 %v3690
    %3742 = vmatpush.bf16.msra.mxu0 %v3686
    %3743 = vmatpush.bf16.msra.mxu0 %v3682
    %3744 = vmatpush.bf16.msra.mxu0 %v3678
    %3745 = vmatpush.bf16.msra.mxu0 %v3674
    %3746 = vmatmul.bf16.gmra.mxu0 %v3293
    %v3747 = vpop.f32.mrf.mxu0
    %v3748 = vadd.f32 0.0, %v3747
    %v3749 = vpop.f32.mrf.mxu0
    %3750 = vdwg.mxu0
    %3751 = vmatpush.bf16.msra.mxu0 %v3703
    %3752 = vmatpush.bf16.msra.mxu0 %v3699
    %3753 = vmatpush.bf16.msra.mxu0 %v3695
    %3754 = vmatpush.bf16.msra.mxu0 %v3691
    %3755 = vmatpush.bf16.msra.mxu0 %v3687
    %3756 = vmatpush.bf16.msra.mxu0 %v3683
    %3757 = vmatpush.bf16.msra.mxu0 %v3679
    %3758 = vmatpush.bf16.msra.mxu0 %v3675
    %3759 = vmatmul.bf16.gmra.mxu0 %v3293
    %v3760 = vpop.f32.mrf.mxu0
    %v3761 = vadd.f32 0.0, %v3760
    %v3762 = vpop.f32.mrf.mxu0
    %3763 = vdwg.mxu0
    %3764 = vmatpush.bf16.msra.mxu0 %v3704
    %3765 = vmatpush.bf16.msra.mxu0 %v3700
    %3766 = vmatpush.bf16.msra.mxu0 %v3696
    %3767 = vmatpush.bf16.msra.mxu0 %v3692
    %3768 = vmatpush.bf16.msra.mxu0 %v3688
    %3769 = vmatpush.bf16.msra.mxu0 %v3684
    %3770 = vmatpush.bf16.msra.mxu0 %v3680
    %3771 = vmatpush.bf16.msra.mxu0 %v3676
    %3772 = vmatmul.bf16.gmra.mxu0 %v3293
    %v3773 = vpop.f32.mrf.mxu0
    %v3774 = vadd.f32 0.0, %v3773
    %v3775 = vpop.f32.mrf.mxu0
    %3776 = vdwg.mxu0
    %3777 = vmatpush.bf16.msra.mxu0 %v3705
    %3778 = vmatpush.bf16.msra.mxu0 %v3701
    %3779 = vmatpush.bf16.msra.mxu0 %v3697
    %3780 = vmatpush.bf16.msra.mxu0 %v3693
    %3781 = vmatpush.bf16.msra.mxu0 %v3689
    %3782 = vmatpush.bf16.msra.mxu0 %v3685
    %3783 = vmatpush.bf16.msra.mxu0 %v3681
    %3784 = vmatpush.bf16.msra.mxu0 %v3677
    %3785 = vmatmul.bf16.gmra.mxu0 %v3293
    %v3786 = vpop.f32.mrf.mxu0
    %v3787 = vadd.f32 0.0, %v3786
    %v3788 = vpop.f32.mrf.mxu0
    %3789 = vdwg.mxu0
    %v3790 = vadd.f32 %v3542, %v3748
    %v3791 = vadd.f32 %v3543, %v3761
    %v3792 = vadd.f32 %v3544, %v3774
    %v3793 = vadd.f32 %v3545, %v3787
    %v3794 = vmul.f32 %v3790, 0.5
    %v3795 = vtanh.pop %v3794
    %v3796 = vadd.f32 %v3795, 1.0
    %v3797 = vmul.f32 %v3796, 0.5
    %v3798 = vmul.f32 %v3791, 0.5
    %v3799 = vtanh.pop %v3798
    %v3800 = vadd.f32 %v3799, 1.0
    %v3801 = vmul.f32 %v3800, 0.5
    %v3802 = vtanh.pop %v3792
    %v3803 = vmul.f32 %v3793, 0.5
    %v3804 = vtanh.pop %v3803
    %v3805 = vadd.f32 %v3804, 1.0
    %v3806 = vmul.f32 %v3805, 0.5
    %v3807 = vmul.f32 %v3801, %v3290
    %v3808 = vmul.f32 %v3797, %v3802
    %v3809 = vadd.f32 %v3807, %v3808
    %v3810 = vtanh.pop %v3809
    %v3811 = vmul.f32 %v3806, %v3810
    %v3812 = vpack.c.bf16 %v3811, %v3811
    %v3813 = vld [vmem:[#allocation4] sm:$0xff]
    %v3814 = vld [vmem:[#allocation4 + $0x8] sm:$0xff]
    %v3815 = vld [vmem:[#allocation4 + $0x10] sm:$0xff]
    %v3816 = vld [vmem:[#allocation4 + $0x18] sm:$0xff]
    %v3817 = vld [vmem:[#allocation4 + $0x20] sm:$0xff]
    %v3818 = vld [vmem:[#allocation4 + $0x28] sm:$0xff]
    %v3819 = vld [vmem:[#allocation4 + $0x30] sm:$0xff]
    %v3820 = vld [vmem:[#allocation4 + $0x38] sm:$0xff]
    %v3821 = vld [vmem:[#allocation4 + $0x40] sm:$0xff]
    %v3822 = vld [vmem:[#allocation4 + $0x48] sm:$0xff]
    %v3823 = vld [vmem:[#allocation4 + $0x50] sm:$0xff]
    %v3824 = vld [vmem:[#allocation4 + $0x58] sm:$0xff]
    %v3825 = vld [vmem:[#allocation4 + $0x60] sm:$0xff]
    %v3826 = vld [vmem:[#allocation4 + $0x68] sm:$0xff]
    %v3827 = vld [vmem:[#allocation4 + $0x70] sm:$0xff]
    %v3828 = vld [vmem:[#allocation4 + $0x78] sm:$0xff]
    %v3829 = vld [vmem:[#allocation4 + $0x80] sm:$0xff]
    %v3830 = vld [vmem:[#allocation4 + $0x88] sm:$0xff]
    %v3831 = vld [vmem:[#allocation4 + $0x90] sm:$0xff]
    %v3832 = vld [vmem:[#allocation4 + $0x98] sm:$0xff]
    %v3833 = vld [vmem:[#allocation4 + $0xa0] sm:$0xff]
    %v3834 = vld [vmem:[#allocation4 + $0xa8] sm:$0xff]
    %v3835 = vld [vmem:[#allocation4 + $0xb0] sm:$0xff]
    %v3836 = vld [vmem:[#allocation4 + $0xb8] sm:$0xff]
    %v3837 = vld [vmem:[#allocation4 + $0xc0] sm:$0xff]
    %v3838 = vld [vmem:[#allocation4 + $0xc8] sm:$0xff]
    %v3839 = vld [vmem:[#allocation4 + $0xd0] sm:$0xff]
    %v3840 = vld [vmem:[#allocation4 + $0xd8] sm:$0xff]
    %v3841 = vld [vmem:[#allocation4 + $0xe0] sm:$0xff]
    %v3842 = vld [vmem:[#allocation4 + $0xe8] sm:$0xff]
    %v3843 = vld [vmem:[#allocation4 + $0xf0] sm:$0xff]
    %v3844 = vld [vmem:[#allocation4 + $0xf8] sm:$0xff]
    %v3877 = vunpack.c.l.b16 %v3813
    %v3878 = vunpack.c.h.b16 %v3813
    %v3879 = vunpack.c.l.b16 %v3814
    %v3880 = vunpack.c.h.b16 %v3814
    %v3881 = vunpack.c.l.b16 %v3815
    %v3882 = vunpack.c.h.b16 %v3815
    %v3883 = vunpack.c.l.b16 %v3816
    %v3884 = vunpack.c.h.b16 %v3816
    %v3885 = vunpack.c.l.b16 %v3817
    %v3886 = vunpack.c.h.b16 %v3817
    %v3887 = vunpack.c.l.b16 %v3818
    %v3888 = vunpack.c.h.b16 %v3818
    %v3889 = vunpack.c.l.b16 %v3819
    %v3890 = vunpack.c.h.b16 %v3819
    %v3891 = vunpack.c.l.b16 %v3820
    %v3892 = vunpack.c.h.b16 %v3820
    %v3893 = vunpack.c.l.b16 %v3821
    %v3894 = vunpack.c.h.b16 %v3821
    %v3895 = vunpack.c.l.b16 %v3822
    %v3896 = vunpack.c.h.b16 %v3822
    %v3897 = vunpack.c.l.b16 %v3823
    %v3898 = vunpack.c.h.b16 %v3823
    %v3899 = vunpack.c.l.b16 %v3824
    %v3900 = vunpack.c.h.b16 %v3824
    %v3901 = vunpack.c.l.b16 %v3825
    %v3902 = vunpack.c.h.b16 %v3825
    %v3903 = vunpack.c.l.b16 %v3826
    %v3904 = vunpack.c.h.b16 %v3826
    %v3905 = vunpack.c.l.b16 %v3827
    %v3906 = vunpack.c.h.b16 %v3827
    %v3907 = vunpack.c.l.b16 %v3828
    %v3908 = vunpack.c.h.b16 %v3828
    %v3909 = vunpack.c.l.b16 %v3829
    %v3910 = vunpack.c.h.b16 %v3829
    %v3911 = vunpack.c.l.b16 %v3830
    %v3912 = vunpack.c.h.b16 %v3830
    %v3913 = vunpack.c.l.b16 %v3831
    %v3914 = vunpack.c.h.b16 %v3831
    %v3915 = vunpack.c.l.b16 %v3832
    %v3916 = vunpack.c.h.b16 %v3832
    %v3917 = vunpack.c.l.b16 %v3833
    %v3918 = vunpack.c.h.b16 %v3833
    %v3919 = vunpack.c.l.b16 %v3834
    %v3920 = vunpack.c.h.b16 %v3834
    %v3921 = vunpack.c.l.b16 %v3835
    %v3922 = vunpack.c.h.b16 %v3835
    %v3923 = vunpack.c.l.b16 %v3836
    %v3924 = vunpack.c.h.b16 %v3836
    %v3925 = vunpack.c.l.b16 %v3837
    %v3926 = vunpack.c.h.b16 %v3837
    %v3927 = vunpack.c.l.b16 %v3838
    %v3928 = vunpack.c.h.b16 %v3838
    %v3929 = vunpack.c.l.b16 %v3839
    %v3930 = vunpack.c.h.b16 %v3839
    %v3931 = vunpack.c.l.b16 %v3840
    %v3932 = vunpack.c.h.b16 %v3840
    %v3933 = vunpack.c.l.b16 %v3841
    %v3934 = vunpack.c.h.b16 %v3841
    %v3935 = vunpack.c.l.b16 %v3842
    %v3936 = vunpack.c.h.b16 %v3842
    %v3937 = vunpack.c.l.b16 %v3843
    %v3938 = vunpack.c.h.b16 %v3843
    %v3939 = vunpack.c.l.b16 %v3844
    %v3940 = vunpack.c.h.b16 %v3844
    %v3941 = vpack.c.b16 %v3881, %v3877
    %v3942 = vpack.c.b16 %v3882, %v3878
    %v3943 = vpack.c.b16 %v3883, %v3879
    %v3944 = vpack.c.b16 %v3884, %v3880
    %v3945 = vpack.c.b16 %v3889, %v3885
    %v3946 = vpack.c.b16 %v3890, %v3886
    %v3947 = vpack.c.b16 %v3891, %v3887
    %v3948 = vpack.c.b16 %v3892, %v3888
    %v3949 = vpack.c.b16 %v3897, %v3893
    %v3950 = vpack.c.b16 %v3898, %v3894
    %v3951 = vpack.c.b16 %v3899, %v3895
    %v3952 = vpack.c.b16 %v3900, %v3896
    %v3953 = vpack.c.b16 %v3905, %v3901
    %v3954 = vpack.c.b16 %v3906, %v3902
    %v3955 = vpack.c.b16 %v3907, %v3903
    %v3956 = vpack.c.b16 %v3908, %v3904
    %v3957 = vpack.c.b16 %v3913, %v3909
    %v3958 = vpack.c.b16 %v3914, %v3910
    %v3959 = vpack.c.b16 %v3915, %v3911
    %v3960 = vpack.c.b16 %v3916, %v3912
    %v3961 = vpack.c.b16 %v3921, %v3917
    %v3962 = vpack.c.b16 %v3922, %v3918
    %v3963 = vpack.c.b16 %v3923, %v3919
    %v3964 = vpack.c.b16 %v3924, %v3920
    %v3965 = vpack.c.b16 %v3929, %v3925
    %v3966 = vpack.c.b16 %v3930, %v3926
    %v3967 = vpack.c.b16 %v3931, %v3927
    %v3968 = vpack.c.b16 %v3932, %v3928
    %v3969 = vpack.c.b16 %v3937, %v3933
    %v3970 = vpack.c.b16 %v3938, %v3934
    %v3971 = vpack.c.b16 %v3939, %v3935
    %v3972 = vpack.c.b16 %v3940, %v3936
    %4005 = vmatpush.bf16.msra.mxu0 %v3969
    %4006 = vmatpush.bf16.msra.mxu0 %v3965
    %4007 = vmatpush.bf16.msra.mxu0 %v3961
    %4008 = vmatpush.bf16.msra.mxu0 %v3957
    %4009 = vmatpush.bf16.msra.mxu0 %v3953
    %4010 = vmatpush.bf16.msra.mxu0 %v3949
    %4011 = vmatpush.bf16.msra.mxu0 %v3945
    %4012 = vmatpush.bf16.msra.mxu0 %v3941
    %4013 = vmatmul.bf16.gmra.mxu0 %v3812
    %v4014 = vpop.f32.mrf.mxu0
    %v4015 = vadd.f32 %v420, %v4014
    %v4016 = vpop.f32.mrf.mxu0
    %4017 = vdwg.mxu0
    %4018 = vmatpush.bf16.msra.mxu0 %v3970
    %4019 = vmatpush.bf16.msra.mxu0 %v3966
    %4020 = vmatpush.bf16.msra.mxu0 %v3962
    %4021 = vmatpush.bf16.msra.mxu0 %v3958
    %4022 = vmatpush.bf16.msra.mxu0 %v3954
    %4023 = vmatpush.bf16.msra.mxu0 %v3950
    %4024 = vmatpush.bf16.msra.mxu0 %v3946
    %4025 = vmatpush.bf16.msra.mxu0 %v3942
    %4026 = vmatmul.bf16.gmra.mxu0 %v3812
    %v4027 = vpop.f32.mrf.mxu0
    %v4028 = vadd.f32 %v421, %v4027
    %v4029 = vpop.f32.mrf.mxu0
    %4030 = vdwg.mxu0
    %4031 = vmatpush.bf16.msra.mxu0 %v3971
    %4032 = vmatpush.bf16.msra.mxu0 %v3967
    %4033 = vmatpush.bf16.msra.mxu0 %v3963
    %4034 = vmatpush.bf16.msra.mxu0 %v3959
    %4035 = vmatpush.bf16.msra.mxu0 %v3955
    %4036 = vmatpush.bf16.msra.mxu0 %v3951
    %4037 = vmatpush.bf16.msra.mxu0 %v3947
    %4038 = vmatpush.bf16.msra.mxu0 %v3943
    %4039 = vmatmul.bf16.gmra.mxu0 %v3812
    %v4040 = vpop.f32.mrf.mxu0
    %v4041 = vadd.f32 %v422, %v4040
    %v4042 = vpop.f32.mrf.mxu0
    %4043 = vdwg.mxu0
    %4044 = vmatpush.bf16.msra.mxu0 %v3972
    %4045 = vmatpush.bf16.msra.mxu0 %v3968
    %4046 = vmatpush.bf16.msra.mxu0 %v3964
    %4047 = vmatpush.bf16.msra.mxu0 %v3960
    %4048 = vmatpush.bf16.msra.mxu0 %v3956
    %4049 = vmatpush.bf16.msra.mxu0 %v3952
    %4050 = vmatpush.bf16.msra.mxu0 %v3948
    %4051 = vmatpush.bf16.msra.mxu0 %v3944
    %4052 = vmatmul.bf16.gmra.mxu0 %v3812
    %v4053 = vpop.f32.mrf.mxu0
    %v4054 = vadd.f32 %v423, %v4053
    %v4055 = vpop.f32.mrf.mxu0
    %4056 = vdwg.mxu0
    %4057 = vst [vmem:[#allocation3 + $0xc0] sm:$0xff] %v4015
    %4058 = vst [vmem:[#allocation3 + $0xc8] sm:$0xff] %v4028
    %4059 = vst [vmem:[#allocation3 + $0xd0] sm:$0xff] %v4041
    %4060 = vst [vmem:[#allocation3 + $0xd8] sm:$0xff] %v4054
    %v4061 = vld [vmem:[#allocation2 + $0xe0] sm:$0xff]
    %v4062 = vld [vmem:[#allocation2 + $0xe8] sm:$0xff]
    %v4063 = vld [vmem:[#allocation2 + $0xf0] sm:$0xff]
    %v4064 = vld [vmem:[#allocation2 + $0xf8] sm:$0xff]
    %v4065 = vld [vmem:[#allocation10] sm:$0xff]
    %v4066 = vld [vmem:[#allocation10 + $0x8] sm:$0xff]
    %v4067 = vld [vmem:[#allocation10 + $0x10] sm:$0xff]
    %v4068 = vld [vmem:[#allocation10 + $0x18] sm:$0xff]
    %v4069 = vld [vmem:[#allocation10 + $0x20] sm:$0xff]
    %v4070 = vld [vmem:[#allocation10 + $0x28] sm:$0xff]
    %v4071 = vld [vmem:[#allocation10 + $0x30] sm:$0xff]
    %v4072 = vld [vmem:[#allocation10 + $0x38] sm:$0xff]
    %v4073 = vld [vmem:[#allocation10 + $0x40] sm:$0xff]
    %v4074 = vld [vmem:[#allocation10 + $0x48] sm:$0xff]
    %v4075 = vld [vmem:[#allocation10 + $0x50] sm:$0xff]
    %v4076 = vld [vmem:[#allocation10 + $0x58] sm:$0xff]
    %v4077 = vld [vmem:[#allocation10 + $0x60] sm:$0xff]
    %v4078 = vld [vmem:[#allocation10 + $0x68] sm:$0xff]
    %v4079 = vld [vmem:[#allocation10 + $0x70] sm:$0xff]
    %v4080 = vld [vmem:[#allocation10 + $0x78] sm:$0xff]
    %v4081 = vld [vmem:[#allocation10 + $0x80] sm:$0xff]
    %v4082 = vld [vmem:[#allocation10 + $0x88] sm:$0xff]
    %v4083 = vld [vmem:[#allocation10 + $0x90] sm:$0xff]
    %v4084 = vld [vmem:[#allocation10 + $0x98] sm:$0xff]
    %v4085 = vld [vmem:[#allocation10 + $0xa0] sm:$0xff]
    %v4086 = vld [vmem:[#allocation10 + $0xa8] sm:$0xff]
    %v4087 = vld [vmem:[#allocation10 + $0xb0] sm:$0xff]
    %v4088 = vld [vmem:[#allocation10 + $0xb8] sm:$0xff]
    %v4089 = vld [vmem:[#allocation10 + $0xc0] sm:$0xff]
    %v4090 = vld [vmem:[#allocation10 + $0xc8] sm:$0xff]
    %v4091 = vld [vmem:[#allocation10 + $0xd0] sm:$0xff]
    %v4092 = vld [vmem:[#allocation10 + $0xd8] sm:$0xff]
    %v4093 = vld [vmem:[#allocation10 + $0xe0] sm:$0xff]
    %v4094 = vld [vmem:[#allocation10 + $0xe8] sm:$0xff]
    %v4095 = vld [vmem:[#allocation10 + $0xf0] sm:$0xff]
    %v4096 = vld [vmem:[#allocation10 + $0xf8] sm:$0xff]
    %v4129 = vunpack.c.l.b16 %v4065
    %v4130 = vunpack.c.h.b16 %v4065
    %v4131 = vunpack.c.l.b16 %v4066
    %v4132 = vunpack.c.h.b16 %v4066
    %v4133 = vunpack.c.l.b16 %v4067
    %v4134 = vunpack.c.h.b16 %v4067
    %v4135 = vunpack.c.l.b16 %v4068
    %v4136 = vunpack.c.h.b16 %v4068
    %v4137 = vunpack.c.l.b16 %v4069
    %v4138 = vunpack.c.h.b16 %v4069
    %v4139 = vunpack.c.l.b16 %v4070
    %v4140 = vunpack.c.h.b16 %v4070
    %v4141 = vunpack.c.l.b16 %v4071
    %v4142 = vunpack.c.h.b16 %v4071
    %v4143 = vunpack.c.l.b16 %v4072
    %v4144 = vunpack.c.h.b16 %v4072
    %v4145 = vunpack.c.l.b16 %v4073
    %v4146 = vunpack.c.h.b16 %v4073
    %v4147 = vunpack.c.l.b16 %v4074
    %v4148 = vunpack.c.h.b16 %v4074
    %v4149 = vunpack.c.l.b16 %v4075
    %v4150 = vunpack.c.h.b16 %v4075
    %v4151 = vunpack.c.l.b16 %v4076
    %v4152 = vunpack.c.h.b16 %v4076
    %v4153 = vunpack.c.l.b16 %v4077
    %v4154 = vunpack.c.h.b16 %v4077
    %v4155 = vunpack.c.l.b16 %v4078
    %v4156 = vunpack.c.h.b16 %v4078
    %v4157 = vunpack.c.l.b16 %v4079
    %v4158 = vunpack.c.h.b16 %v4079
    %v4159 = vunpack.c.l.b16 %v4080
    %v4160 = vunpack.c.h.b16 %v4080
    %v4161 = vunpack.c.l.b16 %v4081
    %v4162 = vunpack.c.h.b16 %v4081
    %v4163 = vunpack.c.l.b16 %v4082
    %v4164 = vunpack.c.h.b16 %v4082
    %v4165 = vunpack.c.l.b16 %v4083
    %v4166 = vunpack.c.h.b16 %v4083
    %v4167 = vunpack.c.l.b16 %v4084
    %v4168 = vunpack.c.h.b16 %v4084
    %v4169 = vunpack.c.l.b16 %v4085
    %v4170 = vunpack.c.h.b16 %v4085
    %v4171 = vunpack.c.l.b16 %v4086
    %v4172 = vunpack.c.h.b16 %v4086
    %v4173 = vunpack.c.l.b16 %v4087
    %v4174 = vunpack.c.h.b16 %v4087
    %v4175 = vunpack.c.l.b16 %v4088
    %v4176 = vunpack.c.h.b16 %v4088
    %v4177 = vunpack.c.l.b16 %v4089
    %v4178 = vunpack.c.h.b16 %v4089
    %v4179 = vunpack.c.l.b16 %v4090
    %v4180 = vunpack.c.h.b16 %v4090
    %v4181 = vunpack.c.l.b16 %v4091
    %v4182 = vunpack.c.h.b16 %v4091
    %v4183 = vunpack.c.l.b16 %v4092
    %v4184 = vunpack.c.h.b16 %v4092
    %v4185 = vunpack.c.l.b16 %v4093
    %v4186 = vunpack.c.h.b16 %v4093
    %v4187 = vunpack.c.l.b16 %v4094
    %v4188 = vunpack.c.h.b16 %v4094
    %v4189 = vunpack.c.l.b16 %v4095
    %v4190 = vunpack.c.h.b16 %v4095
    %v4191 = vunpack.c.l.b16 %v4096
    %v4192 = vunpack.c.h.b16 %v4096
    %v4193 = vpack.c.b16 %v4133, %v4129
    %v4194 = vpack.c.b16 %v4134, %v4130
    %v4195 = vpack.c.b16 %v4135, %v4131
    %v4196 = vpack.c.b16 %v4136, %v4132
    %v4197 = vpack.c.b16 %v4141, %v4137
    %v4198 = vpack.c.b16 %v4142, %v4138
    %v4199 = vpack.c.b16 %v4143, %v4139
    %v4200 = vpack.c.b16 %v4144, %v4140
    %v4201 = vpack.c.b16 %v4149, %v4145
    %v4202 = vpack.c.b16 %v4150, %v4146
    %v4203 = vpack.c.b16 %v4151, %v4147
    %v4204 = vpack.c.b16 %v4152, %v4148
    %v4205 = vpack.c.b16 %v4157, %v4153
    %v4206 = vpack.c.b16 %v4158, %v4154
    %v4207 = vpack.c.b16 %v4159, %v4155
    %v4208 = vpack.c.b16 %v4160, %v4156
    %v4209 = vpack.c.b16 %v4165, %v4161
    %v4210 = vpack.c.b16 %v4166, %v4162
    %v4211 = vpack.c.b16 %v4167, %v4163
    %v4212 = vpack.c.b16 %v4168, %v4164
    %v4213 = vpack.c.b16 %v4173, %v4169
    %v4214 = vpack.c.b16 %v4174, %v4170
    %v4215 = vpack.c.b16 %v4175, %v4171
    %v4216 = vpack.c.b16 %v4176, %v4172
    %v4217 = vpack.c.b16 %v4181, %v4177
    %v4218 = vpack.c.b16 %v4182, %v4178
    %v4219 = vpack.c.b16 %v4183, %v4179
    %v4220 = vpack.c.b16 %v4184, %v4180
    %v4221 = vpack.c.b16 %v4189, %v4185
    %v4222 = vpack.c.b16 %v4190, %v4186
    %v4223 = vpack.c.b16 %v4191, %v4187
    %v4224 = vpack.c.b16 %v4192, %v4188
    %4257 = vmatpush.bf16.msra.mxu0 %v4221
    %4258 = vmatpush.bf16.msra.mxu0 %v4217
    %4259 = vmatpush.bf16.msra.mxu0 %v4213
    %4260 = vmatpush.bf16.msra.mxu0 %v4209
    %4261 = vmatpush.bf16.msra.mxu0 %v4205
    %4262 = vmatpush.bf16.msra.mxu0 %v4201
    %4263 = vmatpush.bf16.msra.mxu0 %v4197
    %4264 = vmatpush.bf16.msra.mxu0 %v4193
    %4265 = vmatmul.bf16.gmra.mxu0 %v3812
    %v4266 = vpop.f32.mrf.mxu0
    %v4267 = vadd.f32 0.0, %v4266
    %v4268 = vpop.f32.mrf.mxu0
    %4269 = vdwg.mxu0
    %4270 = vmatpush.bf16.msra.mxu0 %v4222
    %4271 = vmatpush.bf16.msra.mxu0 %v4218
    %4272 = vmatpush.bf16.msra.mxu0 %v4214
    %4273 = vmatpush.bf16.msra.mxu0 %v4210
    %4274 = vmatpush.bf16.msra.mxu0 %v4206
    %4275 = vmatpush.bf16.msra.mxu0 %v4202
    %4276 = vmatpush.bf16.msra.mxu0 %v4198
    %4277 = vmatpush.bf16.msra.mxu0 %v4194
    %4278 = vmatmul.bf16.gmra.mxu0 %v3812
    %v4279 = vpop.f32.mrf.mxu0
    %v4280 = vadd.f32 0.0, %v4279
    %v4281 = vpop.f32.mrf.mxu0
    %4282 = vdwg.mxu0
    %4283 = vmatpush.bf16.msra.mxu0 %v4223
    %4284 = vmatpush.bf16.msra.mxu0 %v4219
    %4285 = vmatpush.bf16.msra.mxu0 %v4215
    %4286 = vmatpush.bf16.msra.mxu0 %v4211
    %4287 = vmatpush.bf16.msra.mxu0 %v4207
    %4288 = vmatpush.bf16.msra.mxu0 %v4203
    %4289 = vmatpush.bf16.msra.mxu0 %v4199
    %4290 = vmatpush.bf16.msra.mxu0 %v4195
    %4291 = vmatmul.bf16.gmra.mxu0 %v3812
    %v4292 = vpop.f32.mrf.mxu0
    %v4293 = vadd.f32 0.0, %v4292
    %v4294 = vpop.f32.mrf.mxu0
    %4295 = vdwg.mxu0
    %4296 = vmatpush.bf16.msra.mxu0 %v4224
    %4297 = vmatpush.bf16.msra.mxu0 %v4220
    %4298 = vmatpush.bf16.msra.mxu0 %v4216
    %4299 = vmatpush.bf16.msra.mxu0 %v4212
    %4300 = vmatpush.bf16.msra.mxu0 %v4208
    %4301 = vmatpush.bf16.msra.mxu0 %v4204
    %4302 = vmatpush.bf16.msra.mxu0 %v4200
    %4303 = vmatpush.bf16.msra.mxu0 %v4196
    %4304 = vmatmul.bf16.gmra.mxu0 %v3812
    %v4305 = vpop.f32.mrf.mxu0
    %v4306 = vadd.f32 0.0, %v4305
    %v4307 = vpop.f32.mrf.mxu0
    %4308 = vdwg.mxu0
    %v4309 = vadd.f32 %v4061, %v4267
    %v4310 = vadd.f32 %v4062, %v4280
    %v4311 = vadd.f32 %v4063, %v4293
    %v4312 = vadd.f32 %v4064, %v4306
    %v4313 = vmul.f32 %v4309, 0.5
    %v4314 = vtanh.pop %v4313
    %v4315 = vadd.f32 %v4314, 1.0
    %v4316 = vmul.f32 %v4315, 0.5
    %v4317 = vmul.f32 %v4310, 0.5
    %v4318 = vtanh.pop %v4317
    %v4319 = vadd.f32 %v4318, 1.0
    %v4320 = vmul.f32 %v4319, 0.5
    %v4321 = vtanh.pop %v4311
    %v4322 = vmul.f32 %v4312, 0.5
    %v4323 = vtanh.pop %v4322
    %v4324 = vadd.f32 %v4323, 1.0
    %v4325 = vmul.f32 %v4324, 0.5
    %v4326 = vmul.f32 %v4320, %v3809
    %v4327 = vmul.f32 %v4316, %v4321
    %v4328 = vadd.f32 %v4326, %v4327
    %v4329 = vtanh.pop %v4328
    %v4330 = vmul.f32 %v4325, %v4329
    %v4331 = vpack.c.bf16 %v4330, %v4330
    %v4332 = vld [vmem:[#allocation4] sm:$0xff]
    %v4333 = vld [vmem:[#allocation4 + $0x8] sm:$0xff]
    %v4334 = vld [vmem:[#allocation4 + $0x10] sm:$0xff]
    %v4335 = vld [vmem:[#allocation4 + $0x18] sm:$0xff]
    %v4336 = vld [vmem:[#allocation4 + $0x20] sm:$0xff]
    %v4337 = vld [vmem:[#allocation4 + $0x28] sm:$0xff]
    %v4338 = vld [vmem:[#allocation4 + $0x30] sm:$0xff]
    %v4339 = vld [vmem:[#allocation4 + $0x38] sm:$0xff]
    %v4340 = vld [vmem:[#allocation4 + $0x40] sm:$0xff]
    %v4341 = vld [vmem:[#allocation4 + $0x48] sm:$0xff]
    %v4342 = vld [vmem:[#allocation4 + $0x50] sm:$0xff]
    %v4343 = vld [vmem:[#allocation4 + $0x58] sm:$0xff]
    %v4344 = vld [vmem:[#allocation4 + $0x60] sm:$0xff]
    %v4345 = vld [vmem:[#allocation4 + $0x68] sm:$0xff]
    %v4346 = vld [vmem:[#allocation4 + $0x70] sm:$0xff]
    %v4347 = vld [vmem:[#allocation4 + $0x78] sm:$0xff]
    %v4348 = vld [vmem:[#allocation4 + $0x80] sm:$0xff]
    %v4349 = vld [vmem:[#allocation4 + $0x88] sm:$0xff]
    %v4350 = vld [vmem:[#allocation4 + $0x90] sm:$0xff]
    %v4351 = vld [vmem:[#allocation4 + $0x98] sm:$0xff]
    %v4352 = vld [vmem:[#allocation4 + $0xa0] sm:$0xff]
    %v4353 = vld [vmem:[#allocation4 + $0xa8] sm:$0xff]
    %v4354 = vld [vmem:[#allocation4 + $0xb0] sm:$0xff]
    %v4355 = vld [vmem:[#allocation4 + $0xb8] sm:$0xff]
    %v4356 = vld [vmem:[#allocation4 + $0xc0] sm:$0xff]
    %v4357 = vld [vmem:[#allocation4 + $0xc8] sm:$0xff]
    %v4358 = vld [vmem:[#allocation4 + $0xd0] sm:$0xff]
    %v4359 = vld [vmem:[#allocation4 + $0xd8] sm:$0xff]
    %v4360 = vld [vmem:[#allocation4 + $0xe0] sm:$0xff]
    %v4361 = vld [vmem:[#allocation4 + $0xe8] sm:$0xff]
    %v4362 = vld [vmem:[#allocation4 + $0xf0] sm:$0xff]
    %v4363 = vld [vmem:[#allocation4 + $0xf8] sm:$0xff]
    %v4396 = vunpack.c.l.b16 %v4332
    %v4397 = vunpack.c.h.b16 %v4332
    %v4398 = vunpack.c.l.b16 %v4333
    %v4399 = vunpack.c.h.b16 %v4333
    %v4400 = vunpack.c.l.b16 %v4334
    %v4401 = vunpack.c.h.b16 %v4334
    %v4402 = vunpack.c.l.b16 %v4335
    %v4403 = vunpack.c.h.b16 %v4335
    %v4404 = vunpack.c.l.b16 %v4336
    %v4405 = vunpack.c.h.b16 %v4336
    %v4406 = vunpack.c.l.b16 %v4337
    %v4407 = vunpack.c.h.b16 %v4337
    %v4408 = vunpack.c.l.b16 %v4338
    %v4409 = vunpack.c.h.b16 %v4338
    %v4410 = vunpack.c.l.b16 %v4339
    %v4411 = vunpack.c.h.b16 %v4339
    %v4412 = vunpack.c.l.b16 %v4340
    %v4413 = vunpack.c.h.b16 %v4340
    %v4414 = vunpack.c.l.b16 %v4341
    %v4415 = vunpack.c.h.b16 %v4341
    %v4416 = vunpack.c.l.b16 %v4342
    %v4417 = vunpack.c.h.b16 %v4342
    %v4418 = vunpack.c.l.b16 %v4343
    %v4419 = vunpack.c.h.b16 %v4343
    %v4420 = vunpack.c.l.b16 %v4344
    %v4421 = vunpack.c.h.b16 %v4344
    %v4422 = vunpack.c.l.b16 %v4345
    %v4423 = vunpack.c.h.b16 %v4345
    %v4424 = vunpack.c.l.b16 %v4346
    %v4425 = vunpack.c.h.b16 %v4346
    %v4426 = vunpack.c.l.b16 %v4347
    %v4427 = vunpack.c.h.b16 %v4347
    %v4428 = vunpack.c.l.b16 %v4348
    %v4429 = vunpack.c.h.b16 %v4348
    %v4430 = vunpack.c.l.b16 %v4349
    %v4431 = vunpack.c.h.b16 %v4349
    %v4432 = vunpack.c.l.b16 %v4350
    %v4433 = vunpack.c.h.b16 %v4350
    %v4434 = vunpack.c.l.b16 %v4351
    %v4435 = vunpack.c.h.b16 %v4351
    %v4436 = vunpack.c.l.b16 %v4352
    %v4437 = vunpack.c.h.b16 %v4352
    %v4438 = vunpack.c.l.b16 %v4353
    %v4439 = vunpack.c.h.b16 %v4353
    %v4440 = vunpack.c.l.b16 %v4354
    %v4441 = vunpack.c.h.b16 %v4354
    %v4442 = vunpack.c.l.b16 %v4355
    %v4443 = vunpack.c.h.b16 %v4355
    %v4444 = vunpack.c.l.b16 %v4356
    %v4445 = vunpack.c.h.b16 %v4356
    %v4446 = vunpack.c.l.b16 %v4357
    %v4447 = vunpack.c.h.b16 %v4357
    %v4448 = vunpack.c.l.b16 %v4358
    %v4449 = vunpack.c.h.b16 %v4358
    %v4450 = vunpack.c.l.b16 %v4359
    %v4451 = vunpack.c.h.b16 %v4359
    %v4452 = vunpack.c.l.b16 %v4360
    %v4453 = vunpack.c.h.b16 %v4360
    %v4454 = vunpack.c.l.b16 %v4361
    %v4455 = vunpack.c.h.b16 %v4361
    %v4456 = vunpack.c.l.b16 %v4362
    %v4457 = vunpack.c.h.b16 %v4362
    %v4458 = vunpack.c.l.b16 %v4363
    %v4459 = vunpack.c.h.b16 %v4363
    %v4460 = vpack.c.b16 %v4400, %v4396
    %v4461 = vpack.c.b16 %v4401, %v4397
    %v4462 = vpack.c.b16 %v4402, %v4398
    %v4463 = vpack.c.b16 %v4403, %v4399
    %v4464 = vpack.c.b16 %v4408, %v4404
    %v4465 = vpack.c.b16 %v4409, %v4405
    %v4466 = vpack.c.b16 %v4410, %v4406
    %v4467 = vpack.c.b16 %v4411, %v4407
    %v4468 = vpack.c.b16 %v4416, %v4412
    %v4469 = vpack.c.b16 %v4417, %v4413
    %v4470 = vpack.c.b16 %v4418, %v4414
    %v4471 = vpack.c.b16 %v4419, %v4415
    %v4472 = vpack.c.b16 %v4424, %v4420
    %v4473 = vpack.c.b16 %v4425, %v4421
    %v4474 = vpack.c.b16 %v4426, %v4422
    %v4475 = vpack.c.b16 %v4427, %v4423
    %v4476 = vpack.c.b16 %v4432, %v4428
    %v4477 = vpack.c.b16 %v4433, %v4429
    %v4478 = vpack.c.b16 %v4434, %v4430
    %v4479 = vpack.c.b16 %v4435, %v4431
    %v4480 = vpack.c.b16 %v4440, %v4436
    %v4481 = vpack.c.b16 %v4441, %v4437
    %v4482 = vpack.c.b16 %v4442, %v4438
    %v4483 = vpack.c.b16 %v4443, %v4439
    %v4484 = vpack.c.b16 %v4448, %v4444
    %v4485 = vpack.c.b16 %v4449, %v4445
    %v4486 = vpack.c.b16 %v4450, %v4446
    %v4487 = vpack.c.b16 %v4451, %v4447
    %v4488 = vpack.c.b16 %v4456, %v4452
    %v4489 = vpack.c.b16 %v4457, %v4453
    %v4490 = vpack.c.b16 %v4458, %v4454
    %v4491 = vpack.c.b16 %v4459, %v4455
    %4524 = vmatpush.bf16.msra.mxu0 %v4488
    %4525 = vmatpush.bf16.msra.mxu0 %v4484
    %4526 = vmatpush.bf16.msra.mxu0 %v4480
    %4527 = vmatpush.bf16.msra.mxu0 %v4476
    %4528 = vmatpush.bf16.msra.mxu0 %v4472
    %4529 = vmatpush.bf16.msra.mxu0 %v4468
    %4530 = vmatpush.bf16.msra.mxu0 %v4464
    %4531 = vmatpush.bf16.msra.mxu0 %v4460
    %4532 = vmatmul.bf16.gmra.mxu0 %v4331
    %v4533 = vpop.f32.mrf.mxu0
    %v4534 = vadd.f32 %v420, %v4533
    %v4535 = vpop.f32.mrf.mxu0
    %4536 = vdwg.mxu0
    %4537 = vmatpush.bf16.msra.mxu0 %v4489
    %4538 = vmatpush.bf16.msra.mxu0 %v4485
    %4539 = vmatpush.bf16.msra.mxu0 %v4481
    %4540 = vmatpush.bf16.msra.mxu0 %v4477
    %4541 = vmatpush.bf16.msra.mxu0 %v4473
    %4542 = vmatpush.bf16.msra.mxu0 %v4469
    %4543 = vmatpush.bf16.msra.mxu0 %v4465
    %4544 = vmatpush.bf16.msra.mxu0 %v4461
    %4545 = vmatmul.bf16.gmra.mxu0 %v4331
    %v4546 = vpop.f32.mrf.mxu0
    %v4547 = vadd.f32 %v421, %v4546
    %v4548 = vpop.f32.mrf.mxu0
    %4549 = vdwg.mxu0
    %4550 = vmatpush.bf16.msra.mxu0 %v4490
    %4551 = vmatpush.bf16.msra.mxu0 %v4486
    %4552 = vmatpush.bf16.msra.mxu0 %v4482
    %4553 = vmatpush.bf16.msra.mxu0 %v4478
    %4554 = vmatpush.bf16.msra.mxu0 %v4474
    %4555 = vmatpush.bf16.msra.mxu0 %v4470
    %4556 = vmatpush.bf16.msra.mxu0 %v4466
    %4557 = vmatpush.bf16.msra.mxu0 %v4462
    %4558 = vmatmul.bf16.gmra.mxu0 %v4331
    %v4559 = vpop.f32.mrf.mxu0
    %v4560 = vadd.f32 %v422, %v4559
    %v4561 = vpop.f32.mrf.mxu0
    %4562 = vdwg.mxu0
    %4563 = vmatpush.bf16.msra.mxu0 %v4491
    %4564 = vmatpush.bf16.msra.mxu0 %v4487
    %4565 = vmatpush.bf16.msra.mxu0 %v4483
    %4566 = vmatpush.bf16.msra.mxu0 %v4479
    %4567 = vmatpush.bf16.msra.mxu0 %v4475
    %4568 = vmatpush.bf16.msra.mxu0 %v4471
    %4569 = vmatpush.bf16.msra.mxu0 %v4467
    %4570 = vmatpush.bf16.msra.mxu0 %v4463
    %4571 = vmatmul.bf16.gmra.mxu0 %v4331
    %v4572 = vpop.f32.mrf.mxu0
    %v4573 = vadd.f32 %v423, %v4572
    %v4574 = vpop.f32.mrf.mxu0
    %4575 = vdwg.mxu0
    %4576 = vst [vmem:[#allocation3 + $0xe0] sm:$0xff] %v4534
    %4577 = vst [vmem:[#allocation3 + $0xe8] sm:$0xff] %v4547
    %4578 = vst [vmem:[#allocation3 + $0xf0] sm:$0xff] %v4560
    %4579 = vst [vmem:[#allocation3 + $0xf8] sm:$0xff] %v4573
    %s4580 = sshll.u32 %s415, 4
    %4581 = dma.done %s72, %s4580
    %v4582 = vld [vmem:[#allocation3] sm:$0xff]
    %v4583 = vld [vmem:[#allocation3 + $0x8] sm:$0xff]
    %v4584 = vld [vmem:[#allocation3 + $0x10] sm:$0xff]
    %v4585 = vld [vmem:[#allocation3 + $0x18] sm:$0xff]
    %v4586 = vld [vmem:[#allocation5] sm:$0xff]
    %v4587 = vld [vmem:[#allocation5 + $0x8] sm:$0xff]
    %v4588 = vld [vmem:[#allocation5 + $0x10] sm:$0xff]
    %v4589 = vld [vmem:[#allocation5 + $0x18] sm:$0xff]
    %v4590 = vld [vmem:[#allocation5 + $0x20] sm:$0xff]
    %v4591 = vld [vmem:[#allocation5 + $0x28] sm:$0xff]
    %v4592 = vld [vmem:[#allocation5 + $0x30] sm:$0xff]
    %v4593 = vld [vmem:[#allocation5 + $0x38] sm:$0xff]
    %v4594 = vld [vmem:[#allocation5 + $0x40] sm:$0xff]
    %v4595 = vld [vmem:[#allocation5 + $0x48] sm:$0xff]
    %v4596 = vld [vmem:[#allocation5 + $0x50] sm:$0xff]
    %v4597 = vld [vmem:[#allocation5 + $0x58] sm:$0xff]
    %v4598 = vld [vmem:[#allocation5 + $0x60] sm:$0xff]
    %v4599 = vld [vmem:[#allocation5 + $0x68] sm:$0xff]
    %v4600 = vld [vmem:[#allocation5 + $0x70] sm:$0xff]
    %v4601 = vld [vmem:[#allocation5 + $0x78] sm:$0xff]
    %v4602 = vld [vmem:[#allocation5 + $0x80] sm:$0xff]
    %v4603 = vld [vmem:[#allocation5 + $0x88] sm:$0xff]
    %v4604 = vld [vmem:[#allocation5 + $0x90] sm:$0xff]
    %v4605 = vld [vmem:[#allocation5 + $0x98] sm:$0xff]
    %v4606 = vld [vmem:[#allocation5 + $0xa0] sm:$0xff]
    %v4607 = vld [vmem:[#allocation5 + $0xa8] sm:$0xff]
    %v4608 = vld [vmem:[#allocation5 + $0xb0] sm:$0xff]
    %v4609 = vld [vmem:[#allocation5 + $0xb8] sm:$0xff]
    %v4610 = vld [vmem:[#allocation5 + $0xc0] sm:$0xff]
    %v4611 = vld [vmem:[#allocation5 + $0xc8] sm:$0xff]
    %v4612 = vld [vmem:[#allocation5 + $0xd0] sm:$0xff]
    %v4613 = vld [vmem:[#allocation5 + $0xd8] sm:$0xff]
    %v4614 = vld [vmem:[#allocation5 + $0xe0] sm:$0xff]
    %v4615 = vld [vmem:[#allocation5 + $0xe8] sm:$0xff]
    %v4616 = vld [vmem:[#allocation5 + $0xf0] sm:$0xff]
    %v4617 = vld [vmem:[#allocation5 + $0xf8] sm:$0xff]
    %v4650 = vunpack.c.l.b16 %v4586
    %v4651 = vunpack.c.h.b16 %v4586
    %v4652 = vunpack.c.l.b16 %v4587
    %v4653 = vunpack.c.h.b16 %v4587
    %v4654 = vunpack.c.l.b16 %v4588
    %v4655 = vunpack.c.h.b16 %v4588
    %v4656 = vunpack.c.l.b16 %v4589
    %v4657 = vunpack.c.h.b16 %v4589
    %v4658 = vunpack.c.l.b16 %v4590
    %v4659 = vunpack.c.h.b16 %v4590
    %v4660 = vunpack.c.l.b16 %v4591
    %v4661 = vunpack.c.h.b16 %v4591
    %v4662 = vunpack.c.l.b16 %v4592
    %v4663 = vunpack.c.h.b16 %v4592
    %v4664 = vunpack.c.l.b16 %v4593
    %v4665 = vunpack.c.h.b16 %v4593
    %v4666 = vunpack.c.l.b16 %v4594
    %v4667 = vunpack.c.h.b16 %v4594
    %v4668 = vunpack.c.l.b16 %v4595
    %v4669 = vunpack.c.h.b16 %v4595
    %v4670 = vunpack.c.l.b16 %v4596
    %v4671 = vunpack.c.h.b16 %v4596
    %v4672 = vunpack.c.l.b16 %v4597
    %v4673 = vunpack.c.h.b16 %v4597
    %v4674 = vunpack.c.l.b16 %v4598
    %v4675 = vunpack.c.h.b16 %v4598
    %v4676 = vunpack.c.l.b16 %v4599
    %v4677 = vunpack.c.h.b16 %v4599
    %v4678 = vunpack.c.l.b16 %v4600
    %v4679 = vunpack.c.h.b16 %v4600
    %v4680 = vunpack.c.l.b16 %v4601
    %v4681 = vunpack.c.h.b16 %v4601
    %v4682 = vunpack.c.l.b16 %v4602
    %v4683 = vunpack.c.h.b16 %v4602
    %v4684 = vunpack.c.l.b16 %v4603
    %v4685 = vunpack.c.h.b16 %v4603
    %v4686 = vunpack.c.l.b16 %v4604
    %v4687 = vunpack.c.h.b16 %v4604
    %v4688 = vunpack.c.l.b16 %v4605
    %v4689 = vunpack.c.h.b16 %v4605
    %v4690 = vunpack.c.l.b16 %v4606
    %v4691 = vunpack.c.h.b16 %v4606
    %v4692 = vunpack.c.l.b16 %v4607
    %v4693 = vunpack.c.h.b16 %v4607
    %v4694 = vunpack.c.l.b16 %v4608
    %v4695 = vunpack.c.h.b16 %v4608
    %v4696 = vunpack.c.l.b16 %v4609
    %v4697 = vunpack.c.h.b16 %v4609
    %v4698 = vunpack.c.l.b16 %v4610
    %v4699 = vunpack.c.h.b16 %v4610
    %v4700 = vunpack.c.l.b16 %v4611
    %v4701 = vunpack.c.h.b16 %v4611
    %v4702 = vunpack.c.l.b16 %v4612
    %v4703 = vunpack.c.h.b16 %v4612
    %v4704 = vunpack.c.l.b16 %v4613
    %v4705 = vunpack.c.h.b16 %v4613
    %v4706 = vunpack.c.l.b16 %v4614
    %v4707 = vunpack.c.h.b16 %v4614
    %v4708 = vunpack.c.l.b16 %v4615
    %v4709 = vunpack.c.h.b16 %v4615
    %v4710 = vunpack.c.l.b16 %v4616
    %v4711 = vunpack.c.h.b16 %v4616
    %v4712 = vunpack.c.l.b16 %v4617
    %v4713 = vunpack.c.h.b16 %v4617
    %v4714 = vpack.c.b16 %v4654, %v4650
    %v4715 = vpack.c.b16 %v4655, %v4651
    %v4716 = vpack.c.b16 %v4656, %v4652
    %v4717 = vpack.c.b16 %v4657, %v4653
    %v4718 = vpack.c.b16 %v4662, %v4658
    %v4719 = vpack.c.b16 %v4663, %v4659
    %v4720 = vpack.c.b16 %v4664, %v4660
    %v4721 = vpack.c.b16 %v4665, %v4661
    %v4722 = vpack.c.b16 %v4670, %v4666
    %v4723 = vpack.c.b16 %v4671, %v4667
    %v4724 = vpack.c.b16 %v4672, %v4668
    %v4725 = vpack.c.b16 %v4673, %v4669
    %v4726 = vpack.c.b16 %v4678, %v4674
    %v4727 = vpack.c.b16 %v4679, %v4675
    %v4728 = vpack.c.b16 %v4680, %v4676
    %v4729 = vpack.c.b16 %v4681, %v4677
    %v4730 = vpack.c.b16 %v4686, %v4682
    %v4731 = vpack.c.b16 %v4687, %v4683
    %v4732 = vpack.c.b16 %v4688, %v4684
    %v4733 = vpack.c.b16 %v4689, %v4685
    %v4734 = vpack.c.b16 %v4694, %v4690
    %v4735 = vpack.c.b16 %v4695, %v4691
    %v4736 = vpack.c.b16 %v4696, %v4692
    %v4737 = vpack.c.b16 %v4697, %v4693
    %v4738 = vpack.c.b16 %v4702, %v4698
    %v4739 = vpack.c.b16 %v4703, %v4699
    %v4740 = vpack.c.b16 %v4704, %v4700
    %v4741 = vpack.c.b16 %v4705, %v4701
    %v4742 = vpack.c.b16 %v4710, %v4706
    %v4743 = vpack.c.b16 %v4711, %v4707
    %v4744 = vpack.c.b16 %v4712, %v4708
    %v4745 = vpack.c.b16 %v4713, %v4709
    %4778 = vmatpush.bf16.msra.mxu0 %v4742
    %4779 = vmatpush.bf16.msra.mxu0 %v4738
    %4780 = vmatpush.bf16.msra.mxu0 %v4734
    %4781 = vmatpush.bf16.msra.mxu0 %v4730
    %4782 = vmatpush.bf16.msra.mxu0 %v4726
    %4783 = vmatpush.bf16.msra.mxu0 %v4722
    %4784 = vmatpush.bf16.msra.mxu0 %v4718
    %4785 = vmatpush.bf16.msra.mxu0 %v4714
    %4786 = vmatmul.bf16.gmra.mxu0 0
    %v4787 = vpop.f32.mrf.mxu0
    %v4788 = vadd.f32 0.0, %v4787
    %v4789 = vpop.f32.mrf.mxu0
    %4790 = vdwg.mxu0
    %4791 = vmatpush.bf16.msra.mxu0 %v4743
    %4792 = vmatpush.bf16.msra.mxu0 %v4739
    %4793 = vmatpush.bf16.msra.mxu0 %v4735
    %4794 = vmatpush.bf16.msra.mxu0 %v4731
    %4795 = vmatpush.bf16.msra.mxu0 %v4727
    %4796 = vmatpush.bf16.msra.mxu0 %v4723
    %4797 = vmatpush.bf16.msra.mxu0 %v4719
    %4798 = vmatpush.bf16.msra.mxu0 %v4715
    %4799 = vmatmul.bf16.gmra.mxu0 0
    %v4800 = vpop.f32.mrf.mxu0
    %v4801 = vadd.f32 0.0, %v4800
    %v4802 = vpop.f32.mrf.mxu0
    %4803 = vdwg.mxu0
    %4804 = vmatpush.bf16.msra.mxu0 %v4744
    %4805 = vmatpush.bf16.msra.mxu0 %v4740
    %4806 = vmatpush.bf16.msra.mxu0 %v4736
    %4807 = vmatpush.bf16.msra.mxu0 %v4732
    %4808 = vmatpush.bf16.msra.mxu0 %v4728
    %4809 = vmatpush.bf16.msra.mxu0 %v4724
    %4810 = vmatpush.bf16.msra.mxu0 %v4720
    %4811 = vmatpush.bf16.msra.mxu0 %v4716
    %4812 = vmatmul.bf16.gmra.mxu0 0
    %v4813 = vpop.f32.mrf.mxu0
    %v4814 = vadd.f32 0.0, %v4813
    %v4815 = vpop.f32.mrf.mxu0
    %4816 = vdwg.mxu0
    %4817 = vmatpush.bf16.msra.mxu0 %v4745
    %4818 = vmatpush.bf16.msra.mxu0 %v4741
    %4819 = vmatpush.bf16.msra.mxu0 %v4737
    %4820 = vmatpush.bf16.msra.mxu0 %v4733
    %4821 = vmatpush.bf16.msra.mxu0 %v4729
    %4822 = vmatpush.bf16.msra.mxu0 %v4725
    %4823 = vmatpush.bf16.msra.mxu0 %v4721
    %4824 = vmatpush.bf16.msra.mxu0 %v4717
    %4825 = vmatmul.bf16.gmra.mxu0 0
    %v4826 = vpop.f32.mrf.mxu0
    %v4827 = vadd.f32 0.0, %v4826
    %v4828 = vpop.f32.mrf.mxu0
    %4829 = vdwg.mxu0
    %v4830 = vadd.f32 %v4582, %v4788
    %v4831 = vadd.f32 %v4583, %v4801
    %v4832 = vadd.f32 %v4584, %v4814
    %v4833 = vadd.f32 %v4585, %v4827
    %v4834 = vmul.f32 %v4830, 0.5
    %v4835 = vtanh.pop %v4834
    %v4836 = vadd.f32 %v4835, 1.0
    %v4837 = vmul.f32 %v4836, 0.5
    %v4838 = vmul.f32 %v4831, 0.5
    %v4839 = vtanh.pop %v4838
    %v4840 = vadd.f32 %v4839, 1.0
    %v4841 = vmul.f32 %v4840, 0.5
    %v4842 = vtanh.pop %v4832
    %v4843 = vmul.f32 %v4833, 0.5
    %v4844 = vtanh.pop %v4843
    %v4845 = vadd.f32 %v4844, 1.0
    %v4846 = vmul.f32 %v4845, 0.5
    %v4847 = vmul.f32 %v4841, 0.0
    %v4848 = vmul.f32 %v4837, %v4842
    %v4849 = vadd.f32 %v4847, %v4848
    %v4850 = vtanh.pop %v4849
    %v4851 = vmul.f32 %v4846, %v4850
    %v4852 = vld [vmem:[#allocation3 + $0x20] sm:$0xff]
    %v4853 = vld [vmem:[#allocation3 + $0x28] sm:$0xff]
    %v4854 = vld [vmem:[#allocation3 + $0x30] sm:$0xff]
    %v4855 = vld [vmem:[#allocation3 + $0x38] sm:$0xff]
    %v4856 = vpack.c.bf16 %v4851, %v4851
    %4857 = vmatpush.bf16.msra.mxu0 %v4742
    %4858 = vmatpush.bf16.msra.mxu0 %v4738
    %4859 = vmatpush.bf16.msra.mxu0 %v4734
    %4860 = vmatpush.bf16.msra.mxu0 %v4730
    %4861 = vmatpush.bf16.msra.mxu0 %v4726
    %4862 = vmatpush.bf16.msra.mxu0 %v4722
    %4863 = vmatpush.bf16.msra.mxu0 %v4718
    %4864 = vmatpush.bf16.msra.mxu0 %v4714
    %4865 = vmatmul.bf16.gmra.mxu0 %v4856
    %v4866 = vpop.f32.mrf.mxu0
    %v4867 = vadd.f32 0.0, %v4866
    %v4868 = vpop.f32.mrf.mxu0
    %4869 = vdwg.mxu0
    %4870 = vmatpush.bf16.msra.mxu0 %v4743
    %4871 = vmatpush.bf16.msra.mxu0 %v4739
    %4872 = vmatpush.bf16.msra.mxu0 %v4735
    %4873 = vmatpush.bf16.msra.mxu0 %v4731
    %4874 = vmatpush.bf16.msra.mxu0 %v4727
    %4875 = vmatpush.bf16.msra.mxu0 %v4723
    %4876 = vmatpush.bf16.msra.mxu0 %v4719
    %4877 = vmatpush.bf16.msra.mxu0 %v4715
    %4878 = vmatmul.bf16.gmra.mxu0 %v4856
    %v4879 = vpop.f32.mrf.mxu0
    %v4880 = vadd.f32 0.0, %v4879
    %v4881 = vpop.f32.mrf.mxu0
    %4882 = vdwg.mxu0
    %4883 = vmatpush.bf16.msra.mxu0 %v4744
    %4884 = vmatpush.bf16.msra.mxu0 %v4740
    %4885 = vmatpush.bf16.msra.mxu0 %v4736
    %4886 = vmatpush.bf16.msra.mxu0 %v4732
    %4887 = vmatpush.bf16.msra.mxu0 %v4728
    %4888 = vmatpush.bf16.msra.mxu0 %v4724
    %4889 = vmatpush.bf16.msra.mxu0 %v4720
    %4890 = vmatpush.bf16.msra.mxu0 %v4716
    %4891 = vmatmul.bf16.gmra.mxu0 %v4856
    %v4892 = vpop.f32.mrf.mxu0
    %v4893 = vadd.f32 0.0, %v4892
    %v4894 = vpop.f32.mrf.mxu0
    %4895 = vdwg.mxu0
    %4896 = vmatpush.bf16.msra.mxu0 %v4745
    %4897 = vmatpush.bf16.msra.mxu0 %v4741
    %4898 = vmatpush.bf16.msra.mxu0 %v4737
    %4899 = vmatpush.bf16.msra.mxu0 %v4733
    %4900 = vmatpush.bf16.msra.mxu0 %v4729
    %4901 = vmatpush.bf16.msra.mxu0 %v4725
    %4902 = vmatpush.bf16.msra.mxu0 %v4721
    %4903 = vmatpush.bf16.msra.mxu0 %v4717
    %4904 = vmatmul.bf16.gmra.mxu0 %v4856
    %v4905 = vpop.f32.mrf.mxu0
    %v4906 = vadd.f32 0.0, %v4905
    %v4907 = vpop.f32.mrf.mxu0
    %4908 = vdwg.mxu0
    %v4909 = vadd.f32 %v4852, %v4867
    %v4910 = vadd.f32 %v4853, %v4880
    %v4911 = vadd.f32 %v4854, %v4893
    %v4912 = vadd.f32 %v4855, %v4906
    %v4913 = vmul.f32 %v4909, 0.5
    %v4914 = vtanh.pop %v4913
    %v4915 = vadd.f32 %v4914, 1.0
    %v4916 = vmul.f32 %v4915, 0.5
    %v4917 = vmul.f32 %v4910, 0.5
    %v4918 = vtanh.pop %v4917
    %v4919 = vadd.f32 %v4918, 1.0
    %v4920 = vmul.f32 %v4919, 0.5
    %v4921 = vtanh.pop %v4911
    %v4922 = vmul.f32 %v4912, 0.5
    %v4923 = vtanh.pop %v4922
    %v4924 = vadd.f32 %v4923, 1.0
    %v4925 = vmul.f32 %v4924, 0.5
    %v4926 = vmul.f32 %v4920, %v4849
    %v4927 = vmul.f32 %v4916, %v4921
    %v4928 = vadd.f32 %v4926, %v4927
    %v4929 = vtanh.pop %v4928
    %v4930 = vmul.f32 %v4925, %v4929
    %v4931 = vld [vmem:[#allocation3 + $0x40] sm:$0xff]
    %v4932 = vld [vmem:[#allocation3 + $0x48] sm:$0xff]
    %v4933 = vld [vmem:[#allocation3 + $0x50] sm:$0xff]
    %v4934 = vld [vmem:[#allocation3 + $0x58] sm:$0xff]
    %v4935 = vpack.c.bf16 %v4930, %v4930
    %4936 = vmatpush.bf16.msra.mxu0 %v4742
    %4937 = vmatpush.bf16.msra.mxu0 %v4738
    %4938 = vmatpush.bf16.msra.mxu0 %v4734
    %4939 = vmatpush.bf16.msra.mxu0 %v4730
    %4940 = vmatpush.bf16.msra.mxu0 %v4726
    %4941 = vmatpush.bf16.msra.mxu0 %v4722
    %4942 = vmatpush.bf16.msra.mxu0 %v4718
    %4943 = vmatpush.bf16.msra.mxu0 %v4714
    %4944 = vmatmul.bf16.gmra.mxu0 %v4935
    %v4945 = vpop.f32.mrf.mxu0
    %v4946 = vadd.f32 0.0, %v4945
    %v4947 = vpop.f32.mrf.mxu0
    %4948 = vdwg.mxu0
    %4949 = vmatpush.bf16.msra.mxu0 %v4743
    %4950 = vmatpush.bf16.msra.mxu0 %v4739
    %4951 = vmatpush.bf16.msra.mxu0 %v4735
    %4952 = vmatpush.bf16.msra.mxu0 %v4731
    %4953 = vmatpush.bf16.msra.mxu0 %v4727
    %4954 = vmatpush.bf16.msra.mxu0 %v4723
    %4955 = vmatpush.bf16.msra.mxu0 %v4719
    %4956 = vmatpush.bf16.msra.mxu0 %v4715
    %4957 = vmatmul.bf16.gmra.mxu0 %v4935
    %v4958 = vpop.f32.mrf.mxu0
    %v4959 = vadd.f32 0.0, %v4958
    %v4960 = vpop.f32.mrf.mxu0
    %4961 = vdwg.mxu0
    %4962 = vmatpush.bf16.msra.mxu0 %v4744
    %4963 = vmatpush.bf16.msra.mxu0 %v4740
    %4964 = vmatpush.bf16.msra.mxu0 %v4736
    %4965 = vmatpush.bf16.msra.mxu0 %v4732
    %4966 = vmatpush.bf16.msra.mxu0 %v4728
    %4967 = vmatpush.bf16.msra.mxu0 %v4724
    %4968 = vmatpush.bf16.msra.mxu0 %v4720
    %4969 = vmatpush.bf16.msra.mxu0 %v4716
    %4970 = vmatmul.bf16.gmra.mxu0 %v4935
    %v4971 = vpop.f32.mrf.mxu0
    %v4972 = vadd.f32 0.0, %v4971
    %v4973 = vpop.f32.mrf.mxu0
    %4974 = vdwg.mxu0
    %4975 = vmatpush.bf16.msra.mxu0 %v4745
    %4976 = vmatpush.bf16.msra.mxu0 %v4741
    %4977 = vmatpush.bf16.msra.mxu0 %v4737
    %4978 = vmatpush.bf16.msra.mxu0 %v4733
    %4979 = vmatpush.bf16.msra.mxu0 %v4729
    %4980 = vmatpush.bf16.msra.mxu0 %v4725
    %4981 = vmatpush.bf16.msra.mxu0 %v4721
    %4982 = vmatpush.bf16.msra.mxu0 %v4717
    %4983 = vmatmul.bf16.gmra.mxu0 %v4935
    %v4984 = vpop.f32.mrf.mxu0
    %v4985 = vadd.f32 0.0, %v4984
    %v4986 = vpop.f32.mrf.mxu0
    %4987 = vdwg.mxu0
    %v4988 = vadd.f32 %v4931, %v4946
    %v4989 = vadd.f32 %v4932, %v4959
    %v4990 = vadd.f32 %v4933, %v4972
    %v4991 = vadd.f32 %v4934, %v4985
    %v4992 = vmul.f32 %v4988, 0.5
    %v4993 = vtanh.pop %v4992
    %v4994 = vadd.f32 %v4993, 1.0
    %v4995 = vmul.f32 %v4994, 0.5
    %v4996 = vmul.f32 %v4989, 0.5
    %v4997 = vtanh.pop %v4996
    %v4998 = vadd.f32 %v4997, 1.0
    %v4999 = vmul.f32 %v4998, 0.5
    %v5000 = vtanh.pop %v4990
    %v5001 = vmul.f32 %v4991, 0.5
    %v5002 = vtanh.pop %v5001
    %v5003 = vadd.f32 %v5002, 1.0
    %v5004 = vmul.f32 %v5003, 0.5
    %v5005 = vmul.f32 %v4999, %v4928
    %v5006 = vmul.f32 %v4995, %v5000
    %v5007 = vadd.f32 %v5005, %v5006
    %v5008 = vtanh.pop %v5007
    %v5009 = vmul.f32 %v5004, %v5008
    %v5010 = vld [vmem:[#allocation3 + $0x60] sm:$0xff]
    %v5011 = vld [vmem:[#allocation3 + $0x68] sm:$0xff]
    %v5012 = vld [vmem:[#allocation3 + $0x70] sm:$0xff]
    %v5013 = vld [vmem:[#allocation3 + $0x78] sm:$0xff]
    %v5014 = vpack.c.bf16 %v5009, %v5009
    %5015 = vmatpush.bf16.msra.mxu0 %v4742
    %5016 = vmatpush.bf16.msra.mxu0 %v4738
    %5017 = vmatpush.bf16.msra.mxu0 %v4734
    %5018 = vmatpush.bf16.msra.mxu0 %v4730
    %5019 = vmatpush.bf16.msra.mxu0 %v4726
    %5020 = vmatpush.bf16.msra.mxu0 %v4722
    %5021 = vmatpush.bf16.msra.mxu0 %v4718
    %5022 = vmatpush.bf16.msra.mxu0 %v4714
    %5023 = vmatmul.bf16.gmra.mxu0 %v5014
    %v5024 = vpop.f32.mrf.mxu0
    %v5025 = vadd.f32 0.0, %v5024
    %v5026 = vpop.f32.mrf.mxu0
    %5027 = vdwg.mxu0
    %5028 = vmatpush.bf16.msra.mxu0 %v4743
    %5029 = vmatpush.bf16.msra.mxu0 %v4739
    %5030 = vmatpush.bf16.msra.mxu0 %v4735
    %5031 = vmatpush.bf16.msra.mxu0 %v4731
    %5032 = vmatpush.bf16.msra.mxu0 %v4727
    %5033 = vmatpush.bf16.msra.mxu0 %v4723
    %5034 = vmatpush.bf16.msra.mxu0 %v4719
    %5035 = vmatpush.bf16.msra.mxu0 %v4715
    %5036 = vmatmul.bf16.gmra.mxu0 %v5014
    %v5037 = vpop.f32.mrf.mxu0
    %v5038 = vadd.f32 0.0, %v5037
    %v5039 = vpop.f32.mrf.mxu0
    %5040 = vdwg.mxu0
    %5041 = vmatpush.bf16.msra.mxu0 %v4744
    %5042 = vmatpush.bf16.msra.mxu0 %v4740
    %5043 = vmatpush.bf16.msra.mxu0 %v4736
    %5044 = vmatpush.bf16.msra.mxu0 %v4732
    %5045 = vmatpush.bf16.msra.mxu0 %v4728
    %5046 = vmatpush.bf16.msra.mxu0 %v4724
    %5047 = vmatpush.bf16.msra.mxu0 %v4720
    %5048 = vmatpush.bf16.msra.mxu0 %v4716
    %5049 = vmatmul.bf16.gmra.mxu0 %v5014
    %v5050 = vpop.f32.mrf.mxu0
    %v5051 = vadd.f32 0.0, %v5050
    %v5052 = vpop.f32.mrf.mxu0
    %5053 = vdwg.mxu0
    %5054 = vmatpush.bf16.msra.mxu0 %v4745
    %5055 = vmatpush.bf16.msra.mxu0 %v4741
    %5056 = vmatpush.bf16.msra.mxu0 %v4737
    %5057 = vmatpush.bf16.msra.mxu0 %v4733
    %5058 = vmatpush.bf16.msra.mxu0 %v4729
    %5059 = vmatpush.bf16.msra.mxu0 %v4725
    %5060 = vmatpush.bf16.msra.mxu0 %v4721
    %5061 = vmatpush.bf16.msra.mxu0 %v4717
    %5062 = vmatmul.bf16.gmra.mxu0 %v5014
    %v5063 = vpop.f32.mrf.mxu0
    %v5064 = vadd.f32 0.0, %v5063
    %v5065 = vpop.f32.mrf.mxu0
    %5066 = vdwg.mxu0
    %v5067 = vadd.f32 %v5010, %v5025
    %v5068 = vadd.f32 %v5011, %v5038
    %v5069 = vadd.f32 %v5012, %v5051
    %v5070 = vadd.f32 %v5013, %v5064
    %v5071 = vmul.f32 %v5067, 0.5
    %v5072 = vtanh.pop %v5071
    %v5073 = vadd.f32 %v5072, 1.0
    %v5074 = vmul.f32 %v5073, 0.5
    %v5075 = vmul.f32 %v5068, 0.5
    %v5076 = vtanh.pop %v5075
    %v5077 = vadd.f32 %v5076, 1.0
    %v5078 = vmul.f32 %v5077, 0.5
    %v5079 = vtanh.pop %v5069
    %v5080 = vmul.f32 %v5070, 0.5
    %v5081 = vtanh.pop %v5080
    %v5082 = vadd.f32 %v5081, 1.0
    %v5083 = vmul.f32 %v5082, 0.5
    %v5084 = vmul.f32 %v5078, %v5007
    %v5085 = vmul.f32 %v5074, %v5079
    %v5086 = vadd.f32 %v5084, %v5085
    %v5087 = vtanh.pop %v5086
    %v5088 = vmul.f32 %v5083, %v5087
    %v5089 = vld [vmem:[#allocation3 + $0x80] sm:$0xff]
    %v5090 = vld [vmem:[#allocation3 + $0x88] sm:$0xff]
    %v5091 = vld [vmem:[#allocation3 + $0x90] sm:$0xff]
    %v5092 = vld [vmem:[#allocation3 + $0x98] sm:$0xff]
    %v5093 = vpack.c.bf16 %v5088, %v5088
    %5094 = vmatpush.bf16.msra.mxu0 %v4742
    %5095 = vmatpush.bf16.msra.mxu0 %v4738
    %5096 = vmatpush.bf16.msra.mxu0 %v4734
    %5097 = vmatpush.bf16.msra.mxu0 %v4730
    %5098 = vmatpush.bf16.msra.mxu0 %v4726
    %5099 = vmatpush.bf16.msra.mxu0 %v4722
    %5100 = vmatpush.bf16.msra.mxu0 %v4718
    %5101 = vmatpush.bf16.msra.mxu0 %v4714
    %5102 = vmatmul.bf16.gmra.mxu0 %v5093
    %v5103 = vpop.f32.mrf.mxu0
    %v5104 = vadd.f32 0.0, %v5103
    %v5105 = vpop.f32.mrf.mxu0
    %5106 = vdwg.mxu0
    %5107 = vmatpush.bf16.msra.mxu0 %v4743
    %5108 = vmatpush.bf16.msra.mxu0 %v4739
    %5109 = vmatpush.bf16.msra.mxu0 %v4735
    %5110 = vmatpush.bf16.msra.mxu0 %v4731
    %5111 = vmatpush.bf16.msra.mxu0 %v4727
    %5112 = vmatpush.bf16.msra.mxu0 %v4723
    %5113 = vmatpush.bf16.msra.mxu0 %v4719
    %5114 = vmatpush.bf16.msra.mxu0 %v4715
    %5115 = vmatmul.bf16.gmra.mxu0 %v5093
    %v5116 = vpop.f32.mrf.mxu0
    %v5117 = vadd.f32 0.0, %v5116
    %v5118 = vpop.f32.mrf.mxu0
    %5119 = vdwg.mxu0
    %5120 = vmatpush.bf16.msra.mxu0 %v4744
    %5121 = vmatpush.bf16.msra.mxu0 %v4740
    %5122 = vmatpush.bf16.msra.mxu0 %v4736
    %5123 = vmatpush.bf16.msra.mxu0 %v4732
    %5124 = vmatpush.bf16.msra.mxu0 %v4728
    %5125 = vmatpush.bf16.msra.mxu0 %v4724
    %5126 = vmatpush.bf16.msra.mxu0 %v4720
    %5127 = vmatpush.bf16.msra.mxu0 %v4716
    %5128 = vmatmul.bf16.gmra.mxu0 %v5093
    %v5129 = vpop.f32.mrf.mxu0
    %v5130 = vadd.f32 0.0, %v5129
    %v5131 = vpop.f32.mrf.mxu0
    %5132 = vdwg.mxu0
    %5133 = vmatpush.bf16.msra.mxu0 %v4745
    %5134 = vmatpush.bf16.msra.mxu0 %v4741
    %5135 = vmatpush.bf16.msra.mxu0 %v4737
    %5136 = vmatpush.bf16.msra.mxu0 %v4733
    %5137 = vmatpush.bf16.msra.mxu0 %v4729
    %5138 = vmatpush.bf16.msra.mxu0 %v4725
    %5139 = vmatpush.bf16.msra.mxu0 %v4721
    %5140 = vmatpush.bf16.msra.mxu0 %v4717
    %5141 = vmatmul.bf16.gmra.mxu0 %v5093
    %v5142 = vpop.f32.mrf.mxu0
    %v5143 = vadd.f32 0.0, %v5142
    %v5144 = vpop.f32.mrf.mxu0
    %5145 = vdwg.mxu0
    %v5146 = vadd.f32 %v5089, %v5104
    %v5147 = vadd.f32 %v5090, %v5117
    %v5148 = vadd.f32 %v5091, %v5130
    %v5149 = vadd.f32 %v5092, %v5143
    %v5150 = vmul.f32 %v5146, 0.5
    %v5151 = vtanh.pop %v5150
    %v5152 = vadd.f32 %v5151, 1.0
    %v5153 = vmul.f32 %v5152, 0.5
    %v5154 = vmul.f32 %v5147, 0.5
    %v5155 = vtanh.pop %v5154
    %v5156 = vadd.f32 %v5155, 1.0
    %v5157 = vmul.f32 %v5156, 0.5
    %v5158 = vtanh.pop %v5148
    %v5159 = vmul.f32 %v5149, 0.5
    %v5160 = vtanh.pop %v5159
    %v5161 = vadd.f32 %v5160, 1.0
    %v5162 = vmul.f32 %v5161, 0.5
    %v5163 = vmul.f32 %v5157, %v5086
    %v5164 = vmul.f32 %v5153, %v5158
    %v5165 = vadd.f32 %v5163, %v5164
    %v5166 = vtanh.pop %v5165
    %v5167 = vmul.f32 %v5162, %v5166
    %v5168 = vld [vmem:[#allocation3 + $0xa0] sm:$0xff]
    %v5169 = vld [vmem:[#allocation3 + $0xa8] sm:$0xff]
    %v5170 = vld [vmem:[#allocation3 + $0xb0] sm:$0xff]
    %v5171 = vld [vmem:[#allocation3 + $0xb8] sm:$0xff]
    %v5172 = vpack.c.bf16 %v5167, %v5167
    %5173 = vmatpush.bf16.msra.mxu0 %v4742
    %5174 = vmatpush.bf16.msra.mxu0 %v4738
    %5175 = vmatpush.bf16.msra.mxu0 %v4734
    %5176 = vmatpush.bf16.msra.mxu0 %v4730
    %5177 = vmatpush.bf16.msra.mxu0 %v4726
    %5178 = vmatpush.bf16.msra.mxu0 %v4722
    %5179 = vmatpush.bf16.msra.mxu0 %v4718
    %5180 = vmatpush.bf16.msra.mxu0 %v4714
    %5181 = vmatmul.bf16.gmra.mxu0 %v5172
    %v5182 = vpop.f32.mrf.mxu0
    %v5183 = vadd.f32 0.0, %v5182
    %v5184 = vpop.f32.mrf.mxu0
    %5185 = vdwg.mxu0
    %5186 = vmatpush.bf16.msra.mxu0 %v4743
    %5187 = vmatpush.bf16.msra.mxu0 %v4739
    %5188 = vmatpush.bf16.msra.mxu0 %v4735
    %5189 = vmatpush.bf16.msra.mxu0 %v4731
    %5190 = vmatpush.bf16.msra.mxu0 %v4727
    %5191 = vmatpush.bf16.msra.mxu0 %v4723
    %5192 = vmatpush.bf16.msra.mxu0 %v4719
    %5193 = vmatpush.bf16.msra.mxu0 %v4715
    %5194 = vmatmul.bf16.gmra.mxu0 %v5172
    %v5195 = vpop.f32.mrf.mxu0
    %v5196 = vadd.f32 0.0, %v5195
    %v5197 = vpop.f32.mrf.mxu0
    %5198 = vdwg.mxu0
    %5199 = vmatpush.bf16.msra.mxu0 %v4744
    %5200 = vmatpush.bf16.msra.mxu0 %v4740
    %5201 = vmatpush.bf16.msra.mxu0 %v4736
    %5202 = vmatpush.bf16.msra.mxu0 %v4732
    %5203 = vmatpush.bf16.msra.mxu0 %v4728
    %5204 = vmatpush.bf16.msra.mxu0 %v4724
    %5205 = vmatpush.bf16.msra.mxu0 %v4720
    %5206 = vmatpush.bf16.msra.mxu0 %v4716
    %5207 = vmatmul.bf16.gmra.mxu0 %v5172
    %v5208 = vpop.f32.mrf.mxu0
    %v5209 = vadd.f32 0.0, %v5208
    %v5210 = vpop.f32.mrf.mxu0
    %5211 = vdwg.mxu0
    %5212 = vmatpush.bf16.msra.mxu0 %v4745
    %5213 = vmatpush.bf16.msra.mxu0 %v4741
    %5214 = vmatpush.bf16.msra.mxu0 %v4737
    %5215 = vmatpush.bf16.msra.mxu0 %v4733
    %5216 = vmatpush.bf16.msra.mxu0 %v4729
    %5217 = vmatpush.bf16.msra.mxu0 %v4725
    %5218 = vmatpush.bf16.msra.mxu0 %v4721
    %5219 = vmatpush.bf16.msra.mxu0 %v4717
    %5220 = vmatmul.bf16.gmra.mxu0 %v5172
    %v5221 = vpop.f32.mrf.mxu0
    %v5222 = vadd.f32 0.0, %v5221
    %v5223 = vpop.f32.mrf.mxu0
    %5224 = vdwg.mxu0
    %v5225 = vadd.f32 %v5168, %v5183
    %v5226 = vadd.f32 %v5169, %v5196
    %v5227 = vadd.f32 %v5170, %v5209
    %v5228 = vadd.f32 %v5171, %v5222
    %v5229 = vmul.f32 %v5225, 0.5
    %v5230 = vtanh.pop %v5229
    %v5231 = vadd.f32 %v5230, 1.0
    %v5232 = vmul.f32 %v5231, 0.5
    %v5233 = vmul.f32 %v5226, 0.5
    %v5234 = vtanh.pop %v5233
    %v5235 = vadd.f32 %v5234, 1.0
    %v5236 = vmul.f32 %v5235, 0.5
    %v5237 = vtanh.pop %v5227
    %v5238 = vmul.f32 %v5228, 0.5
    %v5239 = vtanh.pop %v5238
    %v5240 = vadd.f32 %v5239, 1.0
    %v5241 = vmul.f32 %v5240, 0.5
    %v5242 = vmul.f32 %v5236, %v5165
    %v5243 = vmul.f32 %v5232, %v5237
    %v5244 = vadd.f32 %v5242, %v5243
    %v5245 = vtanh.pop %v5244
    %v5246 = vmul.f32 %v5241, %v5245
    %v5247 = vld [vmem:[#allocation3 + $0xc0] sm:$0xff]
    %v5248 = vld [vmem:[#allocation3 + $0xc8] sm:$0xff]
    %v5249 = vld [vmem:[#allocation3 + $0xd0] sm:$0xff]
    %v5250 = vld [vmem:[#allocation3 + $0xd8] sm:$0xff]
    %v5251 = vpack.c.bf16 %v5246, %v5246
    %5252 = vmatpush.bf16.msra.mxu0 %v4742
    %5253 = vmatpush.bf16.msra.mxu0 %v4738
    %5254 = vmatpush.bf16.msra.mxu0 %v4734
    %5255 = vmatpush.bf16.msra.mxu0 %v4730
    %5256 = vmatpush.bf16.msra.mxu0 %v4726
    %5257 = vmatpush.bf16.msra.mxu0 %v4722
    %5258 = vmatpush.bf16.msra.mxu0 %v4718
    %5259 = vmatpush.bf16.msra.mxu0 %v4714
    %5260 = vmatmul.bf16.gmra.mxu0 %v5251
    %v5261 = vpop.f32.mrf.mxu0
    %v5262 = vadd.f32 0.0, %v5261
    %v5263 = vpop.f32.mrf.mxu0
    %5264 = vdwg.mxu0
    %5265 = vmatpush.bf16.msra.mxu0 %v4743
    %5266 = vmatpush.bf16.msra.mxu0 %v4739
    %5267 = vmatpush.bf16.msra.mxu0 %v4735
    %5268 = vmatpush.bf16.msra.mxu0 %v4731
    %5269 = vmatpush.bf16.msra.mxu0 %v4727
    %5270 = vmatpush.bf16.msra.mxu0 %v4723
    %5271 = vmatpush.bf16.msra.mxu0 %v4719
    %5272 = vmatpush.bf16.msra.mxu0 %v4715
    %5273 = vmatmul.bf16.gmra.mxu0 %v5251
    %v5274 = vpop.f32.mrf.mxu0
    %v5275 = vadd.f32 0.0, %v5274
    %v5276 = vpop.f32.mrf.mxu0
    %5277 = vdwg.mxu0
    %5278 = vmatpush.bf16.msra.mxu0 %v4744
    %5279 = vmatpush.bf16.msra.mxu0 %v4740
    %5280 = vmatpush.bf16.msra.mxu0 %v4736
    %5281 = vmatpush.bf16.msra.mxu0 %v4732
    %5282 = vmatpush.bf16.msra.mxu0 %v4728
    %5283 = vmatpush.bf16.msra.mxu0 %v4724
    %5284 = vmatpush.bf16.msra.mxu0 %v4720
    %5285 = vmatpush.bf16.msra.mxu0 %v4716
    %5286 = vmatmul.bf16.gmra.mxu0 %v5251
    %v5287 = vpop.f32.mrf.mxu0
    %v5288 = vadd.f32 0.0, %v5287
    %v5289 = vpop.f32.mrf.mxu0
    %5290 = vdwg.mxu0
    %5291 = vmatpush.bf16.msra.mxu0 %v4745
    %5292 = vmatpush.bf16.msra.mxu0 %v4741
    %5293 = vmatpush.bf16.msra.mxu0 %v4737
    %5294 = vmatpush.bf16.msra.mxu0 %v4733
    %5295 = vmatpush.bf16.msra.mxu0 %v4729
    %5296 = vmatpush.bf16.msra.mxu0 %v4725
    %5297 = vmatpush.bf16.msra.mxu0 %v4721
    %5298 = vmatpush.bf16.msra.mxu0 %v4717
    %5299 = vmatmul.bf16.gmra.mxu0 %v5251
    %v5300 = vpop.f32.mrf.mxu0
    %v5301 = vadd.f32 0.0, %v5300
    %v5302 = vpop.f32.mrf.mxu0
    %5303 = vdwg.mxu0
    %v5304 = vadd.f32 %v5247, %v5262
    %v5305 = vadd.f32 %v5248, %v5275
    %v5306 = vadd.f32 %v5249, %v5288
    %v5307 = vadd.f32 %v5250, %v5301
    %v5308 = vmul.f32 %v5304, 0.5
    %v5309 = vtanh.pop %v5308
    %v5310 = vadd.f32 %v5309, 1.0
    %v5311 = vmul.f32 %v5310, 0.5
    %v5312 = vmul.f32 %v5305, 0.5
    %v5313 = vtanh.pop %v5312
    %v5314 = vadd.f32 %v5313, 1.0
    %v5315 = vmul.f32 %v5314, 0.5
    %v5316 = vtanh.pop %v5306
    %v5317 = vmul.f32 %v5307, 0.5
    %v5318 = vtanh.pop %v5317
    %v5319 = vadd.f32 %v5318, 1.0
    %v5320 = vmul.f32 %v5319, 0.5
    %v5321 = vmul.f32 %v5315, %v5244
    %v5322 = vmul.f32 %v5311, %v5316
    %v5323 = vadd.f32 %v5321, %v5322
    %v5324 = vtanh.pop %v5323
    %v5325 = vmul.f32 %v5320, %v5324
    %v5326 = vld [vmem:[#allocation3 + $0xe0] sm:$0xff]
    %v5327 = vld [vmem:[#allocation3 + $0xe8] sm:$0xff]
    %v5328 = vld [vmem:[#allocation3 + $0xf0] sm:$0xff]
    %v5329 = vld [vmem:[#allocation3 + $0xf8] sm:$0xff]
    %v5330 = vpack.c.bf16 %v5325, %v5325
    %5331 = vmatpush.bf16.msra.mxu0 %v4742
    %5332 = vmatpush.bf16.msra.mxu0 %v4738
    %5333 = vmatpush.bf16.msra.mxu0 %v4734
    %5334 = vmatpush.bf16.msra.mxu0 %v4730
    %5335 = vmatpush.bf16.msra.mxu0 %v4726
    %5336 = vmatpush.bf16.msra.mxu0 %v4722
    %5337 = vmatpush.bf16.msra.mxu0 %v4718
    %5338 = vmatpush.bf16.msra.mxu0 %v4714
    %5339 = vmatmul.bf16.gmra.mxu0 %v5330
    %v5340 = vpop.f32.mrf.mxu0
    %v5341 = vadd.f32 0.0, %v5340
    %v5342 = vpop.f32.mrf.mxu0
    %5343 = vdwg.mxu0
    %5344 = vmatpush.bf16.msra.mxu0 %v4743
    %5345 = vmatpush.bf16.msra.mxu0 %v4739
    %5346 = vmatpush.bf16.msra.mxu0 %v4735
    %5347 = vmatpush.bf16.msra.mxu0 %v4731
    %5348 = vmatpush.bf16.msra.mxu0 %v4727
    %5349 = vmatpush.bf16.msra.mxu0 %v4723
    %5350 = vmatpush.bf16.msra.mxu0 %v4719
    %5351 = vmatpush.bf16.msra.mxu0 %v4715
    %5352 = vmatmul.bf16.gmra.mxu0 %v5330
    %v5353 = vpop.f32.mrf.mxu0
    %v5354 = vadd.f32 0.0, %v5353
    %v5355 = vpop.f32.mrf.mxu0
    %5356 = vdwg.mxu0
    %5357 = vmatpush.bf16.msra.mxu0 %v4744
    %5358 = vmatpush.bf16.msra.mxu0 %v4740
    %5359 = vmatpush.bf16.msra.mxu0 %v4736
    %5360 = vmatpush.bf16.msra.mxu0 %v4732
    %5361 = vmatpush.bf16.msra.mxu0 %v4728
    %5362 = vmatpush.bf16.msra.mxu0 %v4724
    %5363 = vmatpush.bf16.msra.mxu0 %v4720
    %5364 = vmatpush.bf16.msra.mxu0 %v4716
    %5365 = vmatmul.bf16.gmra.mxu0 %v5330
    %v5366 = vpop.f32.mrf.mxu0
    %v5367 = vadd.f32 0.0, %v5366
    %v5368 = vpop.f32.mrf.mxu0
    %5369 = vdwg.mxu0
    %5370 = vmatpush.bf16.msra.mxu0 %v4745
    %5371 = vmatpush.bf16.msra.mxu0 %v4741
    %5372 = vmatpush.bf16.msra.mxu0 %v4737
    %5373 = vmatpush.bf16.msra.mxu0 %v4733
    %5374 = vmatpush.bf16.msra.mxu0 %v4729
    %5375 = vmatpush.bf16.msra.mxu0 %v4725
    %5376 = vmatpush.bf16.msra.mxu0 %v4721
    %5377 = vmatpush.bf16.msra.mxu0 %v4717
    %5378 = vmatmul.bf16.gmra.mxu0 %v5330
    %v5379 = vpop.f32.mrf.mxu0
    %v5380 = vadd.f32 0.0, %v5379
    %v5381 = vpop.f32.mrf.mxu0
    %5382 = vdwg.mxu0
    %v5383 = vadd.f32 %v5326, %v5341
    %v5384 = vadd.f32 %v5327, %v5354
    %v5385 = vadd.f32 %v5328, %v5367
    %v5386 = vadd.f32 %v5329, %v5380
    %v5387 = vmul.f32 %v5383, 0.5
    %v5388 = vtanh.pop %v5387
    %v5389 = vadd.f32 %v5388, 1.0
    %v5390 = vmul.f32 %v5389, 0.5
    %v5391 = vmul.f32 %v5384, 0.5
    %v5392 = vtanh.pop %v5391
    %v5393 = vadd.f32 %v5392, 1.0
    %v5394 = vmul.f32 %v5393, 0.5
    %v5395 = vtanh.pop %v5385
    %v5396 = vmul.f32 %v5386, 0.5
    %v5397 = vtanh.pop %v5396
    %v5398 = vadd.f32 %v5397, 1.0
    %v5399 = vmul.f32 %v5398, 0.5
    %v5400 = vmul.f32 %v5394, %v5323
    %v5401 = vmul.f32 %v5390, %v5395
    %v5402 = vadd.f32 %v5400, %v5401
    %v5403 = vtanh.pop %v5402
    %v5404 = vmul.f32 %v5399, %v5403
    %s5405 = smul.u32 %s414, 1
    %s5406 = sshll.u32 %s5405, 4
    %5407 = dma.done %s86, %s5406
    %v5408 = vpack.c.bf16 %v5404, %v5404
    %v5409 = vld [vmem:[#allocation6] sm:$0xf]
    %v5410 = vld [vmem:[#allocation6 + $0x4] sm:$0xf]
    %v5411 = vld [vmem:[#allocation6 + $0x8] sm:$0xf]
    %v5412 = vld [vmem:[#allocation6 + $0xc] sm:$0xf]
    %v5413 = vld [vmem:[#allocation6 + $0x10] sm:$0xf]
    %v5414 = vld [vmem:[#allocation6 + $0x14] sm:$0xf]
    %v5415 = vld [vmem:[#allocation6 + $0x18] sm:$0xf]
    %v5416 = vld [vmem:[#allocation6 + $0x1c] sm:$0xf]
    %v5417 = vld [vmem:[#allocation6 + $0x20] sm:$0xf]
    %v5418 = vld [vmem:[#allocation6 + $0x24] sm:$0xf]
    %v5419 = vld [vmem:[#allocation6 + $0x28] sm:$0xf]
    %v5420 = vld [vmem:[#allocation6 + $0x2c] sm:$0xf]
    %v5421 = vld [vmem:[#allocation6 + $0x30] sm:$0xf]
    %v5422 = vld [vmem:[#allocation6 + $0x34] sm:$0xf]
    %v5423 = vld [vmem:[#allocation6 + $0x38] sm:$0xf]
    %v5424 = vld [vmem:[#allocation6 + $0x3c] sm:$0xf]
    %v5425 = vld [vmem:[%s5] sm:$0x1]
    %v5427 = vperm.slane %v5425, 0
    %v5445 = vunpack.c.l.b16 %v5409
    %v5446 = vunpack.c.l.b16 %v5410
    %v5447 = vunpack.c.l.b16 %v5411
    %v5448 = vunpack.c.l.b16 %v5412
    %v5449 = vunpack.c.l.b16 %v5413
    %v5450 = vunpack.c.l.b16 %v5414
    %v5451 = vunpack.c.l.b16 %v5415
    %v5452 = vunpack.c.l.b16 %v5416
    %v5453 = vunpack.c.l.b16 %v5417
    %v5454 = vunpack.c.l.b16 %v5418
    %v5455 = vunpack.c.l.b16 %v5419
    %v5456 = vunpack.c.l.b16 %v5420
    %v5457 = vunpack.c.l.b16 %v5421
    %v5458 = vunpack.c.l.b16 %v5422
    %v5459 = vunpack.c.l.b16 %v5423
    %v5460 = vunpack.c.l.b16 %v5424
    %v5461 = vpack.c.b16 %v5446, %v5445
    %v5462 = vpack.c.b16 %v5448, %v5447
    %v5463 = vpack.c.b16 %v5450, %v5449
    %v5464 = vpack.c.b16 %v5452, %v5451
    %v5465 = vpack.c.b16 %v5454, %v5453
    %v5466 = vpack.c.b16 %v5456, %v5455
    %v5467 = vpack.c.b16 %v5458, %v5457
    %v5468 = vpack.c.b16 %v5460, %v5459
    %5477 = vmatpush.bf16.msra.mxu0 %v5468
    %5478 = vmatpush.bf16.msra.mxu0 %v5467
    %5479 = vmatpush.bf16.msra.mxu0 %v5466
    %5480 = vmatpush.bf16.msra.mxu0 %v5465
    %5481 = vmatpush.bf16.msra.mxu0 %v5464
    %5482 = vmatpush.bf16.msra.mxu0 %v5463
    %5483 = vmatpush.bf16.msra.mxu0 %v5462
    %5484 = vmatpush.bf16.msra.mxu0 %v5461
    %5485 = vmatmul.bf16.gmra.mxu0 %v5408
    %v5486 = vpop.f32.mrf.mxu0
    %v5487 = vadd.f32 %v5427, %v5486
    %v5488 = vpop.f32.mrf.mxu0
    %5489 = vdwg.mxu0
    %5490 = vst [vmem:[%s9] sm:$0xff] %v5487
    // Predicated region
    $region61: #{rnn_classifier_forward.1} parent=1 // pred_check
      _
    $region62: #{rnn_classifier_forward.1} parent=1 // pred_check_branch
      %5492 = sbr.rel (0) target = $region64
    $region63: #{rnn_classifier_forward.1} parent=1 // pred_region
      _
    $region64: #{rnn_classifier_forward.1} parent=1 // pred_fallthru
      _
    // Predicated region
    $region65: #{rnn_classifier_forward.1} parent=1 // pred_check
      _
    $region66: #{rnn_classifier_forward.1} parent=1 // pred_check_branch
      %5494 = sbr.rel (0) target = $region68
    $region67: #{rnn_classifier_forward.1} parent=1 // pred_region
      _
    $region68: #{rnn_classifier_forward.1} parent=1 // pred_fallthru
      _
    %5495 = vsyncpa [#allocation9], 1
    %5496 = vsyncpa [#allocation11], 1
  %5497 = vsyncmov [#allocation7]
  %s5498 = vpop.sfrf %5497
  %p5499 = scmp.eq.s32.totalorder %s5498, 0
  %p5500 = pneg %p5499
  %5502 = shalt.err (%p5500)
  %s5503 = scalar_lea.sflag [#allocation7], 1
  %5504 = vsyncmov %s5503
  %s5505 = vpop.sfrf %5504
  %p5506 = scmp.eq.s32.totalorder %s5505, 0
  %p5507 = pneg %p5506
  %5509 = shalt.err (%p5507)
  %s5510 = scalar_lea.sflag [#allocation7], 2
  %5511 = vsyncmov %s5510
  %s5512 = vpop.sfrf %5511
  %p5513 = scmp.eq.s32.totalorder %s5512, 0
  %p5514 = pneg %p5513
  %5516 = shalt.err (%p5514)

</llo_original>
